<compile_context>
chip_gen: v7x
topology: tpu7x:2x2x1
jax: 0.10.0
libtpu: 0.0.40
codegen_flags: <defaults>
</compile_context>

<pallas_src>
import functools

import jax
import jax.numpy as jnp
from jax.experimental import pallas as pl
from jax.experimental.pallas import tpu as pltpu

EPS = 1e-5
LANE = 128


def _round_up(x, m):
    return (x + m - 1) // m * m


@functools.cache
def _vmem_limit_bytes():
    """Generation-aware scoped-VMEM cap: ~100 MiB on 128-MiB parts
    (v5e/v6e), 48 MiB on 64-MiB parts (v7x) / unknown."""
    cap = 64 * 1024 * 1024
    try:
        cap = int(pltpu.get_tpu_info().vmem_capacity_bytes)
    except Exception:
        pass
    if cap >= 96 * 1024 * 1024:
        return 100 * 1024 * 1024
    return 48 * 1024 * 1024


def _pick_row_tile(m, bytes_per_row):
    """Largest row tile (multiple of 8) dividing m that leaves >= 2 grid
    steps and keeps the double-buffered working set well inside VMEM."""
    budget = 16 * 1024 * 1024
    for t in (2048, 1024, 512, 256, 128, 64, 32, 16, 8):
        if m % t == 0 and m // t >= 2 and 2 * t * bytes_per_row <= budget:
            return t
    # TODO(synk): masked tail tiles for awkward N*H*W instead of a whole-M
    # block (potential VMEM blow-up for pathological shapes).
    return m


def _pick_band(h):
    """Row-band height for stage B (prefers 8 for pipeline depth)."""
    for t in (8, 16):
        if h % t == 0 and h // t >= 2:
            return t
    return h


def _cparams(n_axes):
    return pltpu.CompilerParams(
        dimension_semantics=("parallel",) * n_axes,
        vmem_limit_bytes=_vmem_limit_bytes())


def _cost(flops, bytes_accessed):
    return pl.CostEstimate(flops=int(flops), transcendentals=0,
                           bytes_accessed=int(bytes_accessed))


# -------------------------------------------------------------- kernels ----

def _conv1_kernel(x_ref, w1_ref, o1_ref, st_ref):
    # 1x1 conv == row-tiled channel matmul (bf16 inputs, f32 accumulation).
    y = jnp.dot(x_ref[...], w1_ref[...], preferred_element_type=jnp.float32)
    yb = y.astype(jnp.bfloat16)
    o1_ref[...] = yb
    # Fused per-tile BN stats (sum, sumsq) from the same values the next
    # stage reads — single traversal, exact global stats after reduction.
    f = yb.astype(jnp.float32)
    st_ref[0, 0:1, :] = jnp.sum(f, axis=0, keepdims=True)
    st_ref[0, 1:2, :] = jnp.sum(f * f, axis=0, keepdims=True)


def _conv2_kernel(o1_ref, s1_ref, t1_ref, w2_ref, o2_ref, st_ref, pad_ref):
    # Per-(image, row-band) step: BN1 (pre-folded scale/shift) + ReLU, then
    # the 3x3 conv as nine accumulating per-tap matmuls (no im2col buffer).
    H = o1_ref.shape[1]
    TH, W, P = o2_ref.shape[1], o2_ref.shape[2], o2_ref.shape[3]
    b = pl.program_id(1)
    nb = pl.num_programs(1)

    s1 = s1_ref[...].reshape(1, 1, P)
    t1 = t1_ref[...].reshape(1, 1, P)

    def bn_relu(v):
        return jnp.maximum(v.astype(jnp.float32) * s1 + t1, 0.0)

    # Band rows plus a 1-row halo read from the (resident) full-image block.
    r0 = pl.multiple_of(b * TH, TH)
    main = bn_relu(o1_ref[0, pl.ds(r0, TH), :, :])                 # (TH,W,P)
    top = bn_relu(o1_ref[0, pl.ds(jnp.maximum(r0 - 1, 0), 1), :, :])
    bot = bn_relu(o1_ref[0, pl.ds(jnp.minimum(r0 + TH, H - 1), 1), :, :])
    # Zero the halo rows at image boundaries (conv2 zero-padding semantics).
    top = top * jnp.where(b > 0, 1.0, 0.0)
    bot = bot * jnp.where(b < nb - 1, 1.0, 0.0)

    # Fill the (TH+2, W+2, P) halo-padded scratch.  Scratch VMEM is
    # uninitialized and per-core, so the W-halo columns (incl. corners) are
    # zeroed every step.
    zcol = jnp.zeros((TH + 2, 1, P), jnp.bfloat16)
    pad_ref[:, 0:1, :] = zcol
    pad_ref[:, W + 1:W + 2, :] = zcol
    pad_ref[0:1, 1:W + 1, :] = top.astype(jnp.bfloat16)
    pad_ref[1:TH + 1, 1:W + 1, :] = main.astype(jnp.bfloat16)
    pad_ref[TH + 1:TH + 2, 1:W + 1, :] = bot.astype(jnp.bfloat16)

    # Nine accumulating taps: each is a (TH*W, P) x (P, P) matmul with the
    # f32 accumulator carried as a value (no big store/reload round trip).
    acc = None
    for dy in range(3):
        for dx in range(3):
            t = dy * 3 + dx
            lhs = pad_ref[dy:dy + TH, dx:dx + W, :].reshape(TH * W, P)
            part = jnp.dot(lhs, w2_ref[t * P:(t + 1) * P, :],
                           preferred_element_type=jnp.float32)
            acc = part if acc is None else acc + part

    ob = acc.astype(jnp.bfloat16)
    o2_ref[0] = ob.reshape(TH, W, P)
    f = ob.astype(jnp.float32)
    st_ref[0, 0, 0:1, :] = jnp.sum(f, axis=0, keepdims=True)
    st_ref[0, 0, 1:2, :] = jnp.sum(f * f, axis=0, keepdims=True)


def _conv3_kernel(o2_ref, s2_ref, t2_ref, w3_ref, o3_ref, st_ref):
    y = o2_ref[...].astype(jnp.float32)
    y = jnp.maximum(y * s2_ref[...] + t2_ref[...], 0.0)           # BN2 + ReLU
    o3 = jnp.dot(y.astype(jnp.bfloat16), w3_ref[...],
                 preferred_element_type=jnp.float32)
    ob = o3.astype(jnp.bfloat16)
    o3_ref[...] = ob
    f = ob.astype(jnp.float32)
    st_ref[0, 0:1, :] = jnp.sum(f, axis=0, keepdims=True)
    st_ref[0, 1:2, :] = jnp.sum(f * f, axis=0, keepdims=True)


def _bn3_add_kernel(o3_ref, x_ref, s3_ref, t3_ref, out_ref):
    y = o3_ref[...].astype(jnp.float32) * s3_ref[...] + t3_ref[...]
    out_ref[...] = jnp.maximum(y + x_ref[...].astype(jnp.float32), 0.0)


# -------------------------------------------------------------- wrapper ----

def _finalize_bn(partials, count, gamma_p, beta_p):
    """Reduce per-tile (sum, sumsq) partials into per-channel scale/shift."""
    s = jnp.sum(partials, axis=0)                                  # (2, C)
    mean = s[0] / count
    # Hierarchical f32 sums + clamp: activations are O(1), so the
    # E[x^2]-mean^2 cancellation is benign; the clamp guards rsqrt.
    var = jnp.maximum(s[1] / count - mean * mean, 0.0)
    inv = jax.lax.rsqrt(var + EPS)
    scale = gamma_p.reshape(-1) * inv
    shift = beta_p.reshape(-1) - mean * scale
    return scale.reshape(1, -1), shift.reshape(1, -1)


def bottleneck_forward(x_nchw, params):
    """Bottleneck forward (stride=1, downsample=None). NCHW in/out, f32."""
    # TODO(synk): the stride>1 / downsample branch of the module is not
    # implemented (default construction uses stride=1, downsample=None).
    w1, g1, b1, w2, g2, b2, w3, g3, b3 = params
    N, Cin, H, W = x_nchw.shape
    P = w1.shape[1]
    Cout = w3.shape[1]
    assert Cin == Cout, "stride=1 & downsample=None needs inplanes == planes*4"

    Ci = _round_up(Cin, LANE)
    Pp = _round_up(P, LANE)
    Co = _round_up(Cout, LANE)
    assert Ci == Co

    # One fused NCHW->NHWC + channel-pad + bf16 cast; this single copy feeds
    # both stage A and the stage-D residual.
    # TODO(synk): keep the surrounding model NHWC / lane-padded to drop the
    # boundary transposes (here and at the output) from the hot path.
    xb = jnp.pad(jnp.transpose(x_nchw, (0, 2, 3, 1)).astype(jnp.bfloat16),
                 ((0, 0), (0, 0), (0, 0), (0, Ci - Cin)))
    M = N * H * W
    x2d = xb.reshape(M, Ci)

    TM = _pick_row_tile(M, (Ci + Pp) * 2)
    GM = M // TM
    TH = _pick_band(H)
    NB = H // TH

    # Zero-pad weights / BN params to lane-dense channel counts; bf16 weights.
    w1p = jnp.pad(w1, ((0, Ci - Cin), (0, Pp - P))).astype(jnp.bfloat16)
    w2p = jnp.pad(w2, ((0, 0), (0, Pp - P), (0, Pp - P))
                  ).astype(jnp.bfloat16).reshape(9 * Pp, Pp)
    w3p = jnp.pad(w3, ((0, Pp - P), (0, Co - Cout))).astype(jnp.bfloat16)
    g1p = jnp.pad(g1.reshape(1, P), ((0, 0), (0, Pp - P)))
    b1p = jnp.pad(b1.reshape(1, P), ((0, 0), (0, Pp - P)))
    g2p = jnp.pad(g2.reshape(1, P), ((0, 0), (0, Pp - P)))
    b2p = jnp.pad(b2.reshape(1, P), ((0, 0), (0, Pp - P)))
    g3p = jnp.pad(g3.reshape(1, Cout), ((0, 0), (0, Co - Cout)))
    b3p = jnp.pad(b3.reshape(1, Cout), ((0, 0), (0, Co - Cout)))

    # --- stage A: conv1 (1x1) + BN1 partial stats --------------------------
    o1, st1 = pl.pallas_call(
        _conv1_kernel,
        out_shape=(jax.ShapeDtypeStruct((M, Pp), jnp.bfloat16),
                   jax.ShapeDtypeStruct((GM, 2, Pp), jnp.float32)),
        grid=(GM,),
        in_specs=[pl.BlockSpec((TM, Ci), lambda i: (i, 0)),
                  pl.BlockSpec((Ci, Pp), lambda i: (0, 0))],
        out_specs=(pl.BlockSpec((TM, Pp), lambda i: (i, 0)),
                   pl.BlockSpec((1, 2, Pp), lambda i: (i, 0, 0))),
        compiler_params=_cparams(1),
        cost_estimate=_cost(
            2 * M * Ci * Pp,
            M * Ci * 2 + Ci * Pp * 2 + M * Pp * 2 + GM * 2 * Pp * 4),
    )(x2d, w1p)
    scale1, shift1 = _finalize_bn(st1, M, g1p, b1p)

    # --- stage B: BN1+ReLU, conv2 (3x3, per-tap dots) + BN2 partial stats --
    o2, st2 = pl.pallas_call(
        _conv2_kernel,
        out_shape=(jax.ShapeDtypeStruct((N, H, W, Pp), jnp.bfloat16),
                   jax.ShapeDtypeStruct((N, NB, 2, Pp), jnp.float32)),
        grid=(N, NB),
        in_specs=[pl.BlockSpec((1, H, W, Pp), lambda n, b: (n, 0, 0, 0)),
                  pl.BlockSpec((1, Pp), lambda n, b: (0, 0)),
                  pl.BlockSpec((1, Pp), lambda n, b: (0, 0)),
                  pl.BlockSpec((9 * Pp, Pp), lambda n, b: (0, 0))],
        out_specs=(pl.BlockSpec((1, TH, W, Pp), lambda n, b: (n, b, 0, 0)),
                   pl.BlockSpec((1, 1, 2, Pp), lambda n, b: (n, b, 0, 0))),
        scratch_shapes=[pltpu.VMEM((TH + 2, W + 2, Pp), jnp.bfloat16)],
        compiler_params=_cparams(2),
        cost_estimate=_cost(
            2 * 9 * M * Pp * Pp,
            M * Pp * 2 * 2 + 9 * Pp * Pp * 2 + N * NB * 2 * Pp * 4),
    )(o1.reshape(N, H, W, Pp), scale1, shift1, w2p)
    scale2, shift2 = _finalize_bn(st2.reshape(N * NB, 2, Pp), M, g2p, b2p)

    # --- stage C: BN2+ReLU, conv3 (1x1) + BN3 partial stats ----------------
    o3, st3 = pl.pallas_call(
        _conv3_kernel,
        out_shape=(jax.ShapeDtypeStruct((M, Co), jnp.bfloat16),
                   jax.ShapeDtypeStruct((GM, 2, Co), jnp.float32)),
        grid=(GM,),
        in_specs=[pl.BlockSpec((TM, Pp), lambda i: (i, 0)),
                  pl.BlockSpec((1, Pp), lambda i: (0, 0)),
                  pl.BlockSpec((1, Pp), lambda i: (0, 0)),
                  pl.BlockSpec((Pp, Co), lambda i: (0, 0))],
        out_specs=(pl.BlockSpec((TM, Co), lambda i: (i, 0)),
                   pl.BlockSpec((1, 2, Co), lambda i: (i, 0, 0))),
        compiler_params=_cparams(1),
        cost_estimate=_cost(
            2 * M * Pp * Co,
            M * Pp * 2 + Pp * Co * 2 + M * Co * 2 + GM * 2 * Co * 4),
    )(o2.reshape(M, Pp), scale2, shift2, w3p)
    scale3, shift3 = _finalize_bn(st3, M, g3p, b3p)

    # --- stage D: BN3 + residual add + ReLU --------------------------------
    out2d = pl.pallas_call(
        _bn3_add_kernel,
        out_shape=jax.ShapeDtypeStruct((M, Co), jnp.float32),
        grid=(GM,),
        in_specs=[pl.BlockSpec((TM, Co), lambda i: (i, 0)),
                  pl.BlockSpec((TM, Co), lambda i: (i, 0)),
                  pl.BlockSpec((1, Co), lambda i: (0, 0)),
                  pl.BlockSpec((1, Co), lambda i: (0, 0))],
        out_specs=pl.BlockSpec((TM, Co), lambda i: (i, 0)),
        compiler_params=_cparams(1),
        cost_estimate=_cost(4 * M * Co, M * Co * (2 + 2 + 4) + 2 * Co * 4),
    )(o3, x2d, scale3, shift3)

    out = out2d.reshape(N, H, W, Co)[..., :Cout]
    return jnp.transpose(out, (0, 3, 1, 2))                  # NHWC -> NCHW


# ------------------------------------------------------ reference & test ---

def ref_bottleneck_nhwc(x, params):
    """Pure-JAX f32 reference (NHWC) of the same forward pass."""
    w1, g1, b1, w2, g2, b2, w3, g3, b3 = params
    P = w1.shape[1]

    def bn(y, g, b):
        m = jnp.mean(y, axis=(0, 1, 2), keepdims=True)
        v = jnp.mean((y - m) ** 2, axis=(0, 1, 2), keepdims=True)
        return (y - m) * jax.lax.rsqrt(v + EPS) * g.reshape(1, 1, 1, -1) \
            + b.reshape(1, 1, 1, -1)

    o = jnp.einsum('nhwc,cp->nhwp', x, w1)
    o = jax.nn.relu(bn(o, g1, b1))
    o = jax.lax.conv_general_dilated(
        o, w2.reshape(3, 3, P, P), (1, 1), 'SAME',
        dimension_numbers=('NHWC', 'HWIO', 'NHWC'))
    o = jax.nn.relu(bn(o, g2, b2))
    o = jnp.einsum('nhwp,pq->nhwq', o, w3)
    o = bn(o, g3, b3)
    return jax.nn.relu(o + x)


def make_params(key, inplanes, planes):
    # Layouts vs PyTorch: w1[in, out] = conv1.weight[out, in, 0, 0],
    # w2[3*dy+dx, in, out] = conv2.weight[out, in, dy, dx],
    # w3[in, out] = conv3.weight[out, in, 0, 0].
    cout = planes * 4
    ks = jax.random.split(key, 9)
    w1 = jax.random.normal(ks[0], (inplanes, planes), jnp.float32) / inplanes ** 0.5
    w2 = jax.random.normal(ks[1], (9, planes, planes), jnp.float32) / (9 * planes) ** 0.5
    w3 = jax.random.normal(ks[2], (planes, cout), jnp.float32) / planes ** 0.5
    g1 = 1.0 + 0.1 * jax.random.normal(ks[3], (1, planes), jnp.float32)
    b1 = 0.1 * jax.random.normal(ks[4], (1, planes), jnp.float32)
    g2 = 1.0 + 0.1 * jax.random.normal(ks[5], (1, planes), jnp.float32)
    b2 = 0.1 * jax.random.normal(ks[6], (1, planes), jnp.float32)
    g3 = 1.0 + 0.1 * jax.random.normal(ks[7], (1, cout), jnp.float32)
    b3 = 0.1 * jax.random.normal(ks[8], (1, cout), jnp.float32)
    return (w1, g1, b1, w2, g2, b2, w3, g3, b3)


if __name__ == "__main__":
    # Small shapes: batch=2, inplanes=16, planes=4 (planes*4 == inplanes),
    # spatial 16x16, stride=1, downsample=None.
    N, INPLANES, PLANES, H, W = 2, 16, 4, 16, 16

    key = jax.random.PRNGKey(0)
    kx, kp = jax.random.split(key)
    x_nchw = jax.random.normal(kx, (N, INPLANES, H, W), jnp.float32)
    params = make_params(kp, INPLANES, PLANES)

    fwd = jax.jit(bottleneck_forward)
    out = jax.block_until_ready(fwd(x_nchw, params))

    x_nhwc = jnp.transpose(x_nchw, (0, 2, 3, 1))
    ref = jnp.transpose(ref_bottleneck_nhwc(x_nhwc, params), (0, 3, 1, 2))
    assert out.shape == (N, PLANES * 4, H, W)
    max_err = float(jnp.max(jnp.abs(out - ref)))
    # Kernel uses bf16 matmul inputs / bf16 intermediates / bf16 residual
    # vs a pure-f32 reference.
    assert jnp.allclose(out, ref, atol=5e-2, rtol=5e-2), f"max |err| = {max_err}"
    print("KERNEL_OK")
</pallas_src>

<mosaic_0001>
module attributes {stable_mosaic.version = 11 : i64} {
  func.func @_conv1_kernel(%arg0: i32, %arg1: memref<256x128xbf16, #tpu.memory_space<vmem>>, %arg2: memref<128x128xbf16, #tpu.memory_space<vmem>>, %arg3: memref<256x128xbf16, #tpu.memory_space<vmem>>, %arg4: memref<1x2x128xf32, #tpu.memory_space<vmem>>) attributes {dimension_semantics = [#tpu.dimension_semantics<parallel>], iteration_bounds = array<i64: 2>, scalar_prefetch = 0 : i64, scratch_operands = 0 : i64, tpu.core_type = #tpu.core_type<tc>, window_params = [{transform_indices = @transform_0, window_bounds = array<i64: 256, 128>}, {pipeline_mode = #tpu.pipeline_mode<synchronous>, transform_indices = @transform_1, window_bounds = array<i64: 128, 128>}, {transform_indices = @transform_2, window_bounds = array<i64: 256, 128>}, {transform_indices = @transform_3, window_bounds = array<i64: 1, 2, 128>}]} {
    %c0 = arith.constant 0 : index
    %c0_0 = arith.constant 0 : index
    %0 = vector.load %arg1[%c0, %c0_0] : memref<256x128xbf16, #tpu.memory_space<vmem>>, vector<256x128xbf16>
    %c0_1 = arith.constant 0 : index
    %c0_2 = arith.constant 0 : index
    %1 = vector.load %arg2[%c0_1, %c0_2] : memref<128x128xbf16, #tpu.memory_space<vmem>>, vector<128x128xbf16>
    %cst = arith.constant dense<0.000000e+00> : vector<256x128xf32>
    %2 = tpu.matmul %0, %1, %cst {dimension_numbers = #tpu.dot_dimension_numbers<[1], [0], [0], [1], [0, 0, 1, 1], [], []>} : vector<256x128xbf16>, vector<128x128xbf16>, vector<256x128xf32> -> vector<256x128xf32>
    %3 = arith.truncf %2 : vector<256x128xf32> to vector<256x128xbf16>
    %c0_3 = arith.constant 0 : index
    %c0_4 = arith.constant 0 : index
    %4 = vector.load %arg3[%c0_3, %c0_4] : memref<256x128xbf16, #tpu.memory_space<vmem>>, vector<256x128xbf16>
    tpu.vector_store %arg3[%c0_3, %c0_4], %3 {strides = array<i32>} : memref<256x128xbf16, #tpu.memory_space<vmem>>, vector<256x128xbf16>,
    %5 = arith.extf %3 : vector<256x128xbf16> to vector<256x128xf32>
    %cst_5 = arith.constant dense<0.000000e+00> : vector<128xf32>
    %6 = vector.multi_reduction <add>, %5, %cst_5 [0] : vector<256x128xf32> to vector<128xf32>
    %7 = vector.shape_cast %6 : vector<128xf32> to vector<1x128xf32>
    %c0_6 = arith.constant 0 : index
    %c0_7 = arith.constant 0 : index
    %c0_8 = arith.constant 0 : index
    %8 = vector.load %arg4[%c0_6, %c0_7, %c0_8] : memref<1x2x128xf32, #tpu.memory_space<vmem>>, vector<1x1x128xf32>
    %9 = vector.shape_cast %8 : vector<1x1x128xf32> to vector<1x128xf32>
    %10 = vector.shape_cast %7 : vector<1x128xf32> to vector<1x1x128xf32>
    tpu.vector_store %arg4[%c0_6, %c0_7, %c0_8], %10 {strides = array<i32>} : memref<1x2x128xf32, #tpu.memory_space<vmem>>, vector<1x1x128xf32>,
    %11 = arith.mulf %5, %5 : vector<256x128xf32>
    %cst_9 = arith.constant dense<0.000000e+00> : vector<128xf32>
    %12 = vector.multi_reduction <add>, %11, %cst_9 [0] : vector<256x128xf32> to vector<128xf32>
    %13 = vector.shape_cast %12 : vector<128xf32> to vector<1x128xf32>
    %c0_10 = arith.constant 0 : index
    %c1 = arith.constant 1 : index
    %c0_11 = arith.constant 0 : index
    %14 = vector.load %arg4[%c0_10, %c1, %c0_11] : memref<1x2x128xf32, #tpu.memory_space<vmem>>, vector<1x1x128xf32>
    %15 = vector.shape_cast %14 : vector<1x1x128xf32> to vector<1x128xf32>
    %16 = vector.shape_cast %13 : vector<1x128xf32> to vector<1x1x128xf32>
    tpu.vector_store %arg4[%c0_10, %c1, %c0_11], %16 {strides = array<i32>} : memref<1x2x128xf32, #tpu.memory_space<vmem>>, vector<1x1x128xf32>,
    return
  }
  func.func @transform_0(%arg0: i32) -> (i32, i32) {
    %c0_i32 = arith.constant 0 : i32
    %c0_i32_0 = arith.constant 0 : i32
    return %arg0, %c0_i32 : i32, i32
  }
  func.func @transform_1(%arg0: i32) -> (i32, i32) {
    %c0_i32 = arith.constant 0 : i32
    %c0_i32_0 = arith.constant 0 : i32
    %c0_i32_1 = arith.constant 0 : i32
    return %c0_i32, %c0_i32_0 : i32, i32
  }
  func.func @transform_2(%arg0: i32) -> (i32, i32) {
    %c0_i32 = arith.constant 0 : i32
    %c0_i32_0 = arith.constant 0 : i32
    return %arg0, %c0_i32 : i32, i32
  }
  func.func @transform_3(%arg0: i32) -> (i32, i32, i32) {
    %c0_i32 = arith.constant 0 : i32
    %c0_i32_0 = arith.constant 0 : i32
    %c0_i32_1 = arith.constant 0 : i32
    return %arg0, %c0_i32, %c0_i32_0 : i32, i32, i32
  }
}

module attributes {stable_mosaic.version = 11 : i64} {
  func.func @_conv2_kernel(%arg0: i32, %arg1: i32, %arg2: memref<1x16x16x128xbf16, #tpu.memory_space<vmem>>, %arg3: memref<1x128xf32, #tpu.memory_space<vmem>>, %arg4: memref<1x128xf32, #tpu.memory_space<vmem>>, %arg5: memref<1152x128xbf16, #tpu.memory_space<vmem>>, %arg6: memref<1x8x16x128xbf16, #tpu.memory_space<vmem>>, %arg7: memref<1x1x2x128xf32, #tpu.memory_space<vmem>>, %arg8: memref<10x18x128xbf16, #tpu.memory_space<vmem>>) attributes {dimension_semantics = [#tpu.dimension_semantics<parallel>, #tpu.dimension_semantics<parallel>], iteration_bounds = array<i64: 2, 2>, scalar_prefetch = 0 : i64, scratch_operands = 1 : i64, tpu.core_type = #tpu.core_type<tc>, window_params = [{transform_indices = @transform_0, window_bounds = array<i64: 1, 16, 16, 128>}, {pipeline_mode = #tpu.pipeline_mode<synchronous>, transform_indices = @transform_1, window_bounds = array<i64: 1, 128>}, {pipeline_mode = #tpu.pipeline_mode<synchronous>, transform_indices = @transform_2, window_bounds = array<i64: 1, 128>}, {pipeline_mode = #tpu.pipeline_mode<synchronous>, transform_indices = @transform_3, window_bounds = array<i64: 1152, 128>}, {transform_indices = @transform_4, window_bounds = array<i64: 1, 8, 16, 128>}, {transform_indices = @transform_5, window_bounds = array<i64: 1, 1, 2, 128>}]} {
    %c0 = arith.constant 0 : index
    %c0_0 = arith.constant 0 : index
    %0 = vector.load %arg3[%c0, %c0_0] : memref<1x128xf32, #tpu.memory_space<vmem>>, vector<1x128xf32>
    %1 = vector.shape_cast %0 : vector<1x128xf32> to vector<1x1x128xf32>
    %c0_1 = arith.constant 0 : index
    %c0_2 = arith.constant 0 : index
    %2 = vector.load %arg4[%c0_1, %c0_2] : memref<1x128xf32, #tpu.memory_space<vmem>>, vector<1x128xf32>
    %3 = vector.shape_cast %2 : vector<1x128xf32> to vector<1x1x128xf32>
    %c8_i32 = arith.constant 8 : i32
    %4 = arith.muli %arg1, %c8_i32 : i32
    %5 = tpu.assume_multiple %4, 8 : i32
    %c0_3 = arith.constant 0 : index
    %6 = arith.index_cast %5 : i32 to index
    %c0_4 = arith.constant 0 : index
    %c0_5 = arith.constant 0 : index
    %7 = vector.load %arg2[%c0_3, %6, %c0_4, %c0_5] : memref<1x16x16x128xbf16, #tpu.memory_space<vmem>>, vector<1x8x16x128xbf16>
    %8 = vector.shape_cast %7 : vector<1x8x16x128xbf16> to vector<8x16x128xbf16>
    %9 = arith.extf %8 : vector<8x16x128xbf16> to vector<8x16x128xf32>
    %10 = vector.broadcast %1 : vector<1x1x128xf32> to vector<8x16x128xf32>
    %11 = arith.mulf %9, %10 : vector<8x16x128xf32>
    %12 = vector.broadcast %3 : vector<1x1x128xf32> to vector<8x16x128xf32>
    %13 = arith.addf %11, %12 : vector<8x16x128xf32>
    %cst = arith.constant 0.000000e+00 : f32
    %14 = vector.broadcast %cst : f32 to vector<8x16x128xf32>
    %15 = arith.maximumf %13, %14 : vector<8x16x128xf32>
    %c1_i32 = arith.constant 1 : i32
    %16 = arith.subi %5, %c1_i32 : i32
    %c0_i32 = arith.constant 0 : i32
    %17 = arith.maxsi %16, %c0_i32 : i32
    %c0_6 = arith.constant 0 : index
    %18 = arith.index_cast %17 : i32 to index
    %c0_7 = arith.constant 0 : index
    %c0_8 = arith.constant 0 : index
    %19 = vector.load %arg2[%c0_6, %18, %c0_7, %c0_8] : memref<1x16x16x128xbf16, #tpu.memory_space<vmem>>, vector<1x1x16x128xbf16>
    %20 = vector.shape_cast %19 : vector<1x1x16x128xbf16> to vector<1x16x128xbf16>
    %21 = arith.extf %20 : vector<1x16x128xbf16> to vector<1x16x128xf32>
    %22 = vector.broadcast %1 : vector<1x1x128xf32> to vector<1x16x128xf32>
    %23 = arith.mulf %21, %22 : vector<1x16x128xf32>
    %24 = vector.broadcast %3 : vector<1x1x128xf32> to vector<1x16x128xf32>
    %25 = arith.addf %23, %24 : vector<1x16x128xf32>
    %cst_9 = arith.constant 0.000000e+00 : f32
    %26 = vector.broadcast %cst_9 : f32 to vector<1x16x128xf32>
    %27 = arith.maximumf %25, %26 : vector<1x16x128xf32>
    %c8_i32_10 = arith.constant 8 : i32
    %28 = arith.addi %5, %c8_i32_10 : i32
    %c15_i32 = arith.constant 15 : i32
    %29 = arith.minsi %28, %c15_i32 : i32
    %c0_11 = arith.constant 0 : index
    %30 = arith.index_cast %29 : i32 to index
    %c0_12 = arith.constant 0 : index
    %c0_13 = arith.constant 0 : index
    %31 = vector.load %arg2[%c0_11, %30, %c0_12, %c0_13] : memref<1x16x16x128xbf16, #tpu.memory_space<vmem>>, vector<1x1x16x128xbf16>
    %32 = vector.shape_cast %31 : vector<1x1x16x128xbf16> to vector<1x16x128xbf16>
    %33 = arith.extf %32 : vector<1x16x128xbf16> to vector<1x16x128xf32>
    %34 = vector.broadcast %1 : vector<1x1x128xf32> to vector<1x16x128xf32>
    %35 = arith.mulf %33, %34 : vector<1x16x128xf32>
    %36 = vector.broadcast %3 : vector<1x1x128xf32> to vector<1x16x128xf32>
    %37 = arith.addf %35, %36 : vector<1x16x128xf32>
    %cst_14 = arith.constant 0.000000e+00 : f32
    %38 = vector.broadcast %cst_14 : f32 to vector<1x16x128xf32>
    %39 = arith.maximumf %37, %38 : vector<1x16x128xf32>
    %c0_i32_15 = arith.constant 0 : i32
    %40 = arith.cmpi sgt, %arg1, %c0_i32_15 : i32
    %cst_16 = arith.constant 1.000000e+00 : f32
    %cst_17 = arith.constant 0.000000e+00 : f32
    %41 = arith.select %40, %cst_16, %cst_17 : f32
    %42 = vector.broadcast %41 : f32 to vector<1x16x128xf32>
    %43 = arith.mulf %27, %42 : vector<1x16x128xf32>
    %c1_i32_18 = arith.constant 1 : i32
    %44 = arith.cmpi slt, %arg1, %c1_i32_18 : i32
    %cst_19 = arith.constant 1.000000e+00 : f32
    %cst_20 = arith.constant 0.000000e+00 : f32
    %45 = arith.select %44, %cst_19, %cst_20 : f32
    %46 = vector.broadcast %45 : f32 to vector<1x16x128xf32>
    %47 = arith.mulf %39, %46 : vector<1x16x128xf32>
    %cst_21 = arith.constant 0.000000e+00 : bf16
    %48 = vector.broadcast %cst_21 : bf16 to vector<10x1x128xbf16>
    %c0_22 = arith.constant 0 : index
    %c0_23 = arith.constant 0 : index
    %c0_24 = arith.constant 0 : index
    %49 = vector.load %arg8[%c0_22, %c0_23, %c0_24] : memref<10x18x128xbf16, #tpu.memory_space<vmem>>, vector<10x1x128xbf16>
    tpu.vector_store %arg8[%c0_22, %c0_23, %c0_24], %48 {strides = array<i32>} : memref<10x18x128xbf16, #tpu.memory_space<vmem>>, vector<10x1x128xbf16>,
    %c0_25 = arith.constant 0 : index
    %c17 = arith.constant 17 : index
    %c0_26 = arith.constant 0 : index
    %50 = vector.load %arg8[%c0_25, %c17, %c0_26] : memref<10x18x128xbf16, #tpu.memory_space<vmem>>, vector<10x1x128xbf16>
    tpu.vector_store %arg8[%c0_25, %c17, %c0_26], %48 {strides = array<i32>} : memref<10x18x128xbf16, #tpu.memory_space<vmem>>, vector<10x1x128xbf16>,
    %51 = arith.truncf %43 : vector<1x16x128xf32> to vector<1x16x128xbf16>
    %c0_27 = arith.constant 0 : index
    %c1 = arith.constant 1 : index
    %c0_28 = arith.constant 0 : index
    %52 = vector.load %arg8[%c0_27, %c1, %c0_28] : memref<10x18x128xbf16, #tpu.memory_space<vmem>>, vector<1x16x128xbf16>
    tpu.vector_store %arg8[%c0_27, %c1, %c0_28], %51 {strides = array<i32>} : memref<10x18x128xbf16, #tpu.memory_space<vmem>>, vector<1x16x128xbf16>,
    %53 = arith.truncf %15 : vector<8x16x128xf32> to vector<8x16x128xbf16>
    %c1_29 = arith.constant 1 : index
    %c1_30 = arith.constant 1 : index
    %c0_31 = arith.constant 0 : index
    %54 = vector.load %arg8[%c1_29, %c1_30, %c0_31] : memref<10x18x128xbf16, #tpu.memory_space<vmem>>, vector<8x16x128xbf16>
    tpu.vector_store %arg8[%c1_29, %c1_30, %c0_31], %53 {strides = array<i32>} : memref<10x18x128xbf16, #tpu.memory_space<vmem>>, vector<8x16x128xbf16>,
    %55 = arith.truncf %47 : vector<1x16x128xf32> to vector<1x16x128xbf16>
    %c9 = arith.constant 9 : index
    %c1_32 = arith.constant 1 : index
    %c0_33 = arith.constant 0 : index
    %56 = vector.load %arg8[%c9, %c1_32, %c0_33] : memref<10x18x128xbf16, #tpu.memory_space<vmem>>, vector<1x16x128xbf16>
    tpu.vector_store %arg8[%c9, %c1_32, %c0_33], %55 {strides = array<i32>} : memref<10x18x128xbf16, #tpu.memory_space<vmem>>, vector<1x16x128xbf16>,
    %c0_34 = arith.constant 0 : index
    %c0_35 = arith.constant 0 : index
    %c0_36 = arith.constant 0 : index
    %57 = vector.load %arg8[%c0_34, %c0_35, %c0_36] : memref<10x18x128xbf16, #tpu.memory_space<vmem>>, vector<8x16x128xbf16>
    %58 = vector.shape_cast %57 : vector<8x16x128xbf16> to vector<128x128xbf16>
    %c0_37 = arith.constant 0 : index
    %c0_38 = arith.constant 0 : index
    %59 = vector.load %arg5[%c0_37, %c0_38] : memref<1152x128xbf16, #tpu.memory_space<vmem>>, vector<128x128xbf16>
    %cst_39 = arith.constant dense<0.000000e+00> : vector<128x128xf32>
    %60 = tpu.matmul %58, %59, %cst_39 {dimension_numbers = #tpu.dot_dimension_numbers<[1], [0], [0], [1], [0, 0, 1, 1], [], []>} : vector<128x128xbf16>, vector<128x128xbf16>, vector<128x128xf32> -> vector<128x128xf32>
    %c0_40 = arith.constant 0 : index
    %c1_41 = arith.constant 1 : index
    %c0_42 = arith.constant 0 : index
    %61 = vector.load %arg8[%c0_40, %c1_41, %c0_42] : memref<10x18x128xbf16, #tpu.memory_space<vmem>>, vector<8x16x128xbf16>
    %62 = vector.shape_cast %61 : vector<8x16x128xbf16> to vector<128x128xbf16>
    %c128 = arith.constant 128 : index
    %c0_43 = arith.constant 0 : index
    %63 = vector.load %arg5[%c128, %c0_43] : memref<1152x128xbf16, #tpu.memory_space<vmem>>, vector<128x128xbf16>
    %cst_44 = arith.constant dense<0.000000e+00> : vector<128x128xf32>
    %64 = tpu.matmul %62, %63, %cst_44 {dimension_numbers = #tpu.dot_dimension_numbers<[1], [0], [0], [1], [0, 0, 1, 1], [], []>} : vector<128x128xbf16>, vector<128x128xbf16>, vector<128x128xf32> -> vector<128x128xf32>
    %65 = arith.addf %60, %64 : vector<128x128xf32>
    %c0_45 = arith.constant 0 : index
    %c2 = arith.constant 2 : index
    %c0_46 = arith.constant 0 : index
    %66 = vector.load %arg8[%c0_45, %c2, %c0_46] : memref<10x18x128xbf16, #tpu.memory_space<vmem>>, vector<8x16x128xbf16>
    %67 = vector.shape_cast %66 : vector<8x16x128xbf16> to vector<128x128xbf16>
    %c256 = arith.constant 256 : index
    %c0_47 = arith.constant 0 : index
    %68 = vector.load %arg5[%c256, %c0_47] : memref<1152x128xbf16, #tpu.memory_space<vmem>>, vector<128x128xbf16>
    %cst_48 = arith.constant dense<0.000000e+00> : vector<128x128xf32>
    %69 = tpu.matmul %67, %68, %cst_48 {dimension_numbers = #tpu.dot_dimension_numbers<[1], [0], [0], [1], [0, 0, 1, 1], [], []>} : vector<128x128xbf16>, vector<128x128xbf16>, vector<128x128xf32> -> vector<128x128xf32>
    %70 = arith.addf %65, %69 : vector<128x128xf32>
    %c1_49 = arith.constant 1 : index
    %c0_50 = arith.constant 0 : index
    %c0_51 = arith.constant 0 : index
    %71 = vector.load %arg8[%c1_49, %c0_50, %c0_51] : memref<10x18x128xbf16, #tpu.memory_space<vmem>>, vector<8x16x128xbf16>
    %72 = vector.shape_cast %71 : vector<8x16x128xbf16> to vector<128x128xbf16>
    %c384 = arith.constant 384 : index
    %c0_52 = arith.constant 0 : index
    %73 = vector.load %arg5[%c384, %c0_52] : memref<1152x128xbf16, #tpu.memory_space<vmem>>, vector<128x128xbf16>
    %cst_53 = arith.constant dense<0.000000e+00> : vector<128x128xf32>
    %74 = tpu.matmul %72, %73, %cst_53 {dimension_numbers = #tpu.dot_dimension_numbers<[1], [0], [0], [1], [0, 0, 1, 1], [], []>} : vector<128x128xbf16>, vector<128x128xbf16>, vector<128x128xf32> -> vector<128x128xf32>
    %75 = arith.addf %70, %74 : vector<128x128xf32>
    %c1_54 = arith.constant 1 : index
    %c1_55 = arith.constant 1 : index
    %c0_56 = arith.constant 0 : index
    %76 = vector.load %arg8[%c1_54, %c1_55, %c0_56] : memref<10x18x128xbf16, #tpu.memory_space<vmem>>, vector<8x16x128xbf16>
    %77 = vector.shape_cast %76 : vector<8x16x128xbf16> to vector<128x128xbf16>
    %c512 = arith.constant 512 : index
    %c0_57 = arith.constant 0 : index
    %78 = vector.load %arg5[%c512, %c0_57] : memref<1152x128xbf16, #tpu.memory_space<vmem>>, vector<128x128xbf16>
    %cst_58 = arith.constant dense<0.000000e+00> : vector<128x128xf32>
    %79 = tpu.matmul %77, %78, %cst_58 {dimension_numbers = #tpu.dot_dimension_numbers<[1], [0], [0], [1], [0, 0, 1, 1], [], []>} : vector<128x128xbf16>, vector<128x128xbf16>, vector<128x128xf32> -> vector<128x128xf32>
    %80 = arith.addf %75, %79 : vector<128x128xf32>
    %c1_59 = arith.constant 1 : index
    %c2_60 = arith.constant 2 : index
    %c0_61 = arith.constant 0 : index
    %81 = vector.load %arg8[%c1_59, %c2_60, %c0_61] : memref<10x18x128xbf16, #tpu.memory_space<vmem>>, vector<8x16x128xbf16>
    %82 = vector.shape_cast %81 : vector<8x16x128xbf16> to vector<128x128xbf16>
    %c640 = arith.constant 640 : index
    %c0_62 = arith.constant 0 : index
    %83 = vector.load %arg5[%c640, %c0_62] : memref<1152x128xbf16, #tpu.memory_space<vmem>>, vector<128x128xbf16>
    %cst_63 = arith.constant dense<0.000000e+00> : vector<128x128xf32>
    %84 = tpu.matmul %82, %83, %cst_63 {dimension_numbers = #tpu.dot_dimension_numbers<[1], [0], [0], [1], [0, 0, 1, 1], [], []>} : vector<128x128xbf16>, vector<128x128xbf16>, vector<128x128xf32> -> vector<128x128xf32>
    %85 = arith.addf %80, %84 : vector<128x128xf32>
    %c2_64 = arith.constant 2 : index
    %c0_65 = arith.constant 0 : index
    %c0_66 = arith.constant 0 : index
    %86 = vector.load %arg8[%c2_64, %c0_65, %c0_66] : memref<10x18x128xbf16, #tpu.memory_space<vmem>>, vector<8x16x128xbf16>
    %87 = vector.shape_cast %86 : vector<8x16x128xbf16> to vector<128x128xbf16>
    %c768 = arith.constant 768 : index
    %c0_67 = arith.constant 0 : index
    %88 = vector.load %arg5[%c768, %c0_67] : memref<1152x128xbf16, #tpu.memory_space<vmem>>, vector<128x128xbf16>
    %cst_68 = arith.constant dense<0.000000e+00> : vector<128x128xf32>
    %89 = tpu.matmul %87, %88, %cst_68 {dimension_numbers = #tpu.dot_dimension_numbers<[1], [0], [0], [1], [0, 0, 1, 1], [], []>} : vector<128x128xbf16>, vector<128x128xbf16>, vector<128x128xf32> -> vector<128x128xf32>
    %90 = arith.addf %85, %89 : vector<128x128xf32>
    %c2_69 = arith.constant 2 : index
    %c1_70 = arith.constant 1 : index
    %c0_71 = arith.constant 0 : index
    %91 = vector.load %arg8[%c2_69, %c1_70, %c0_71] : memref<10x18x128xbf16, #tpu.memory_space<vmem>>, vector<8x16x128xbf16>
    %92 = vector.shape_cast %91 : vector<8x16x128xbf16> to vector<128x128xbf16>
    %c896 = arith.constant 896 : index
    %c0_72 = arith.constant 0 : index
    %93 = vector.load %arg5[%c896, %c0_72] : memref<1152x128xbf16, #tpu.memory_space<vmem>>, vector<128x128xbf16>
    %cst_73 = arith.constant dense<0.000000e+00> : vector<128x128xf32>
    %94 = tpu.matmul %92, %93, %cst_73 {dimension_numbers = #tpu.dot_dimension_numbers<[1], [0], [0], [1], [0, 0, 1, 1], [], []>} : vector<128x128xbf16>, vector<128x128xbf16>, vector<128x128xf32> -> vector<128x128xf32>
    %95 = arith.addf %90, %94 : vector<128x128xf32>
    %c2_74 = arith.constant 2 : index
    %c2_75 = arith.constant 2 : index
    %c0_76 = arith.constant 0 : index
    %96 = vector.load %arg8[%c2_74, %c2_75, %c0_76] : memref<10x18x128xbf16, #tpu.memory_space<vmem>>, vector<8x16x128xbf16>
    %97 = vector.shape_cast %96 : vector<8x16x128xbf16> to vector<128x128xbf16>
    %c1024 = arith.constant 1024 : index
    %c0_77 = arith.constant 0 : index
    %98 = vector.load %arg5[%c1024, %c0_77] : memref<1152x128xbf16, #tpu.memory_space<vmem>>, vector<128x128xbf16>
    %cst_78 = arith.constant dense<0.000000e+00> : vector<128x128xf32>
    %99 = tpu.matmul %97, %98, %cst_78 {dimension_numbers = #tpu.dot_dimension_numbers<[1], [0], [0], [1], [0, 0, 1, 1], [], []>} : vector<128x128xbf16>, vector<128x128xbf16>, vector<128x128xf32> -> vector<128x128xf32>
    %100 = arith.addf %95, %99 : vector<128x128xf32>
    %101 = arith.truncf %100 : vector<128x128xf32> to vector<128x128xbf16>
    %102 = vector.shape_cast %101 : vector<128x128xbf16> to vector<8x16x128xbf16>
    %c0_79 = arith.constant 0 : index
    %c0_80 = arith.constant 0 : index
    %c0_81 = arith.constant 0 : index
    %c0_82 = arith.constant 0 : index
    %103 = vector.load %arg6[%c0_79, %c0_80, %c0_81, %c0_82] : memref<1x8x16x128xbf16, #tpu.memory_space<vmem>>, vector<1x8x16x128xbf16>
    %104 = vector.shape_cast %103 : vector<1x8x16x128xbf16> to vector<8x16x128xbf16>
    %105 = vector.shape_cast %102 : vector<8x16x128xbf16> to vector<1x8x16x128xbf16>
    tpu.vector_store %arg6[%c0_79, %c0_80, %c0_81, %c0_82], %105 {strides = array<i32>} : memref<1x8x16x128xbf16, #tpu.memory_space<vmem>>, vector<1x8x16x128xbf16>,
    %106 = arith.extf %101 : vector<128x128xbf16> to vector<128x128xf32>
    %cst_83 = arith.constant dense<0.000000e+00> : vector<128xf32>
    %107 = vector.multi_reduction <add>, %106, %cst_83 [0] : vector<128x128xf32> to vector<128xf32>
    %108 = vector.shape_cast %107 : vector<128xf32> to vector<1x128xf32>
    %c0_84 = arith.constant 0 : index
    %c0_85 = arith.constant 0 : index
    %c0_86 = arith.constant 0 : index
    %c0_87 = arith.constant 0 : index
    %109 = vector.load %arg7[%c0_84, %c0_85, %c0_86, %c0_87] : memref<1x1x2x128xf32, #tpu.memory_space<vmem>>, vector<1x1x1x128xf32>
    %110 = vector.shape_cast %109 : vector<1x1x1x128xf32> to vector<1x128xf32>
    %111 = vector.shape_cast %108 : vector<1x128xf32> to vector<1x1x1x128xf32>
    tpu.vector_store %arg7[%c0_84, %c0_85, %c0_86, %c0_87], %111 {strides = array<i32>} : memref<1x1x2x128xf32, #tpu.memory_space<vmem>>, vector<1x1x1x128xf32>,
    %112 = arith.mulf %106, %106 : vector<128x128xf32>
    %cst_88 = arith.constant dense<0.000000e+00> : vector<128xf32>
    %113 = vector.multi_reduction <add>, %112, %cst_88 [0] : vector<128x128xf32> to vector<128xf32>
    %114 = vector.shape_cast %113 : vector<128xf32> to vector<1x128xf32>
    %c0_89 = arith.constant 0 : index
    %c0_90 = arith.constant 0 : index
    %c1_91 = arith.constant 1 : index
    %c0_92 = arith.constant 0 : index
    %115 = vector.load %arg7[%c0_89, %c0_90, %c1_91, %c0_92] : memref<1x1x2x128xf32, #tpu.memory_space<vmem>>, vector<1x1x1x128xf32>
    %116 = vector.shape_cast %115 : vector<1x1x1x128xf32> to vector<1x128xf32>
    %117 = vector.shape_cast %114 : vector<1x128xf32> to vector<1x1x1x128xf32>
    tpu.vector_store %arg7[%c0_89, %c0_90, %c1_91, %c0_92], %117 {strides = array<i32>} : memref<1x1x2x128xf32, #tpu.memory_space<vmem>>, vector<1x1x1x128xf32>,
    return
  }
  func.func @transform_0(%arg0: i32, %arg1: i32) -> (i32, i32, i32, i32) {
    %c0_i32 = arith.constant 0 : i32
    %c0_i32_0 = arith.constant 0 : i32
    %c0_i32_1 = arith.constant 0 : i32
    %c0_i32_2 = arith.constant 0 : i32
    return %arg0, %c0_i32, %c0_i32_0, %c0_i32_1 : i32, i32, i32, i32
  }
  func.func @transform_1(%arg0: i32, %arg1: i32) -> (i32, i32) {
    %c0_i32 = arith.constant 0 : i32
    %c0_i32_0 = arith.constant 0 : i32
    %c0_i32_1 = arith.constant 0 : i32
    return %c0_i32, %c0_i32_0 : i32, i32
  }
  func.func @transform_2(%arg0: i32, %arg1: i32) -> (i32, i32) {
    %c0_i32 = arith.constant 0 : i32
    %c0_i32_0 = arith.constant 0 : i32
    %c0_i32_1 = arith.constant 0 : i32
    return %c0_i32, %c0_i32_0 : i32, i32
  }
  func.func @transform_3(%arg0: i32, %arg1: i32) -> (i32, i32) {
    %c0_i32 = arith.constant 0 : i32
    %c0_i32_0 = arith.constant 0 : i32
    %c0_i32_1 = arith.constant 0 : i32
    return %c0_i32, %c0_i32_0 : i32, i32
  }
  func.func @transform_4(%arg0: i32, %arg1: i32) -> (i32, i32, i32, i32) {
    %c0_i32 = arith.constant 0 : i32
    %c0_i32_0 = arith.constant 0 : i32
    %c0_i32_1 = arith.constant 0 : i32
    return %arg0, %arg1, %c0_i32, %c0_i32_0 : i32, i32, i32, i32
  }
  func.func @transform_5(%arg0: i32, %arg1: i32) -> (i32, i32, i32, i32) {
    %c0_i32 = arith.constant 0 : i32
    %c0_i32_0 = arith.constant 0 : i32
    %c0_i32_1 = arith.constant 0 : i32
    return %arg0, %arg1, %c0_i32, %c0_i32_0 : i32, i32, i32, i32
  }
}

module attributes {stable_mosaic.version = 11 : i64} {
  func.func @_conv3_kernel(%arg0: i32, %arg1: memref<256x128xbf16, #tpu.memory_space<vmem>>, %arg2: memref<1x128xf32, #tpu.memory_space<vmem>>, %arg3: memref<1x128xf32, #tpu.memory_space<vmem>>, %arg4: memref<128x128xbf16, #tpu.memory_space<vmem>>, %arg5: memref<256x128xbf16, #tpu.memory_space<vmem>>, %arg6: memref<1x2x128xf32, #tpu.memory_space<vmem>>) attributes {dimension_semantics = [#tpu.dimension_semantics<parallel>], iteration_bounds = array<i64: 2>, scalar_prefetch = 0 : i64, scratch_operands = 0 : i64, tpu.core_type = #tpu.core_type<tc>, window_params = [{transform_indices = @transform_0, window_bounds = array<i64: 256, 128>}, {pipeline_mode = #tpu.pipeline_mode<synchronous>, transform_indices = @transform_1, window_bounds = array<i64: 1, 128>}, {pipeline_mode = #tpu.pipeline_mode<synchronous>, transform_indices = @transform_2, window_bounds = array<i64: 1, 128>}, {pipeline_mode = #tpu.pipeline_mode<synchronous>, transform_indices = @transform_3, window_bounds = array<i64: 128, 128>}, {transform_indices = @transform_4, window_bounds = array<i64: 256, 128>}, {transform_indices = @transform_5, window_bounds = array<i64: 1, 2, 128>}]} {
    %c0 = arith.constant 0 : index
    %c0_0 = arith.constant 0 : index
    %0 = vector.load %arg1[%c0, %c0_0] : memref<256x128xbf16, #tpu.memory_space<vmem>>, vector<256x128xbf16>
    %1 = arith.extf %0 : vector<256x128xbf16> to vector<256x128xf32>
    %c0_1 = arith.constant 0 : index
    %c0_2 = arith.constant 0 : index
    %2 = vector.load %arg2[%c0_1, %c0_2] : memref<1x128xf32, #tpu.memory_space<vmem>>, vector<1x128xf32>
    %3 = vector.broadcast %2 : vector<1x128xf32> to vector<256x128xf32>
    %4 = arith.mulf %1, %3 : vector<256x128xf32>
    %c0_3 = arith.constant 0 : index
    %c0_4 = arith.constant 0 : index
    %5 = vector.load %arg3[%c0_3, %c0_4] : memref<1x128xf32, #tpu.memory_space<vmem>>, vector<1x128xf32>
    %6 = vector.broadcast %5 : vector<1x128xf32> to vector<256x128xf32>
    %7 = arith.addf %4, %6 : vector<256x128xf32>
    %cst = arith.constant 0.000000e+00 : f32
    %8 = vector.broadcast %cst : f32 to vector<256x128xf32>
    %9 = arith.maximumf %7, %8 : vector<256x128xf32>
    %10 = arith.truncf %9 : vector<256x128xf32> to vector<256x128xbf16>
    %c0_5 = arith.constant 0 : index
    %c0_6 = arith.constant 0 : index
    %11 = vector.load %arg4[%c0_5, %c0_6] : memref<128x128xbf16, #tpu.memory_space<vmem>>, vector<128x128xbf16>
    %cst_7 = arith.constant dense<0.000000e+00> : vector<256x128xf32>
    %12 = tpu.matmul %10, %11, %cst_7 {dimension_numbers = #tpu.dot_dimension_numbers<[1], [0], [0], [1], [0, 0, 1, 1], [], []>} : vector<256x128xbf16>, vector<128x128xbf16>, vector<256x128xf32> -> vector<256x128xf32>
    %13 = arith.truncf %12 : vector<256x128xf32> to vector<256x128xbf16>
    %c0_8 = arith.constant 0 : index
    %c0_9 = arith.constant 0 : index
    %14 = vector.load %arg5[%c0_8, %c0_9] : memref<256x128xbf16, #tpu.memory_space<vmem>>, vector<256x128xbf16>
    tpu.vector_store %arg5[%c0_8, %c0_9], %13 {strides = array<i32>} : memref<256x128xbf16, #tpu.memory_space<vmem>>, vector<256x128xbf16>,
    %15 = arith.extf %13 : vector<256x128xbf16> to vector<256x128xf32>
    %cst_10 = arith.constant dense<0.000000e+00> : vector<128xf32>
    %16 = vector.multi_reduction <add>, %15, %cst_10 [0] : vector<256x128xf32> to vector<128xf32>
    %17 = vector.shape_cast %16 : vector<128xf32> to vector<1x128xf32>
    %c0_11 = arith.constant 0 : index
    %c0_12 = arith.constant 0 : index
    %c0_13 = arith.constant 0 : index
    %18 = vector.load %arg6[%c0_11, %c0_12, %c0_13] : memref<1x2x128xf32, #tpu.memory_space<vmem>>, vector<1x1x128xf32>
    %19 = vector.shape_cast %18 : vector<1x1x128xf32> to vector<1x128xf32>
    %20 = vector.shape_cast %17 : vector<1x128xf32> to vector<1x1x128xf32>
    tpu.vector_store %arg6[%c0_11, %c0_12, %c0_13], %20 {strides = array<i32>} : memref<1x2x128xf32, #tpu.memory_space<vmem>>, vector<1x1x128xf32>,
    %21 = arith.mulf %15, %15 : vector<256x128xf32>
    %cst_14 = arith.constant dense<0.000000e+00> : vector<128xf32>
    %22 = vector.multi_reduction <add>, %21, %cst_14 [0] : vector<256x128xf32> to vector<128xf32>
    %23 = vector.shape_cast %22 : vector<128xf32> to vector<1x128xf32>
    %c0_15 = arith.constant 0 : index
    %c1 = arith.constant 1 : index
    %c0_16 = arith.constant 0 : index
    %24 = vector.load %arg6[%c0_15, %c1, %c0_16] : memref<1x2x128xf32, #tpu.memory_space<vmem>>, vector<1x1x128xf32>
    %25 = vector.shape_cast %24 : vector<1x1x128xf32> to vector<1x128xf32>
    %26 = vector.shape_cast %23 : vector<1x128xf32> to vector<1x1x128xf32>
    tpu.vector_store %arg6[%c0_15, %c1, %c0_16], %26 {strides = array<i32>} : memref<1x2x128xf32, #tpu.memory_space<vmem>>, vector<1x1x128xf32>,
    return
  }
  func.func @transform_0(%arg0: i32) -> (i32, i32) {
    %c0_i32 = arith.constant 0 : i32
    %c0_i32_0 = arith.constant 0 : i32
    return %arg0, %c0_i32 : i32, i32
  }
  func.func @transform_1(%arg0: i32) -> (i32, i32) {
    %c0_i32 = arith.constant 0 : i32
    %c0_i32_0 = arith.constant 0 : i32
    %c0_i32_1 = arith.constant 0 : i32
    return %c0_i32, %c0_i32_0 : i32, i32
  }
  func.func @transform_2(%arg0: i32) -> (i32, i32) {
    %c0_i32 = arith.constant 0 : i32
    %c0_i32_0 = arith.constant 0 : i32
    %c0_i32_1 = arith.constant 0 : i32
    return %c0_i32, %c0_i32_0 : i32, i32
  }
  func.func @transform_3(%arg0: i32) -> (i32, i32) {
    %c0_i32 = arith.constant 0 : i32
    %c0_i32_0 = arith.constant 0 : i32
    %c0_i32_1 = arith.constant 0 : i32
    return %c0_i32, %c0_i32_0 : i32, i32
  }
  func.func @transform_4(%arg0: i32) -> (i32, i32) {
    %c0_i32 = arith.constant 0 : i32
    %c0_i32_0 = arith.constant 0 : i32
    return %arg0, %c0_i32 : i32, i32
  }
  func.func @transform_5(%arg0: i32) -> (i32, i32, i32) {
    %c0_i32 = arith.constant 0 : i32
    %c0_i32_0 = arith.constant 0 : i32
    %c0_i32_1 = arith.constant 0 : i32
    return %arg0, %c0_i32, %c0_i32_0 : i32, i32, i32
  }
}

module attributes {stable_mosaic.version = 11 : i64} {
  func.func @_bn3_add_kernel(%arg0: i32, %arg1: memref<256x128xbf16, #tpu.memory_space<vmem>>, %arg2: memref<256x128xbf16, #tpu.memory_space<vmem>>, %arg3: memref<1x128xf32, #tpu.memory_space<vmem>>, %arg4: memref<1x128xf32, #tpu.memory_space<vmem>>, %arg5: memref<256x128xf32, #tpu.memory_space<vmem>>) attributes {dimension_semantics = [#tpu.dimension_semantics<parallel>], iteration_bounds = array<i64: 2>, scalar_prefetch = 0 : i64, scratch_operands = 0 : i64, tpu.core_type = #tpu.core_type<tc>, window_params = [{transform_indices = @transform_0, window_bounds = array<i64: 256, 128>}, {transform_indices = @transform_1, window_bounds = array<i64: 256, 128>}, {pipeline_mode = #tpu.pipeline_mode<synchronous>, transform_indices = @transform_2, window_bounds = array<i64: 1, 128>}, {pipeline_mode = #tpu.pipeline_mode<synchronous>, transform_indices = @transform_3, window_bounds = array<i64: 1, 128>}, {transform_indices = @transform_4, window_bounds = array<i64: 256, 128>}]} {
    %c0 = arith.constant 0 : index
    %c0_0 = arith.constant 0 : index
    %0 = vector.load %arg1[%c0, %c0_0] : memref<256x128xbf16, #tpu.memory_space<vmem>>, vector<256x128xbf16>
    %1 = arith.extf %0 : vector<256x128xbf16> to vector<256x128xf32>
    %c0_1 = arith.constant 0 : index
    %c0_2 = arith.constant 0 : index
    %2 = vector.load %arg3[%c0_1, %c0_2] : memref<1x128xf32, #tpu.memory_space<vmem>>, vector<1x128xf32>
    %3 = vector.broadcast %2 : vector<1x128xf32> to vector<256x128xf32>
    %4 = arith.mulf %1, %3 : vector<256x128xf32>
    %c0_3 = arith.constant 0 : index
    %c0_4 = arith.constant 0 : index
    %5 = vector.load %arg4[%c0_3, %c0_4] : memref<1x128xf32, #tpu.memory_space<vmem>>, vector<1x128xf32>
    %6 = vector.broadcast %5 : vector<1x128xf32> to vector<256x128xf32>
    %7 = arith.addf %4, %6 : vector<256x128xf32>
    %c0_5 = arith.constant 0 : index
    %c0_6 = arith.constant 0 : index
    %8 = vector.load %arg2[%c0_5, %c0_6] : memref<256x128xbf16, #tpu.memory_space<vmem>>, vector<256x128xbf16>
    %9 = arith.extf %8 : vector<256x128xbf16> to vector<256x128xf32>
    %10 = arith.addf %7, %9 : vector<256x128xf32>
    %cst = arith.constant 0.000000e+00 : f32
    %11 = vector.broadcast %cst : f32 to vector<256x128xf32>
    %12 = arith.maximumf %10, %11 : vector<256x128xf32>
    %c0_7 = arith.constant 0 : index
    %c0_8 = arith.constant 0 : index
    %13 = vector.load %arg5[%c0_7, %c0_8] : memref<256x128xf32, #tpu.memory_space<vmem>>, vector<256x128xf32>
    tpu.vector_store %arg5[%c0_7, %c0_8], %12 {strides = array<i32>} : memref<256x128xf32, #tpu.memory_space<vmem>>, vector<256x128xf32>,
    return
  }
  func.func @transform_0(%arg0: i32) -> (i32, i32) {
    %c0_i32 = arith.constant 0 : i32
    %c0_i32_0 = arith.constant 0 : i32
    return %arg0, %c0_i32 : i32, i32
  }
  func.func @transform_1(%arg0: i32) -> (i32, i32) {
    %c0_i32 = arith.constant 0 : i32
    %c0_i32_0 = arith.constant 0 : i32
    return %arg0, %c0_i32 : i32, i32
  }
  func.func @transform_2(%arg0: i32) -> (i32, i32) {
    %c0_i32 = arith.constant 0 : i32
    %c0_i32_0 = arith.constant 0 : i32
    %c0_i32_1 = arith.constant 0 : i32
    return %c0_i32, %c0_i32_0 : i32, i32
  }
  func.func @transform_3(%arg0: i32) -> (i32, i32) {
    %c0_i32 = arith.constant 0 : i32
    %c0_i32_0 = arith.constant 0 : i32
    %c0_i32_1 = arith.constant 0 : i32
    return %c0_i32, %c0_i32_0 : i32, i32
  }
  func.func @transform_4(%arg0: i32) -> (i32, i32) {
    %c0_i32 = arith.constant 0 : i32
    %c0_i32_0 = arith.constant 0 : i32
    return %arg0, %c0_i32 : i32, i32
  }
}

</mosaic_0001>

<llo_original>
// kernel: bottleneck_forward.7
$region0: #{bottleneck_forward.7}
  #allocation0 [shape = 'u32[]', space=smem, size = 0x4, offset = 0x4, fixed_abs, tag = 'smem constant byte address 0x4 - core index']
  #allocation1 [shape = 'u32[144,128]{1,0:T(1,128)}', space=vmem, size = 0x12000, scoped, tag = 'internal scratch']
  %s0 = inlined_call_operand.vmem [shape: bf16[512,128], index: 0, kind: input, shape index: {}]
  %s1 = inlined_call_operand.vmem [shape: bf16[512,128], index: 1, kind: input, shape index: {}]
  %s2 = inlined_call_operand.vmem [shape: f32[1,128], index: 2, kind: input, shape index: {}]
  %s3 = inlined_call_operand.vmem [shape: f32[1,128], index: 3, kind: input, shape index: {}]
  %s4 = inlined_call_operand.vmem [shape: f32[512,128], index: 4, kind: output, shape index: {}]
  %s5 = sld [smem:[#allocation0]]
  $region49: #{bottleneck_forward.7} parent=0
    _
  %s7 = ssub.s32 1, %s5
  %s8 = scalar_select 0, %s7, %s5
  loop: start=0, step=1, limit=4
  $region2: #{bottleneck_forward.7} parent=0 // loop_pre_header
    _
  $region3: #{bottleneck_forward.7} parent=0 // loop_header
    %s10 = sphi 0, %s14
    %p11 = scmp.ge.s32.totalorder %s10, 4
    %s20 = sphi 0, %s22
    %s23 = sphi 0, %s20
    %s24 = sphi 0, %s23
    %s40 = sphi 0, %s24
    %s46 = sphi 0, %s48
    %s49 = sphi 0, %s46
    %s50 = sphi 0, %s49
    %s66 = sphi 0, %s50
    %s70 = sphi 0, %s70
    %s72 = sphi 0, %s70
    %s73 = sphi 0, %s72
    %s87 = sphi 0, %s73
    %s91 = sphi 0, %s91
    %s93 = sphi 0, %s91
    %s94 = sphi 0, %s93
    %s108 = sphi 0, %s94
    %s114 = sphi 0, %s116
    %s117 = sphi 0, %s114
    %s118 = sphi 0, %s117
    %s134 = sphi 0, %s118
  $region4: #{bottleneck_forward.7} parent=0 // loop_header_branch
    %13 = sbr.rel (%p11) target = $region8
  $region5: #{bottleneck_forward.7} parent=0 // loop_body
    %s15 = ssub.s32 %s10, 1
    %s16 = ssub.s32 %s10, 2
    %s17 = sadd.s32 %s10, 1
    %s18 = ssub.s32 %s10, %s17
    %p19 = scmp.eq.s32.totalorder %s18, 0
    %s21 = sadd.s32 %s20, 1
    %s22 = scalar_select %p19, %s20, %s21
    %p25 = pneg %p19
    %p26 = scmp.eq.s32.totalorder %s10, 1
    %p27 = por %p25, %p26
    %p28 = scmp.ne.s32.totalorder %s20, %s23
    %p29 = scmp.eq.s32.totalorder %s10, 0
    %p30 = por %p28, %p29
    %p31 = scmp.ne.s32.totalorder %s20, %s23
    %p32 = scmp.eq.s32.totalorder %s15, 1
    %p33 = por %p31, %p32
    %p34 = scmp.ne.s32.totalorder %s23, %s24
    %p35 = scmp.eq.s32.totalorder %s15, 0
    %p36 = por %p34, %p35
    %p37 = scmp.ne.s32.totalorder %s23, %s24
    %p38 = scmp.eq.s32.totalorder %s16, 1
    %p39 = por %p37, %p38
    %p41 = scmp.ne.s32.totalorder %s24, %s40
    %p42 = scmp.eq.s32.totalorder %s16, 0
    %p43 = por %p41, %p42
    %s44 = ssub.s32 %s10, %s17
    %p45 = scmp.eq.s32.totalorder %s44, 0
    %s47 = sadd.s32 %s46, 1
    %s48 = scalar_select %p45, %s46, %s47
    %p51 = pneg %p45
    %p52 = scmp.eq.s32.totalorder %s10, 1
    %p53 = por %p51, %p52
    %p54 = scmp.ne.s32.totalorder %s46, %s49
    %p55 = scmp.eq.s32.totalorder %s10, 0
    %p56 = por %p54, %p55
    %p57 = scmp.ne.s32.totalorder %s46, %s49
    %p58 = scmp.eq.s32.totalorder %s15, 1
    %p59 = por %p57, %p58
    %p60 = scmp.ne.s32.totalorder %s49, %s50
    %p61 = scmp.eq.s32.totalorder %s15, 0
    %p62 = por %p60, %p61
    %p63 = scmp.ne.s32.totalorder %s49, %s50
    %p64 = scmp.eq.s32.totalorder %s16, 1
    %p65 = por %p63, %p64
    %p67 = scmp.ne.s32.totalorder %s50, %s66
    %p68 = scmp.eq.s32.totalorder %s16, 0
    %p69 = por %p67, %p68
    %s71 = sadd.s32 %s70, 1
    %p74 = scmp.eq.s32.totalorder %s10, 1
    %p75 = scmp.ne.s32.totalorder %s70, %s72
    %p76 = scmp.eq.s32.totalorder %s10, 0
    %p77 = por %p75, %p76
    %p78 = scmp.ne.s32.totalorder %s70, %s72
    %p79 = scmp.eq.s32.totalorder %s15, 1
    %p80 = por %p78, %p79
    %p81 = scmp.ne.s32.totalorder %s72, %s73
    %p82 = scmp.eq.s32.totalorder %s15, 0
    %p83 = por %p81, %p82
    %p84 = scmp.ne.s32.totalorder %s72, %s73
    %p85 = scmp.eq.s32.totalorder %s16, 1
    %p86 = por %p84, %p85
    %p88 = scmp.ne.s32.totalorder %s73, %s87
    %p89 = scmp.eq.s32.totalorder %s16, 0
    %p90 = por %p88, %p89
    %s92 = sadd.s32 %s91, 1
    %p95 = scmp.eq.s32.totalorder %s10, 1
    %p96 = scmp.ne.s32.totalorder %s91, %s93
    %p97 = scmp.eq.s32.totalorder %s10, 0
    %p98 = por %p96, %p97
    %p99 = scmp.ne.s32.totalorder %s91, %s93
    %p100 = scmp.eq.s32.totalorder %s15, 1
    %p101 = por %p99, %p100
    %p102 = scmp.ne.s32.totalorder %s93, %s94
    %p103 = scmp.eq.s32.totalorder %s15, 0
    %p104 = por %p102, %p103
    %p105 = scmp.ne.s32.totalorder %s93, %s94
    %p106 = scmp.eq.s32.totalorder %s16, 1
    %p107 = por %p105, %p106
    %p109 = scmp.ne.s32.totalorder %s94, %s108
    %p110 = scmp.eq.s32.totalorder %s16, 0
    %p111 = por %p109, %p110
    %s112 = ssub.s32 %s10, %s17
    %p113 = scmp.eq.s32.totalorder %s112, 0
    %s115 = sadd.s32 %s114, 1
    %s116 = scalar_select %p113, %s114, %s115
    %p119 = pneg %p113
    %p120 = scmp.eq.s32.totalorder %s10, 1
    %p121 = por %p119, %p120
    %p122 = scmp.ne.s32.totalorder %s114, %s117
    %p123 = scmp.eq.s32.totalorder %s10, 0
    %p124 = por %p122, %p123
    %p125 = scmp.ne.s32.totalorder %s114, %s117
    %p126 = scmp.eq.s32.totalorder %s15, 1
    %p127 = por %p125, %p126
    %p128 = scmp.ne.s32.totalorder %s117, %s118
    %p129 = scmp.eq.s32.totalorder %s15, 0
    %p130 = por %p128, %p129
    %p131 = scmp.ne.s32.totalorder %s117, %s118
    %p132 = scmp.eq.s32.totalorder %s16, 1
    %p133 = por %p131, %p132
    %p135 = scmp.ne.s32.totalorder %s118, %s134
    %p136 = scmp.eq.s32.totalorder %s16, 0
    %p137 = por %p135, %p136
    %p138 = scmp.le.s32.totalorder 1, %s10
    %p139 = scmp.lt.s32.totalorder %s10, 3
    %p140 = pnand %p138, %p139
    %p141 = pneg %p140
    // Predicated region
    $region9: #{bottleneck_forward.7} parent=5 // pred_check
      _
    $region10: #{bottleneck_forward.7} parent=5 // pred_check_branch
      %143 = sbr.rel (%p140) target = $region12
    $region11: #{bottleneck_forward.7} parent=5 // pred_region
      %s144 = ssub.s32 %s10, 1
      // Predicated region
      $region13: #{bottleneck_forward.7} parent=11 // pred_check
        %p145 = pneg %p83
      $region14: #{bottleneck_forward.7} parent=11 // pred_check_branch
        %147 = sbr.rel (%p145) target = $region16
      $region15: #{bottleneck_forward.7} parent=11 // pred_region
        _
      $region16: #{bottleneck_forward.7} parent=11 // pred_fallthru
        _
      // Predicated region
      $region17: #{bottleneck_forward.7} parent=11 // pred_check
        %p148 = pneg %p104
      $region18: #{bottleneck_forward.7} parent=11 // pred_check_branch
        %150 = sbr.rel (%p148) target = $region20
      $region19: #{bottleneck_forward.7} parent=11 // pred_region
        _
      $region20: #{bottleneck_forward.7} parent=11 // pred_fallthru
        _
    $region12: #{bottleneck_forward.7} parent=5 // pred_fallthru
      _
    %p151 = scmp.lt.s32.totalorder %s10, 2
    // Predicated region
    $region21: #{bottleneck_forward.7} parent=5 // pred_check
      %p152 = pneg %p151
    $region22: #{bottleneck_forward.7} parent=5 // pred_check_branch
      %154 = sbr.rel (%p152) target = $region24
    $region23: #{bottleneck_forward.7} parent=5 // pred_region
      // Predicated region
      $region25: #{bottleneck_forward.7} parent=23 // pred_check
        %p155 = pneg %p30
      $region26: #{bottleneck_forward.7} parent=23 // pred_check_branch
        %157 = sbr.rel (%p155) target = $region28
      $region27: #{bottleneck_forward.7} parent=23 // pred_region
        %s158 = smul.u32 32, %s10
        %p159 = scmp.lt.s32.totalorder %s158, 63
        %s160 = scalar_select %p159, %s158, 63
        %s161 = smul.addr %s160, 4
        %s162 = scalar_lea.vmem %s0, %s161
        %s163 = smul.u32 32, %s10
      $region28: #{bottleneck_forward.7} parent=23 // pred_fallthru
        _
      // Predicated region
      $region29: #{bottleneck_forward.7} parent=23 // pred_check
        %p164 = pneg %p56
      $region30: #{bottleneck_forward.7} parent=23 // pred_check_branch
        %166 = sbr.rel (%p164) target = $region32
      $region31: #{bottleneck_forward.7} parent=23 // pred_region
        %s167 = smul.u32 32, %s10
        %p168 = scmp.lt.s32.totalorder %s167, 63
        %s169 = scalar_select %p168, %s167, 63
        %s170 = smul.addr %s169, 4
        %s171 = scalar_lea.vmem %s1, %s170
        %s172 = smul.u32 32, %s10
      $region32: #{bottleneck_forward.7} parent=23 // pred_fallthru
        _
    $region24: #{bottleneck_forward.7} parent=5 // pred_fallthru
      _
    %p173 = scmp.le.s32.totalorder 1, %s10
    %p174 = scmp.lt.s32.totalorder %s10, 3
    %p175 = pnand %p173, %p174
    %p176 = pneg %p175
    // Predicated region
    $region33: #{bottleneck_forward.7} parent=5 // pred_check
      _
    $region34: #{bottleneck_forward.7} parent=5 // pred_check_branch
      %178 = sbr.rel (%p175) target = $region36
    $region35: #{bottleneck_forward.7} parent=5 // pred_region
      %s179 = ssub.s32 %s10, 1
      %s180 = smul.u32 32, %s15
      %p181 = scmp.lt.s32.totalorder %s180, 63
      %s182 = scalar_select %p181, %s180, 63
      %s183 = smul.addr %s182, 4
      %s184 = scalar_lea.vmem %s0, %s183
      %p185 = pneg %p36
      %p186 = pneg %p33
      %s187 = smul.u32 32, %s15
      %p188 = scmp.lt.s32.totalorder %s187, 63
      %s189 = scalar_select %p188, %s187, 63
      %s190 = smul.addr %s189, 4
      %s191 = scalar_lea.vmem %s1, %s190
      %p192 = pneg %p62
      %p193 = pneg %p59
      %p194 = pneg %p83
      %p195 = pneg %p80
      %p196 = pneg %p104
      %p197 = pneg %p101
      %p198 = pneg %p130
      %p199 = pneg %p127
      %s200 = smul.u32 32, %s15
      %p201 = scmp.lt.s32.totalorder %s200, 63
      %s202 = scalar_select %p201, %s200, 63
      %s203 = smul.addr %s202, 8
      %s204 = scalar_lea.vmem %s4, %s203
      %s205 = smul.u32 32, %s15
      %p206 = scmp.lt.s32.totalorder %s205, 63
      %s207 = scalar_select %p206, %s205, 63
      %s208 = smul.addr %s207, 4
      %s209 = scalar_lea.vmem %s0, %s208
      %s210 = smul.u32 32, %s15
      %s211 = smul.u32 32, %s15
      %p212 = scmp.lt.s32.totalorder %s211, 63
      %s213 = scalar_select %p212, %s211, 63
      %s214 = smul.addr %s213, 4
      %s215 = scalar_lea.vmem %s1, %s214
      %s216 = smul.u32 32, %s15
      %s217 = smul.u32 32, %s15
      %p218 = scmp.lt.s32.totalorder %s217, 63
      %s219 = scalar_select %p218, %s217, 63
      %s220 = smul.addr %s219, 8
      %s221 = scalar_lea.vmem %s4, %s220
      %s222 = smul.u32 32, %s15
      %v223 = vld [vmem:[%s209] sm:$0xf]
      %v224 = vld [vmem:[%s209 + $0x4] sm:$0xf]
      %v225 = vld [vmem:[%s209 + $0x8] sm:$0xf]
      %v226 = vld [vmem:[%s209 + $0xc] sm:$0xf]
      %v227 = vld [vmem:[%s209 + $0x10] sm:$0xf]
      %v228 = vld [vmem:[%s209 + $0x14] sm:$0xf]
      %v229 = vld [vmem:[%s209 + $0x18] sm:$0xf]
      %v230 = vld [vmem:[%s209 + $0x1c] sm:$0xf]
      %v231 = vld [vmem:[%s209 + $0x20] sm:$0xf]
      %v232 = vld [vmem:[%s209 + $0x24] sm:$0xf]
      %v233 = vld [vmem:[%s209 + $0x28] sm:$0xf]
      %v234 = vld [vmem:[%s209 + $0x2c] sm:$0xf]
      %v235 = vld [vmem:[%s209 + $0x30] sm:$0xf]
      %v236 = vld [vmem:[%s209 + $0x34] sm:$0xf]
      %v237 = vld [vmem:[%s209 + $0x38] sm:$0xf]
      %v238 = vld [vmem:[%s209 + $0x3c] sm:$0xf]
      %v239 = vld [vmem:[%s209 + $0x40] sm:$0xf]
      %v240 = vld [vmem:[%s209 + $0x44] sm:$0xf]
      %v241 = vld [vmem:[%s209 + $0x48] sm:$0xf]
      %v242 = vld [vmem:[%s209 + $0x4c] sm:$0xf]
      %v243 = vld [vmem:[%s209 + $0x50] sm:$0xf]
      %v244 = vld [vmem:[%s209 + $0x54] sm:$0xf]
      %v245 = vld [vmem:[%s209 + $0x58] sm:$0xf]
      %v246 = vld [vmem:[%s209 + $0x5c] sm:$0xf]
      %v247 = vld [vmem:[%s209 + $0x60] sm:$0xf]
      %v248 = vld [vmem:[%s209 + $0x64] sm:$0xf]
      %v249 = vld [vmem:[%s209 + $0x68] sm:$0xf]
      %v250 = vld [vmem:[%s209 + $0x6c] sm:$0xf]
      %v251 = vld [vmem:[%s209 + $0x70] sm:$0xf]
      %v252 = vld [vmem:[%s209 + $0x74] sm:$0xf]
      %v253 = vld [vmem:[%s209 + $0x78] sm:$0xf]
      %v254 = vld [vmem:[%s209 + $0x7c] sm:$0xf]
      %v255 = vunpack.c.l.bf16 %v223
      %v256 = vunpack.c.l.bf16 %v224
      %v257 = vunpack.c.l.bf16 %v225
      %v258 = vunpack.c.l.bf16 %v226
      %v259 = vunpack.c.l.bf16 %v227
      %v260 = vunpack.c.l.bf16 %v228
      %v261 = vunpack.c.l.bf16 %v229
      %v262 = vunpack.c.l.bf16 %v230
      %v263 = vunpack.c.l.bf16 %v231
      %v264 = vunpack.c.l.bf16 %v232
      %v265 = vunpack.c.l.bf16 %v233
      %v266 = vunpack.c.l.bf16 %v234
      %v267 = vunpack.c.l.bf16 %v235
      %v268 = vunpack.c.l.bf16 %v236
      %v269 = vunpack.c.l.bf16 %v237
      %v270 = vunpack.c.l.bf16 %v238
      %v271 = vunpack.c.l.bf16 %v239
      %v272 = vunpack.c.l.bf16 %v240
      %v273 = vunpack.c.l.bf16 %v241
      %v274 = vunpack.c.l.bf16 %v242
      %v275 = vunpack.c.l.bf16 %v243
      %v276 = vunpack.c.l.bf16 %v244
      %v277 = vunpack.c.l.bf16 %v245
      %v278 = vunpack.c.l.bf16 %v246
      %v279 = vunpack.c.l.bf16 %v247
      %v280 = vunpack.c.l.bf16 %v248
      %v281 = vunpack.c.l.bf16 %v249
      %v282 = vunpack.c.l.bf16 %v250
      %v283 = vunpack.c.l.bf16 %v251
      %v284 = vunpack.c.l.bf16 %v252
      %v285 = vunpack.c.l.bf16 %v253
      %v286 = vunpack.c.l.bf16 %v254
      %v287 = vld [vmem:[%s2] sm:$0x1]
      %v289 = vlaneseq
      %v290 = vshrl.u32 %v289, 7
      %v291 = vsub.s32 0, %v290
      %v292 = vrot.slane %v287, %v291
      %v294 = vmul.f32 %v255, %v292
      %v295 = vmul.f32 %v256, %v292
      %v296 = vmul.f32 %v257, %v292
      %v297 = vmul.f32 %v258, %v292
      %v298 = vmul.f32 %v259, %v292
      %v299 = vmul.f32 %v260, %v292
      %v300 = vmul.f32 %v261, %v292
      %v301 = vmul.f32 %v262, %v292
      %v302 = vmul.f32 %v263, %v292
      %v303 = vmul.f32 %v264, %v292
      %v304 = vmul.f32 %v265, %v292
      %v305 = vmul.f32 %v266, %v292
      %v306 = vmul.f32 %v267, %v292
      %v307 = vmul.f32 %v268, %v292
      %v308 = vmul.f32 %v269, %v292
      %v309 = vmul.f32 %v270, %v292
      %v310 = vmul.f32 %v271, %v292
      %v311 = vmul.f32 %v272, %v292
      %v312 = vmul.f32 %v273, %v292
      %v313 = vmul.f32 %v274, %v292
      %v314 = vmul.f32 %v275, %v292
      %v315 = vmul.f32 %v276, %v292
      %v316 = vmul.f32 %v277, %v292
      %v317 = vmul.f32 %v278, %v292
      %v318 = vmul.f32 %v279, %v292
      %v319 = vmul.f32 %v280, %v292
      %v320 = vmul.f32 %v281, %v292
      %v321 = vmul.f32 %v282, %v292
      %v322 = vmul.f32 %v283, %v292
      %v323 = vmul.f32 %v284, %v292
      %v324 = vmul.f32 %v285, %v292
      %v325 = vmul.f32 %v286, %v292
      %v326 = vld [vmem:[%s3] sm:$0x1]
      %v328 = vlaneseq
      %v329 = vshrl.u32 %v328, 7
      %v330 = vsub.s32 0, %v329
      %v331 = vrot.slane %v326, %v330
      %v333 = vadd.f32 %v294, %v331
      %v334 = vadd.f32 %v295, %v331
      %v335 = vadd.f32 %v296, %v331
      %v336 = vadd.f32 %v297, %v331
      %v337 = vadd.f32 %v298, %v331
      %v338 = vadd.f32 %v299, %v331
      %v339 = vadd.f32 %v300, %v331
      %v340 = vadd.f32 %v301, %v331
      %v341 = vadd.f32 %v302, %v331
      %v342 = vadd.f32 %v303, %v331
      %v343 = vadd.f32 %v304, %v331
      %v344 = vadd.f32 %v305, %v331
      %v345 = vadd.f32 %v306, %v331
      %v346 = vadd.f32 %v307, %v331
      %v347 = vadd.f32 %v308, %v331
      %v348 = vadd.f32 %v309, %v331
      %v349 = vadd.f32 %v310, %v331
      %v350 = vadd.f32 %v311, %v331
      %v351 = vadd.f32 %v312, %v331
      %v352 = vadd.f32 %v313, %v331
      %v353 = vadd.f32 %v314, %v331
      %v354 = vadd.f32 %v315, %v331
      %v355 = vadd.f32 %v316, %v331
      %v356 = vadd.f32 %v317, %v331
      %v357 = vadd.f32 %v318, %v331
      %v358 = vadd.f32 %v319, %v331
      %v359 = vadd.f32 %v320, %v331
      %v360 = vadd.f32 %v321, %v331
      %v361 = vadd.f32 %v322, %v331
      %v362 = vadd.f32 %v323, %v331
      %v363 = vadd.f32 %v324, %v331
      %v364 = vadd.f32 %v325, %v331
      %v365 = vld [vmem:[%s215] sm:$0xf]
      %v366 = vld [vmem:[%s215 + $0x4] sm:$0xf]
      %v367 = vld [vmem:[%s215 + $0x8] sm:$0xf]
      %v368 = vld [vmem:[%s215 + $0xc] sm:$0xf]
      %v369 = vld [vmem:[%s215 + $0x10] sm:$0xf]
      %v370 = vld [vmem:[%s215 + $0x14] sm:$0xf]
      %v371 = vld [vmem:[%s215 + $0x18] sm:$0xf]
      %v372 = vld [vmem:[%s215 + $0x1c] sm:$0xf]
      %v373 = vld [vmem:[%s215 + $0x20] sm:$0xf]
      %v374 = vld [vmem:[%s215 + $0x24] sm:$0xf]
      %v375 = vld [vmem:[%s215 + $0x28] sm:$0xf]
      %v376 = vld [vmem:[%s215 + $0x2c] sm:$0xf]
      %v377 = vld [vmem:[%s215 + $0x30] sm:$0xf]
      %v378 = vld [vmem:[%s215 + $0x34] sm:$0xf]
      %v379 = vld [vmem:[%s215 + $0x38] sm:$0xf]
      %v380 = vld [vmem:[%s215 + $0x3c] sm:$0xf]
      %v381 = vld [vmem:[%s215 + $0x40] sm:$0xf]
      %v382 = vld [vmem:[%s215 + $0x44] sm:$0xf]
      %v383 = vld [vmem:[%s215 + $0x48] sm:$0xf]
      %v384 = vld [vmem:[%s215 + $0x4c] sm:$0xf]
      %v385 = vld [vmem:[%s215 + $0x50] sm:$0xf]
      %v386 = vld [vmem:[%s215 + $0x54] sm:$0xf]
      %v387 = vld [vmem:[%s215 + $0x58] sm:$0xf]
      %v388 = vld [vmem:[%s215 + $0x5c] sm:$0xf]
      %v389 = vld [vmem:[%s215 + $0x60] sm:$0xf]
      %v390 = vld [vmem:[%s215 + $0x64] sm:$0xf]
      %v391 = vld [vmem:[%s215 + $0x68] sm:$0xf]
      %v392 = vld [vmem:[%s215 + $0x6c] sm:$0xf]
      %v393 = vld [vmem:[%s215 + $0x70] sm:$0xf]
      %v394 = vld [vmem:[%s215 + $0x74] sm:$0xf]
      %v395 = vld [vmem:[%s215 + $0x78] sm:$0xf]
      %v396 = vld [vmem:[%s215 + $0x7c] sm:$0xf]
      %v397 = vunpack.c.l.bf16 %v365
      %v398 = vunpack.c.l.bf16 %v366
      %v399 = vunpack.c.l.bf16 %v367
      %v400 = vunpack.c.l.bf16 %v368
      %v401 = vunpack.c.l.bf16 %v369
      %v402 = vunpack.c.l.bf16 %v370
      %v403 = vunpack.c.l.bf16 %v371
      %v404 = vunpack.c.l.bf16 %v372
      %v405 = vunpack.c.l.bf16 %v373
      %v406 = vunpack.c.l.bf16 %v374
      %v407 = vunpack.c.l.bf16 %v375
      %v408 = vunpack.c.l.bf16 %v376
      %v409 = vunpack.c.l.bf16 %v377
      %v410 = vunpack.c.l.bf16 %v378
      %v411 = vunpack.c.l.bf16 %v379
      %v412 = vunpack.c.l.bf16 %v380
      %v413 = vunpack.c.l.bf16 %v381
      %v414 = vunpack.c.l.bf16 %v382
      %v415 = vunpack.c.l.bf16 %v383
      %v416 = vunpack.c.l.bf16 %v384
      %v417 = vunpack.c.l.bf16 %v385
      %v418 = vunpack.c.l.bf16 %v386
      %v419 = vunpack.c.l.bf16 %v387
      %v420 = vunpack.c.l.bf16 %v388
      %v421 = vunpack.c.l.bf16 %v389
      %v422 = vunpack.c.l.bf16 %v390
      %v423 = vunpack.c.l.bf16 %v391
      %v424 = vunpack.c.l.bf16 %v392
      %v425 = vunpack.c.l.bf16 %v393
      %v426 = vunpack.c.l.bf16 %v394
      %v427 = vunpack.c.l.bf16 %v395
      %v428 = vunpack.c.l.bf16 %v396
      %v429 = vadd.f32 %v333, %v397
      %v430 = vadd.f32 %v334, %v398
      %v431 = vadd.f32 %v335, %v399
      %v432 = vadd.f32 %v336, %v400
      %v433 = vadd.f32 %v337, %v401
      %v434 = vadd.f32 %v338, %v402
      %v435 = vadd.f32 %v339, %v403
      %v436 = vadd.f32 %v340, %v404
      %v437 = vadd.f32 %v341, %v405
      %v438 = vadd.f32 %v342, %v406
      %v439 = vadd.f32 %v343, %v407
      %v440 = vadd.f32 %v344, %v408
      %v441 = vadd.f32 %v345, %v409
      %v442 = vadd.f32 %v346, %v410
      %v443 = vadd.f32 %v347, %v411
      %v444 = vadd.f32 %v348, %v412
      %v445 = vadd.f32 %v349, %v413
      %v446 = vadd.f32 %v350, %v414
      %v447 = vadd.f32 %v351, %v415
      %v448 = vadd.f32 %v352, %v416
      %v449 = vadd.f32 %v353, %v417
      %v450 = vadd.f32 %v354, %v418
      %v451 = vadd.f32 %v355, %v419
      %v452 = vadd.f32 %v356, %v420
      %v453 = vadd.f32 %v357, %v421
      %v454 = vadd.f32 %v358, %v422
      %v455 = vadd.f32 %v359, %v423
      %v456 = vadd.f32 %v360, %v424
      %v457 = vadd.f32 %v361, %v425
      %v458 = vadd.f32 %v362, %v426
      %v459 = vadd.f32 %v363, %v427
      %v460 = vadd.f32 %v364, %v428
      %v461 = vmax.f32 %v429, 0.0
      %v462 = vmax.f32 %v430, 0.0
      %v463 = vmax.f32 %v431, 0.0
      %v464 = vmax.f32 %v432, 0.0
      %v465 = vmax.f32 %v433, 0.0
      %v466 = vmax.f32 %v434, 0.0
      %v467 = vmax.f32 %v435, 0.0
      %v468 = vmax.f32 %v436, 0.0
      %v469 = vmax.f32 %v437, 0.0
      %v470 = vmax.f32 %v438, 0.0
      %v471 = vmax.f32 %v439, 0.0
      %v472 = vmax.f32 %v440, 0.0
      %v473 = vmax.f32 %v441, 0.0
      %v474 = vmax.f32 %v442, 0.0
      %v475 = vmax.f32 %v443, 0.0
      %v476 = vmax.f32 %v444, 0.0
      %v477 = vmax.f32 %v445, 0.0
      %v478 = vmax.f32 %v446, 0.0
      %v479 = vmax.f32 %v447, 0.0
      %v480 = vmax.f32 %v448, 0.0
      %v481 = vmax.f32 %v449, 0.0
      %v482 = vmax.f32 %v450, 0.0
      %v483 = vmax.f32 %v451, 0.0
      %v484 = vmax.f32 %v452, 0.0
      %v485 = vmax.f32 %v453, 0.0
      %v486 = vmax.f32 %v454, 0.0
      %v487 = vmax.f32 %v455, 0.0
      %v488 = vmax.f32 %v456, 0.0
      %v489 = vmax.f32 %v457, 0.0
      %v490 = vmax.f32 %v458, 0.0
      %v491 = vmax.f32 %v459, 0.0
      %v492 = vmax.f32 %v460, 0.0
      %493 = vst [vmem:[%s221] sm:$0xff] %v461
      %494 = vst [vmem:[%s221 + $0x8] sm:$0xff] %v462
      %495 = vst [vmem:[%s221 + $0x10] sm:$0xff] %v463
      %496 = vst [vmem:[%s221 + $0x18] sm:$0xff] %v464
      %497 = vst [vmem:[%s221 + $0x20] sm:$0xff] %v465
      %498 = vst [vmem:[%s221 + $0x28] sm:$0xff] %v466
      %499 = vst [vmem:[%s221 + $0x30] sm:$0xff] %v467
      %500 = vst [vmem:[%s221 + $0x38] sm:$0xff] %v468
      %501 = vst [vmem:[%s221 + $0x40] sm:$0xff] %v469
      %502 = vst [vmem:[%s221 + $0x48] sm:$0xff] %v470
      %503 = vst [vmem:[%s221 + $0x50] sm:$0xff] %v471
      %504 = vst [vmem:[%s221 + $0x58] sm:$0xff] %v472
      %505 = vst [vmem:[%s221 + $0x60] sm:$0xff] %v473
      %506 = vst [vmem:[%s221 + $0x68] sm:$0xff] %v474
      %507 = vst [vmem:[%s221 + $0x70] sm:$0xff] %v475
      %508 = vst [vmem:[%s221 + $0x78] sm:$0xff] %v476
      %509 = vst [vmem:[%s221 + $0x80] sm:$0xff] %v477
      %510 = vst [vmem:[%s221 + $0x88] sm:$0xff] %v478
      %511 = vst [vmem:[%s221 + $0x90] sm:$0xff] %v479
      %512 = vst [vmem:[%s221 + $0x98] sm:$0xff] %v480
      %513 = vst [vmem:[%s221 + $0xa0] sm:$0xff] %v481
      %514 = vst [vmem:[%s221 + $0xa8] sm:$0xff] %v482
      %515 = vst [vmem:[%s221 + $0xb0] sm:$0xff] %v483
      %516 = vst [vmem:[%s221 + $0xb8] sm:$0xff] %v484
      %517 = vst [vmem:[%s221 + $0xc0] sm:$0xff] %v485
      %518 = vst [vmem:[%s221 + $0xc8] sm:$0xff] %v486
      %519 = vst [vmem:[%s221 + $0xd0] sm:$0xff] %v487
      %520 = vst [vmem:[%s221 + $0xd8] sm:$0xff] %v488
      %521 = vst [vmem:[%s221 + $0xe0] sm:$0xff] %v489
      %522 = vst [vmem:[%s221 + $0xe8] sm:$0xff] %v490
      %523 = vst [vmem:[%s221 + $0xf0] sm:$0xff] %v491
      %524 = vst [vmem:[%s221 + $0xf8] sm:$0xff] %v492
      %s525 = smul.u32 32, %s15
      %p526 = scmp.lt.s32.totalorder %s525, 63
      %s527 = scalar_select %p526, %s525, 63
      %s528 = smul.addr %s527, 8
      %s529 = scalar_lea.vmem %s4, %s528
      // Predicated region
      $region37: #{bottleneck_forward.7} parent=35 // pred_check
        %p530 = pneg %p127
      $region38: #{bottleneck_forward.7} parent=35 // pred_check_branch
        %532 = sbr.rel (%p530) target = $region40
      $region39: #{bottleneck_forward.7} parent=35 // pred_region
        %s533 = smul.u32 32, %s15
      $region40: #{bottleneck_forward.7} parent=35 // pred_fallthru
        _
    $region36: #{bottleneck_forward.7} parent=5 // pred_fallthru
      _
    %p534 = scmp.le.s32.totalorder 2, %s10
    // Predicated region
    $region41: #{bottleneck_forward.7} parent=5 // pred_check
      %p535 = pneg %p534
    $region42: #{bottleneck_forward.7} parent=5 // pred_check_branch
      %537 = sbr.rel (%p535) target = $region44
    $region43: #{bottleneck_forward.7} parent=5 // pred_region
      %s538 = ssub.s32 %s10, 2
      // Predicated region
      $region45: #{bottleneck_forward.7} parent=43 // pred_check
        %p539 = pneg %p133
      $region46: #{bottleneck_forward.7} parent=43 // pred_check_branch
        %541 = sbr.rel (%p539) target = $region48
      $region47: #{bottleneck_forward.7} parent=43 // pred_region
        %s542 = smul.u32 32, %s16
        %p543 = scmp.lt.s32.totalorder %s542, 63
        %s544 = scalar_select %p543, %s542, 63
        %s545 = smul.addr %s544, 8
        %s546 = scalar_lea.vmem %s4, %s545
      $region48: #{bottleneck_forward.7} parent=43 // pred_fallthru
        _
    $region44: #{bottleneck_forward.7} parent=5 // pred_fallthru
      _
  $region6: #{bottleneck_forward.7} parent=0 // loop_footer
    %s14 = sadd.s32 1, %s10
  $region7: #{bottleneck_forward.7} parent=0 // loop_footer_branch
    %9 = sbr.rel target = $region3
  $region8: #{bottleneck_forward.7} parent=0 // loop_exit
    _

// kernel: bottleneck_forward.4
$region0: #{bottleneck_forward.4}
  #allocation0 [shape = 'u32[]', space=smem, size = 0x4, offset = 0x4, fixed_abs, tag = 'smem constant byte address 0x4 - core index']
  #allocation1 [shape = 'u32[144,128]{1,0:T(1,128)}', space=vmem, size = 0x12000, scoped, tag = 'internal scratch']
  %s0 = inlined_call_operand.vmem [shape: bf16[512,128], index: 0, kind: input, shape index: {}]
  %s1 = inlined_call_operand.vmem [shape: bf16[128,128], index: 1, kind: input, shape index: {}]
  %s2 = inlined_call_operand.vmem [shape: bf16[512,128], index: 2, kind: output, shape index: {0}]
  %s3 = inlined_call_operand.vmem [shape: f32[2,2,128], index: 3, kind: output, shape index: {1}]
  %4 = xla_tuple %s2, %s3
  %s5 = sld [smem:[#allocation0]]
  $region49: #{bottleneck_forward.4} parent=0
    _
  %s7 = ssub.s32 1, %s5
  %s8 = scalar_select 0, %s7, %s5
  loop: start=0, step=1, limit=4
  $region2: #{bottleneck_forward.4} parent=0 // loop_pre_header
    _
  $region3: #{bottleneck_forward.4} parent=0 // loop_header
    %s10 = sphi 0, %s14
    %p11 = scmp.ge.s32.totalorder %s10, 4
    %s20 = sphi 0, %s22
    %s23 = sphi 0, %s20
    %s24 = sphi 0, %s23
    %s40 = sphi 0, %s24
    %s44 = sphi 0, %s44
    %s46 = sphi 0, %s44
    %s47 = sphi 0, %s46
    %s61 = sphi 0, %s47
    %s67 = sphi 0, %s69
    %s70 = sphi 0, %s67
    %s71 = sphi 0, %s70
    %s87 = sphi 0, %s71
    %s93 = sphi 0, %s95
    %s96 = sphi 0, %s93
    %s97 = sphi 0, %s96
    %s113 = sphi 0, %s97
  $region4: #{bottleneck_forward.4} parent=0 // loop_header_branch
    %13 = sbr.rel (%p11) target = $region8
  $region5: #{bottleneck_forward.4} parent=0 // loop_body
    %s15 = ssub.s32 %s10, 1
    %s16 = ssub.s32 %s10, 2
    %s17 = sadd.s32 %s10, 1
    %s18 = ssub.s32 %s10, %s17
    %p19 = scmp.eq.s32.totalorder %s18, 0
    %s21 = sadd.s32 %s20, 1
    %s22 = scalar_select %p19, %s20, %s21
    %p25 = pneg %p19
    %p26 = scmp.eq.s32.totalorder %s10, 1
    %p27 = por %p25, %p26
    %p28 = scmp.ne.s32.totalorder %s20, %s23
    %p29 = scmp.eq.s32.totalorder %s10, 0
    %p30 = por %p28, %p29
    %p31 = scmp.ne.s32.totalorder %s20, %s23
    %p32 = scmp.eq.s32.totalorder %s15, 1
    %p33 = por %p31, %p32
    %p34 = scmp.ne.s32.totalorder %s23, %s24
    %p35 = scmp.eq.s32.totalorder %s15, 0
    %p36 = por %p34, %p35
    %p37 = scmp.ne.s32.totalorder %s23, %s24
    %p38 = scmp.eq.s32.totalorder %s16, 1
    %p39 = por %p37, %p38
    %p41 = scmp.ne.s32.totalorder %s24, %s40
    %p42 = scmp.eq.s32.totalorder %s16, 0
    %p43 = por %p41, %p42
    %s45 = sadd.s32 %s44, 1
    %p48 = scmp.eq.s32.totalorder %s10, 1
    %p49 = scmp.ne.s32.totalorder %s44, %s46
    %p50 = scmp.eq.s32.totalorder %s10, 0
    %p51 = por %p49, %p50
    %p52 = scmp.ne.s32.totalorder %s44, %s46
    %p53 = scmp.eq.s32.totalorder %s15, 1
    %p54 = por %p52, %p53
    %p55 = scmp.ne.s32.totalorder %s46, %s47
    %p56 = scmp.eq.s32.totalorder %s15, 0
    %p57 = por %p55, %p56
    %p58 = scmp.ne.s32.totalorder %s46, %s47
    %p59 = scmp.eq.s32.totalorder %s16, 1
    %p60 = por %p58, %p59
    %p62 = scmp.ne.s32.totalorder %s47, %s61
    %p63 = scmp.eq.s32.totalorder %s16, 0
    %p64 = por %p62, %p63
    %s65 = ssub.s32 %s10, %s17
    %p66 = scmp.eq.s32.totalorder %s65, 0
    %s68 = sadd.s32 %s67, 1
    %s69 = scalar_select %p66, %s67, %s68
    %p72 = pneg %p66
    %p73 = scmp.eq.s32.totalorder %s10, 1
    %p74 = por %p72, %p73
    %p75 = scmp.ne.s32.totalorder %s67, %s70
    %p76 = scmp.eq.s32.totalorder %s10, 0
    %p77 = por %p75, %p76
    %p78 = scmp.ne.s32.totalorder %s67, %s70
    %p79 = scmp.eq.s32.totalorder %s15, 1
    %p80 = por %p78, %p79
    %p81 = scmp.ne.s32.totalorder %s70, %s71
    %p82 = scmp.eq.s32.totalorder %s15, 0
    %p83 = por %p81, %p82
    %p84 = scmp.ne.s32.totalorder %s70, %s71
    %p85 = scmp.eq.s32.totalorder %s16, 1
    %p86 = por %p84, %p85
    %p88 = scmp.ne.s32.totalorder %s71, %s87
    %p89 = scmp.eq.s32.totalorder %s16, 0
    %p90 = por %p88, %p89
    %s91 = ssub.s32 %s10, %s17
    %p92 = scmp.eq.s32.totalorder %s91, 0
    %s94 = sadd.s32 %s93, 1
    %s95 = scalar_select %p92, %s93, %s94
    %p98 = pneg %p92
    %p99 = scmp.eq.s32.totalorder %s10, 1
    %p100 = por %p98, %p99
    %p101 = scmp.ne.s32.totalorder %s93, %s96
    %p102 = scmp.eq.s32.totalorder %s10, 0
    %p103 = por %p101, %p102
    %p104 = scmp.ne.s32.totalorder %s93, %s96
    %p105 = scmp.eq.s32.totalorder %s15, 1
    %p106 = por %p104, %p105
    %p107 = scmp.ne.s32.totalorder %s96, %s97
    %p108 = scmp.eq.s32.totalorder %s15, 0
    %p109 = por %p107, %p108
    %p110 = scmp.ne.s32.totalorder %s96, %s97
    %p111 = scmp.eq.s32.totalorder %s16, 1
    %p112 = por %p110, %p111
    %p114 = scmp.ne.s32.totalorder %s97, %s113
    %p115 = scmp.eq.s32.totalorder %s16, 0
    %p116 = por %p114, %p115
    %p117 = scmp.le.s32.totalorder 1, %s10
    %p118 = scmp.lt.s32.totalorder %s10, 3
    %p119 = pnand %p117, %p118
    %p120 = pneg %p119
    // Predicated region
    $region9: #{bottleneck_forward.4} parent=5 // pred_check
      _
    $region10: #{bottleneck_forward.4} parent=5 // pred_check_branch
      %122 = sbr.rel (%p119) target = $region12
    $region11: #{bottleneck_forward.4} parent=5 // pred_region
      %s123 = ssub.s32 %s10, 1
      // Predicated region
      $region13: #{bottleneck_forward.4} parent=11 // pred_check
        %p124 = pneg %p57
      $region14: #{bottleneck_forward.4} parent=11 // pred_check_branch
        %126 = sbr.rel (%p124) target = $region16
      $region15: #{bottleneck_forward.4} parent=11 // pred_region
        _
      $region16: #{bottleneck_forward.4} parent=11 // pred_fallthru
        _
    $region12: #{bottleneck_forward.4} parent=5 // pred_fallthru
      _
    %p127 = scmp.lt.s32.totalorder %s10, 2
    // Predicated region
    $region17: #{bottleneck_forward.4} parent=5 // pred_check
      %p128 = pneg %p127
    $region18: #{bottleneck_forward.4} parent=5 // pred_check_branch
      %130 = sbr.rel (%p128) target = $region20
    $region19: #{bottleneck_forward.4} parent=5 // pred_region
      // Predicated region
      $region21: #{bottleneck_forward.4} parent=19 // pred_check
        %p131 = pneg %p30
      $region22: #{bottleneck_forward.4} parent=19 // pred_check_branch
        %133 = sbr.rel (%p131) target = $region24
      $region23: #{bottleneck_forward.4} parent=19 // pred_region
        %s134 = smul.u32 32, %s10
        %p135 = scmp.lt.s32.totalorder %s134, 63
        %s136 = scalar_select %p135, %s134, 63
        %s137 = smul.addr %s136, 4
        %s138 = scalar_lea.vmem %s0, %s137
        %s139 = smul.u32 32, %s10
      $region24: #{bottleneck_forward.4} parent=19 // pred_fallthru
        _
    $region20: #{bottleneck_forward.4} parent=5 // pred_fallthru
      _
    %p140 = scmp.le.s32.totalorder 1, %s10
    %p141 = scmp.lt.s32.totalorder %s10, 3
    %p142 = pnand %p140, %p141
    %p143 = pneg %p142
    // Predicated region
    $region25: #{bottleneck_forward.4} parent=5 // pred_check
      _
    $region26: #{bottleneck_forward.4} parent=5 // pred_check_branch
      %145 = sbr.rel (%p142) target = $region28
    $region27: #{bottleneck_forward.4} parent=5 // pred_region
      %s146 = ssub.s32 %s10, 1
      %s147 = smul.u32 32, %s15
      %p148 = scmp.lt.s32.totalorder %s147, 63
      %s149 = scalar_select %p148, %s147, 63
      %s150 = smul.addr %s149, 4
      %s151 = scalar_lea.vmem %s0, %s150
      %p152 = pneg %p36
      %p153 = pneg %p33
      %p154 = pneg %p57
      %p155 = pneg %p54
      %p156 = pneg %p83
      %p157 = pneg %p80
      %s158 = smul.u32 32, %s15
      %p159 = scmp.lt.s32.totalorder %s158, 63
      %s160 = scalar_select %p159, %s158, 63
      %s161 = smul.addr %s160, 4
      %s162 = scalar_lea.vmem %s2, %s161
      %p163 = pneg %p109
      %p164 = pneg %p106
      %p165 = scmp.lt.s32.totalorder %s15, 1
      %s166 = scalar_select %p165, %s15, 1
      %s167 = smul.addr %s166, 2
      %s168 = scalar_lea.vmem %s3, %s167
      %s169 = smul.u32 32, %s15
      %p170 = scmp.lt.s32.totalorder %s169, 63
      %s171 = scalar_select %p170, %s169, 63
      %s172 = smul.addr %s171, 4
      %s173 = scalar_lea.vmem %s0, %s172
      %s174 = smul.u32 32, %s15
      %s175 = smul.u32 32, %s15
      %p176 = scmp.lt.s32.totalorder %s175, 63
      %s177 = scalar_select %p176, %s175, 63
      %s178 = smul.addr %s177, 4
      %s179 = scalar_lea.vmem %s2, %s178
      %s180 = smul.u32 32, %s15
      %p181 = scmp.lt.s32.totalorder %s15, 1
      %s182 = scalar_select %p181, %s15, 1
      %s183 = smul.addr %s182, 2
      %s184 = scalar_lea.vmem %s3, %s183
      %v186 = vld [vmem:[%s173] sm:$0xf]
      %v187 = vld [vmem:[%s173 + $0x4] sm:$0xf]
      %v188 = vld [vmem:[%s173 + $0x8] sm:$0xf]
      %v189 = vld [vmem:[%s173 + $0xc] sm:$0xf]
      %v190 = vld [vmem:[%s173 + $0x10] sm:$0xf]
      %v191 = vld [vmem:[%s173 + $0x14] sm:$0xf]
      %v192 = vld [vmem:[%s173 + $0x18] sm:$0xf]
      %v193 = vld [vmem:[%s173 + $0x1c] sm:$0xf]
      %v194 = vld [vmem:[%s173 + $0x20] sm:$0xf]
      %v195 = vld [vmem:[%s173 + $0x24] sm:$0xf]
      %v196 = vld [vmem:[%s173 + $0x28] sm:$0xf]
      %v197 = vld [vmem:[%s173 + $0x2c] sm:$0xf]
      %v198 = vld [vmem:[%s173 + $0x30] sm:$0xf]
      %v199 = vld [vmem:[%s173 + $0x34] sm:$0xf]
      %v200 = vld [vmem:[%s173 + $0x38] sm:$0xf]
      %v201 = vld [vmem:[%s173 + $0x3c] sm:$0xf]
      %v202 = vld [vmem:[%s173 + $0x40] sm:$0xf]
      %v203 = vld [vmem:[%s173 + $0x44] sm:$0xf]
      %v204 = vld [vmem:[%s173 + $0x48] sm:$0xf]
      %v205 = vld [vmem:[%s173 + $0x4c] sm:$0xf]
      %v206 = vld [vmem:[%s173 + $0x50] sm:$0xf]
      %v207 = vld [vmem:[%s173 + $0x54] sm:$0xf]
      %v208 = vld [vmem:[%s173 + $0x58] sm:$0xf]
      %v209 = vld [vmem:[%s173 + $0x5c] sm:$0xf]
      %v210 = vld [vmem:[%s173 + $0x60] sm:$0xf]
      %v211 = vld [vmem:[%s173 + $0x64] sm:$0xf]
      %v212 = vld [vmem:[%s173 + $0x68] sm:$0xf]
      %v213 = vld [vmem:[%s173 + $0x6c] sm:$0xf]
      %v214 = vld [vmem:[%s173 + $0x70] sm:$0xf]
      %v215 = vld [vmem:[%s173 + $0x74] sm:$0xf]
      %v216 = vld [vmem:[%s173 + $0x78] sm:$0xf]
      %v217 = vld [vmem:[%s173 + $0x7c] sm:$0xf]
      %v218 = vld [vmem:[%s1] sm:$0xf]
      %v219 = vld [vmem:[%s1 + $0x4] sm:$0xf]
      %v220 = vld [vmem:[%s1 + $0x8] sm:$0xf]
      %v221 = vld [vmem:[%s1 + $0xc] sm:$0xf]
      %v222 = vld [vmem:[%s1 + $0x10] sm:$0xf]
      %v223 = vld [vmem:[%s1 + $0x14] sm:$0xf]
      %v224 = vld [vmem:[%s1 + $0x18] sm:$0xf]
      %v225 = vld [vmem:[%s1 + $0x1c] sm:$0xf]
      %v226 = vld [vmem:[%s1 + $0x20] sm:$0xf]
      %v227 = vld [vmem:[%s1 + $0x24] sm:$0xf]
      %v228 = vld [vmem:[%s1 + $0x28] sm:$0xf]
      %v229 = vld [vmem:[%s1 + $0x2c] sm:$0xf]
      %v230 = vld [vmem:[%s1 + $0x30] sm:$0xf]
      %v231 = vld [vmem:[%s1 + $0x34] sm:$0xf]
      %v232 = vld [vmem:[%s1 + $0x38] sm:$0xf]
      %v233 = vld [vmem:[%s1 + $0x3c] sm:$0xf]
      %v266 = vunpack.c.l.b16 %v186
      %v267 = vunpack.c.l.b16 %v187
      %v268 = vunpack.c.l.b16 %v188
      %v269 = vunpack.c.l.b16 %v189
      %v270 = vunpack.c.l.b16 %v190
      %v271 = vunpack.c.l.b16 %v191
      %v272 = vunpack.c.l.b16 %v192
      %v273 = vunpack.c.l.b16 %v193
      %v274 = vunpack.c.l.b16 %v194
      %v275 = vunpack.c.l.b16 %v195
      %v276 = vunpack.c.l.b16 %v196
      %v277 = vunpack.c.l.b16 %v197
      %v278 = vunpack.c.l.b16 %v198
      %v279 = vunpack.c.l.b16 %v199
      %v280 = vunpack.c.l.b16 %v200
      %v281 = vunpack.c.l.b16 %v201
      %v282 = vunpack.c.l.b16 %v202
      %v283 = vunpack.c.l.b16 %v203
      %v284 = vunpack.c.l.b16 %v204
      %v285 = vunpack.c.l.b16 %v205
      %v286 = vunpack.c.l.b16 %v206
      %v287 = vunpack.c.l.b16 %v207
      %v288 = vunpack.c.l.b16 %v208
      %v289 = vunpack.c.l.b16 %v209
      %v290 = vunpack.c.l.b16 %v210
      %v291 = vunpack.c.l.b16 %v211
      %v292 = vunpack.c.l.b16 %v212
      %v293 = vunpack.c.l.b16 %v213
      %v294 = vunpack.c.l.b16 %v214
      %v295 = vunpack.c.l.b16 %v215
      %v296 = vunpack.c.l.b16 %v216
      %v297 = vunpack.c.l.b16 %v217
      %v298 = vpack.c.b16 %v267, %v266
      %v299 = vpack.c.b16 %v269, %v268
      %v300 = vpack.c.b16 %v271, %v270
      %v301 = vpack.c.b16 %v273, %v272
      %v302 = vpack.c.b16 %v275, %v274
      %v303 = vpack.c.b16 %v277, %v276
      %v304 = vpack.c.b16 %v279, %v278
      %v305 = vpack.c.b16 %v281, %v280
      %v306 = vpack.c.b16 %v283, %v282
      %v307 = vpack.c.b16 %v285, %v284
      %v308 = vpack.c.b16 %v287, %v286
      %v309 = vpack.c.b16 %v289, %v288
      %v310 = vpack.c.b16 %v291, %v290
      %v311 = vpack.c.b16 %v293, %v292
      %v312 = vpack.c.b16 %v295, %v294
      %v313 = vpack.c.b16 %v297, %v296
      %v346 = vunpack.c.l.b16 %v218
      %v347 = vunpack.c.l.b16 %v219
      %v348 = vunpack.c.l.b16 %v220
      %v349 = vunpack.c.l.b16 %v221
      %v350 = vunpack.c.l.b16 %v222
      %v351 = vunpack.c.l.b16 %v223
      %v352 = vunpack.c.l.b16 %v224
      %v353 = vunpack.c.l.b16 %v225
      %v354 = vunpack.c.l.b16 %v226
      %v355 = vunpack.c.l.b16 %v227
      %v356 = vunpack.c.l.b16 %v228
      %v357 = vunpack.c.l.b16 %v229
      %v358 = vunpack.c.l.b16 %v230
      %v359 = vunpack.c.l.b16 %v231
      %v360 = vunpack.c.l.b16 %v232
      %v361 = vunpack.c.l.b16 %v233
      %v362 = vpack.c.b16 %v347, %v346
      %v363 = vpack.c.b16 %v349, %v348
      %v364 = vpack.c.b16 %v351, %v350
      %v365 = vpack.c.b16 %v353, %v352
      %v366 = vpack.c.b16 %v355, %v354
      %v367 = vpack.c.b16 %v357, %v356
      %v368 = vpack.c.b16 %v359, %v358
      %v369 = vpack.c.b16 %v361, %v360
      %378 = vmatprep.subr.bf16.mxu0 0
      %379 = vmatpush1.bf16.msra.mxu0 %v362
      %380 = vmatprep.subr.bf16.mxu0 0
      %381 = vmatpush1.bf16.msra.mxu0 %v363
      %382 = vmatprep.subr.bf16.mxu0 0
      %383 = vmatpush1.bf16.msra.mxu0 %v364
      %384 = vmatprep.subr.bf16.mxu0 0
      %385 = vmatpush1.bf16.msra.mxu0 %v365
      %386 = vmatprep.subr.bf16.mxu0 0
      %387 = vmatpush1.bf16.msra.mxu0 %v366
      %388 = vmatprep.subr.bf16.mxu0 0
      %389 = vmatpush1.bf16.msra.mxu0 %v367
      %390 = vmatprep.subr.bf16.mxu0 0
      %391 = vmatpush1.bf16.msra.mxu0 %v368
      %392 = vmatprep.subr.bf16.mxu0 0
      %393 = vmatpush1.bf16.msra.mxu0 %v369
      %394 = vmatprep.subr.bf16.mxu0 0
      %395 = vmatpush1.bf16.msra.mxu0 0
      %396 = vmatprep.subr.bf16.mxu0 0
      %397 = vmatpush1.bf16.msra.mxu0 0
      %398 = vmatprep.subr.bf16.mxu0 0
      %399 = vmatpush1.bf16.msra.mxu0 0
      %400 = vmatprep.subr.bf16.mxu0 0
      %401 = vmatpush1.bf16.msra.mxu0 0
      %402 = vmatprep.subr.bf16.mxu0 0
      %403 = vmatpush1.bf16.msra.mxu0 0
      %404 = vmatprep.subr.bf16.mxu0 0
      %405 = vmatpush1.bf16.msra.mxu0 0
      %406 = vmatprep.subr.bf16.mxu0 0
      %407 = vmatpush1.bf16.msra.mxu0 0
      %408 = vmatprep.subr.bf16.mxu0 0
      %409 = vmatpush1.bf16.msra.mxu0 0
      %410 = vmatprep.mubr.bf16.mxu0 0
      %411 = vmatmul.mubr.bf16.gmra.mrb[0].mxu0 %v298
      %v412 = vpop.f32.mrb[0].mxu0
      %v413 = vadd.f32 0.0, %v412
      %v414 = vpop.f32.mrb[0].mxu0
      %v415 = vpop.f32.mrb[0].mxu0
      %v416 = vadd.f32 0.0, %v415
      %v417 = vpop.f32.mrb[0].mxu0
      %418 = vmatprep.mubr.bf16.mxu0 0
      %419 = vmatmul.mubr.bf16.gmra.mrb[0].mxu0 %v299
      %v420 = vpop.f32.mrb[0].mxu0
      %v421 = vadd.f32 0.0, %v420
      %v422 = vpop.f32.mrb[0].mxu0
      %v423 = vpop.f32.mrb[0].mxu0
      %v424 = vadd.f32 0.0, %v423
      %v425 = vpop.f32.mrb[0].mxu0
      %426 = vmatprep.mubr.bf16.mxu0 0
      %427 = vmatmul.mubr.bf16.gmra.mrb[0].mxu0 %v300
      %v428 = vpop.f32.mrb[0].mxu0
      %v429 = vadd.f32 0.0, %v428
      %v430 = vpop.f32.mrb[0].mxu0
      %v431 = vpop.f32.mrb[0].mxu0
      %v432 = vadd.f32 0.0, %v431
      %v433 = vpop.f32.mrb[0].mxu0
      %434 = vmatprep.mubr.bf16.mxu0 0
      %435 = vmatmul.mubr.bf16.gmra.mrb[0].mxu0 %v301
      %v436 = vpop.f32.mrb[0].mxu0
      %v437 = vadd.f32 0.0, %v436
      %v438 = vpop.f32.mrb[0].mxu0
      %v439 = vpop.f32.mrb[0].mxu0
      %v440 = vadd.f32 0.0, %v439
      %v441 = vpop.f32.mrb[0].mxu0
      %442 = vmatprep.mubr.bf16.mxu0 0
      %443 = vmatmul.mubr.bf16.gmra.mrb[0].mxu0 %v302
      %v444 = vpop.f32.mrb[0].mxu0
      %v445 = vadd.f32 0.0, %v444
      %v446 = vpop.f32.mrb[0].mxu0
      %v447 = vpop.f32.mrb[0].mxu0
      %v448 = vadd.f32 0.0, %v447
      %v449 = vpop.f32.mrb[0].mxu0
      %450 = vmatprep.mubr.bf16.mxu0 0
      %451 = vmatmul.mubr.bf16.gmra.mrb[0].mxu0 %v303
      %v452 = vpop.f32.mrb[0].mxu0
      %v453 = vadd.f32 0.0, %v452
      %v454 = vpop.f32.mrb[0].mxu0
      %v455 = vpop.f32.mrb[0].mxu0
      %v456 = vadd.f32 0.0, %v455
      %v457 = vpop.f32.mrb[0].mxu0
      %458 = vmatprep.mubr.bf16.mxu0 0
      %459 = vmatmul.mubr.bf16.gmra.mrb[0].mxu0 %v304
      %v460 = vpop.f32.mrb[0].mxu0
      %v461 = vadd.f32 0.0, %v460
      %v462 = vpop.f32.mrb[0].mxu0
      %v463 = vpop.f32.mrb[0].mxu0
      %v464 = vadd.f32 0.0, %v463
      %v465 = vpop.f32.mrb[0].mxu0
      %466 = vmatprep.mubr.bf16.mxu0 0
      %467 = vmatmul.mubr.bf16.gmra.mrb[0].mxu0 %v305
      %v468 = vpop.f32.mrb[0].mxu0
      %v469 = vadd.f32 0.0, %v468
      %v470 = vpop.f32.mrb[0].mxu0
      %v471 = vpop.f32.mrb[0].mxu0
      %v472 = vadd.f32 0.0, %v471
      %v473 = vpop.f32.mrb[0].mxu0
      %474 = vmatprep.mubr.bf16.mxu0 0
      %475 = vmatmul.mubr.bf16.gmra.mrb[0].mxu0 %v306
      %v476 = vpop.f32.mrb[0].mxu0
      %v477 = vadd.f32 0.0, %v476
      %v478 = vpop.f32.mrb[0].mxu0
      %v479 = vpop.f32.mrb[0].mxu0
      %v480 = vadd.f32 0.0, %v479
      %v481 = vpop.f32.mrb[0].mxu0
      %482 = vmatprep.mubr.bf16.mxu0 0
      %483 = vmatmul.mubr.bf16.gmra.mrb[0].mxu0 %v307
      %v484 = vpop.f32.mrb[0].mxu0
      %v485 = vadd.f32 0.0, %v484
      %v486 = vpop.f32.mrb[0].mxu0
      %v487 = vpop.f32.mrb[0].mxu0
      %v488 = vadd.f32 0.0, %v487
      %v489 = vpop.f32.mrb[0].mxu0
      %490 = vmatprep.mubr.bf16.mxu0 0
      %491 = vmatmul.mubr.bf16.gmra.mrb[0].mxu0 %v308
      %v492 = vpop.f32.mrb[0].mxu0
      %v493 = vadd.f32 0.0, %v492
      %v494 = vpop.f32.mrb[0].mxu0
      %v495 = vpop.f32.mrb[0].mxu0
      %v496 = vadd.f32 0.0, %v495
      %v497 = vpop.f32.mrb[0].mxu0
      %498 = vmatprep.mubr.bf16.mxu0 0
      %499 = vmatmul.mubr.bf16.gmra.mrb[0].mxu0 %v309
      %v500 = vpop.f32.mrb[0].mxu0
      %v501 = vadd.f32 0.0, %v500
      %v502 = vpop.f32.mrb[0].mxu0
      %v503 = vpop.f32.mrb[0].mxu0
      %v504 = vadd.f32 0.0, %v503
      %v505 = vpop.f32.mrb[0].mxu0
      %506 = vmatprep.mubr.bf16.mxu0 0
      %507 = vmatmul.mubr.bf16.gmra.mrb[0].mxu0 %v310
      %v508 = vpop.f32.mrb[0].mxu0
      %v509 = vadd.f32 0.0, %v508
      %v510 = vpop.f32.mrb[0].mxu0
      %v511 = vpop.f32.mrb[0].mxu0
      %v512 = vadd.f32 0.0, %v511
      %v513 = vpop.f32.mrb[0].mxu0
      %514 = vmatprep.mubr.bf16.mxu0 0
      %515 = vmatmul.mubr.bf16.gmra.mrb[0].mxu0 %v311
      %v516 = vpop.f32.mrb[0].mxu0
      %v517 = vadd.f32 0.0, %v516
      %v518 = vpop.f32.mrb[0].mxu0
      %v519 = vpop.f32.mrb[0].mxu0
      %v520 = vadd.f32 0.0, %v519
      %v521 = vpop.f32.mrb[0].mxu0
      %522 = vmatprep.mubr.bf16.mxu0 0
      %523 = vmatmul.mubr.bf16.gmra.mrb[0].mxu0 %v312
      %v524 = vpop.f32.mrb[0].mxu0
      %v525 = vadd.f32 0.0, %v524
      %v526 = vpop.f32.mrb[0].mxu0
      %v527 = vpop.f32.mrb[0].mxu0
      %v528 = vadd.f32 0.0, %v527
      %v529 = vpop.f32.mrb[0].mxu0
      %530 = vmatprep.mubr.bf16.mxu0 0
      %531 = vmatmul.mubr.bf16.gmra.mrb[0].mxu0 %v313
      %v532 = vpop.f32.mrb[0].mxu0
      %v533 = vadd.f32 0.0, %v532
      %v534 = vpop.f32.mrb[0].mxu0
      %v535 = vpop.f32.mrb[0].mxu0
      %v536 = vadd.f32 0.0, %v535
      %v537 = vpop.f32.mrb[0].mxu0
      %538 = vdwg.mxu0
      %v539 = vpack.c.bf16 %v416, %v413
      %v540 = vpack.c.bf16 %v424, %v421
      %v541 = vpack.c.bf16 %v432, %v429
      %v542 = vpack.c.bf16 %v440, %v437
      %v543 = vpack.c.bf16 %v448, %v445
      %v544 = vpack.c.bf16 %v456, %v453
      %v545 = vpack.c.bf16 %v464, %v461
      %v546 = vpack.c.bf16 %v472, %v469
      %v547 = vpack.c.bf16 %v480, %v477
      %v548 = vpack.c.bf16 %v488, %v485
      %v549 = vpack.c.bf16 %v496, %v493
      %v550 = vpack.c.bf16 %v504, %v501
      %v551 = vpack.c.bf16 %v512, %v509
      %v552 = vpack.c.bf16 %v520, %v517
      %v553 = vpack.c.bf16 %v528, %v525
      %v554 = vpack.c.bf16 %v536, %v533
      %v571 = vunpack.c.l.b16 %v539
      %v572 = vunpack.c.h.b16 %v539
      %v573 = vunpack.c.l.b16 %v540
      %v574 = vunpack.c.h.b16 %v540
      %v575 = vunpack.c.l.b16 %v541
      %v576 = vunpack.c.h.b16 %v541
      %v577 = vunpack.c.l.b16 %v542
      %v578 = vunpack.c.h.b16 %v542
      %v579 = vunpack.c.l.b16 %v543
      %v580 = vunpack.c.h.b16 %v543
      %v581 = vunpack.c.l.b16 %v544
      %v582 = vunpack.c.h.b16 %v544
      %v583 = vunpack.c.l.b16 %v545
      %v584 = vunpack.c.h.b16 %v545
      %v585 = vunpack.c.l.b16 %v546
      %v586 = vunpack.c.h.b16 %v546
      %v587 = vunpack.c.l.b16 %v547
      %v588 = vunpack.c.h.b16 %v547
      %v589 = vunpack.c.l.b16 %v548
      %v590 = vunpack.c.h.b16 %v548
      %v591 = vunpack.c.l.b16 %v549
      %v592 = vunpack.c.h.b16 %v549
      %v593 = vunpack.c.l.b16 %v550
      %v594 = vunpack.c.h.b16 %v550
      %v595 = vunpack.c.l.b16 %v551
      %v596 = vunpack.c.h.b16 %v551
      %v597 = vunpack.c.l.b16 %v552
      %v598 = vunpack.c.h.b16 %v552
      %v599 = vunpack.c.l.b16 %v553
      %v600 = vunpack.c.h.b16 %v553
      %v601 = vunpack.c.l.b16 %v554
      %v602 = vunpack.c.h.b16 %v554
      %v603 = vpack.c.b16 %v571, %v571
      %v604 = vpack.c.b16 %v572, %v572
      %v605 = vpack.c.b16 %v573, %v573
      %v606 = vpack.c.b16 %v574, %v574
      %v607 = vpack.c.b16 %v575, %v575
      %v608 = vpack.c.b16 %v576, %v576
      %v609 = vpack.c.b16 %v577, %v577
      %v610 = vpack.c.b16 %v578, %v578
      %v611 = vpack.c.b16 %v579, %v579
      %v612 = vpack.c.b16 %v580, %v580
      %v613 = vpack.c.b16 %v581, %v581
      %v614 = vpack.c.b16 %v582, %v582
      %v615 = vpack.c.b16 %v583, %v583
      %v616 = vpack.c.b16 %v584, %v584
      %v617 = vpack.c.b16 %v585, %v585
      %v618 = vpack.c.b16 %v586, %v586
      %v619 = vpack.c.b16 %v587, %v587
      %v620 = vpack.c.b16 %v588, %v588
      %v621 = vpack.c.b16 %v589, %v589
      %v622 = vpack.c.b16 %v590, %v590
      %v623 = vpack.c.b16 %v591, %v591
      %v624 = vpack.c.b16 %v592, %v592
      %v625 = vpack.c.b16 %v593, %v593
      %v626 = vpack.c.b16 %v594, %v594
      %v627 = vpack.c.b16 %v595, %v595
      %v628 = vpack.c.b16 %v596, %v596
      %v629 = vpack.c.b16 %v597, %v597
      %v630 = vpack.c.b16 %v598, %v598
      %v631 = vpack.c.b16 %v599, %v599
      %v632 = vpack.c.b16 %v600, %v600
      %v633 = vpack.c.b16 %v601, %v601
      %v634 = vpack.c.b16 %v602, %v602
      %667 = vst [vmem:[%s179] sm:$0xf] %v603
      %668 = vst [vmem:[%s179 + $0x4] sm:$0xf] %v604
      %669 = vst [vmem:[%s179 + $0x8] sm:$0xf] %v605
      %670 = vst [vmem:[%s179 + $0xc] sm:$0xf] %v606
      %671 = vst [vmem:[%s179 + $0x10] sm:$0xf] %v607
      %672 = vst [vmem:[%s179 + $0x14] sm:$0xf] %v608
      %673 = vst [vmem:[%s179 + $0x18] sm:$0xf] %v609
      %674 = vst [vmem:[%s179 + $0x1c] sm:$0xf] %v610
      %675 = vst [vmem:[%s179 + $0x20] sm:$0xf] %v611
      %676 = vst [vmem:[%s179 + $0x24] sm:$0xf] %v612
      %677 = vst [vmem:[%s179 + $0x28] sm:$0xf] %v613
      %678 = vst [vmem:[%s179 + $0x2c] sm:$0xf] %v614
      %679 = vst [vmem:[%s179 + $0x30] sm:$0xf] %v615
      %680 = vst [vmem:[%s179 + $0x34] sm:$0xf] %v616
      %681 = vst [vmem:[%s179 + $0x38] sm:$0xf] %v617
      %682 = vst [vmem:[%s179 + $0x3c] sm:$0xf] %v618
      %683 = vst [vmem:[%s179 + $0x40] sm:$0xf] %v619
      %684 = vst [vmem:[%s179 + $0x44] sm:$0xf] %v620
      %685 = vst [vmem:[%s179 + $0x48] sm:$0xf] %v621
      %686 = vst [vmem:[%s179 + $0x4c] sm:$0xf] %v622
      %687 = vst [vmem:[%s179 + $0x50] sm:$0xf] %v623
      %688 = vst [vmem:[%s179 + $0x54] sm:$0xf] %v624
      %689 = vst [vmem:[%s179 + $0x58] sm:$0xf] %v625
      %690 = vst [vmem:[%s179 + $0x5c] sm:$0xf] %v626
      %691 = vst [vmem:[%s179 + $0x60] sm:$0xf] %v627
      %692 = vst [vmem:[%s179 + $0x64] sm:$0xf] %v628
      %693 = vst [vmem:[%s179 + $0x68] sm:$0xf] %v629
      %694 = vst [vmem:[%s179 + $0x6c] sm:$0xf] %v630
      %695 = vst [vmem:[%s179 + $0x70] sm:$0xf] %v631
      %696 = vst [vmem:[%s179 + $0x74] sm:$0xf] %v632
      %697 = vst [vmem:[%s179 + $0x78] sm:$0xf] %v633
      %698 = vst [vmem:[%s179 + $0x7c] sm:$0xf] %v634
      %v699 = vunpack.c.l.bf16 %v539
      %v700 = vunpack.c.h.bf16 %v539
      %v701 = vunpack.c.l.bf16 %v540
      %v702 = vunpack.c.h.bf16 %v540
      %v703 = vunpack.c.l.bf16 %v541
      %v704 = vunpack.c.h.bf16 %v541
      %v705 = vunpack.c.l.bf16 %v542
      %v706 = vunpack.c.h.bf16 %v542
      %v707 = vunpack.c.l.bf16 %v543
      %v708 = vunpack.c.h.bf16 %v543
      %v709 = vunpack.c.l.bf16 %v544
      %v710 = vunpack.c.h.bf16 %v544
      %v711 = vunpack.c.l.bf16 %v545
      %v712 = vunpack.c.h.bf16 %v545
      %v713 = vunpack.c.l.bf16 %v546
      %v714 = vunpack.c.h.bf16 %v546
      %v715 = vunpack.c.l.bf16 %v547
      %v716 = vunpack.c.h.bf16 %v547
      %v717 = vunpack.c.l.bf16 %v548
      %v718 = vunpack.c.h.bf16 %v548
      %v719 = vunpack.c.l.bf16 %v549
      %v720 = vunpack.c.h.bf16 %v549
      %v721 = vunpack.c.l.bf16 %v550
      %v722 = vunpack.c.h.bf16 %v550
      %v723 = vunpack.c.l.bf16 %v551
      %v724 = vunpack.c.h.bf16 %v551
      %v725 = vunpack.c.l.bf16 %v552
      %v726 = vunpack.c.h.bf16 %v552
      %v727 = vunpack.c.l.bf16 %v553
      %v728 = vunpack.c.h.bf16 %v553
      %v729 = vunpack.c.l.bf16 %v554
      %v730 = vunpack.c.h.bf16 %v554
      %v731 = vadd.f32 %v699, %v700
      %v732 = vadd.f32 %v731, %v701
      %v733 = vadd.f32 %v732, %v702
      %v734 = vadd.f32 %v733, %v703
      %v735 = vadd.f32 %v734, %v704
      %v736 = vadd.f32 %v735, %v705
      %v737 = vadd.f32 %v736, %v706
      %v738 = vadd.f32 %v737, %v707
      %v739 = vadd.f32 %v738, %v708
      %v740 = vadd.f32 %v739, %v709
      %v741 = vadd.f32 %v740, %v710
      %v742 = vadd.f32 %v741, %v711
      %v743 = vadd.f32 %v742, %v712
      %v744 = vadd.f32 %v743, %v713
      %v745 = vadd.f32 %v744, %v714
      %v746 = vadd.f32 %v745, %v715
      %v747 = vadd.f32 %v746, %v716
      %v748 = vadd.f32 %v747, %v717
      %v749 = vadd.f32 %v748, %v718
      %v750 = vadd.f32 %v749, %v719
      %v751 = vadd.f32 %v750, %v720
      %v752 = vadd.f32 %v751, %v721
      %v753 = vadd.f32 %v752, %v722
      %v754 = vadd.f32 %v753, %v723
      %v755 = vadd.f32 %v754, %v724
      %v756 = vadd.f32 %v755, %v725
      %v757 = vadd.f32 %v756, %v726
      %v758 = vadd.f32 %v757, %v727
      %v759 = vadd.f32 %v758, %v728
      %v760 = vadd.f32 %v759, %v729
      %v761 = vadd.f32 %v760, %v730
      %v762 = vrot.slane %v761, 4
      %v763 = vadd.f32 %v761, %v762
      %v764 = vrot.slane %v763, 2
      %v765 = vadd.f32 %v763, %v764
      %v766 = vrot.slane %v765, 1
      %v767 = vadd.f32 %v765, %v766
      %768 = vst [vmem:[%s184] sm:$0x1] %v767
      %v769 = vmul.f32 %v699, %v699
      %v770 = vmul.f32 %v700, %v700
      %v771 = vmul.f32 %v701, %v701
      %v772 = vmul.f32 %v702, %v702
      %v773 = vmul.f32 %v703, %v703
      %v774 = vmul.f32 %v704, %v704
      %v775 = vmul.f32 %v705, %v705
      %v776 = vmul.f32 %v706, %v706
      %v777 = vmul.f32 %v707, %v707
      %v778 = vmul.f32 %v708, %v708
      %v779 = vmul.f32 %v709, %v709
      %v780 = vmul.f32 %v710, %v710
      %v781 = vmul.f32 %v711, %v711
      %v782 = vmul.f32 %v712, %v712
      %v783 = vmul.f32 %v713, %v713
      %v784 = vmul.f32 %v714, %v714
      %v785 = vmul.f32 %v715, %v715
      %v786 = vmul.f32 %v716, %v716
      %v787 = vmul.f32 %v717, %v717
      %v788 = vmul.f32 %v718, %v718
      %v789 = vmul.f32 %v719, %v719
      %v790 = vmul.f32 %v720, %v720
      %v791 = vmul.f32 %v721, %v721
      %v792 = vmul.f32 %v722, %v722
      %v793 = vmul.f32 %v723, %v723
      %v794 = vmul.f32 %v724, %v724
      %v795 = vmul.f32 %v725, %v725
      %v796 = vmul.f32 %v726, %v726
      %v797 = vmul.f32 %v727, %v727
      %v798 = vmul.f32 %v728, %v728
      %v799 = vmul.f32 %v729, %v729
      %v800 = vmul.f32 %v730, %v730
      %v801 = vadd.f32 %v769, %v770
      %v802 = vadd.f32 %v801, %v771
      %v803 = vadd.f32 %v802, %v772
      %v804 = vadd.f32 %v803, %v773
      %v805 = vadd.f32 %v804, %v774
      %v806 = vadd.f32 %v805, %v775
      %v807 = vadd.f32 %v806, %v776
      %v808 = vadd.f32 %v807, %v777
      %v809 = vadd.f32 %v808, %v778
      %v810 = vadd.f32 %v809, %v779
      %v811 = vadd.f32 %v810, %v780
      %v812 = vadd.f32 %v811, %v781
      %v813 = vadd.f32 %v812, %v782
      %v814 = vadd.f32 %v813, %v783
      %v815 = vadd.f32 %v814, %v784
      %v816 = vadd.f32 %v815, %v785
      %v817 = vadd.f32 %v816, %v786
      %v818 = vadd.f32 %v817, %v787
      %v819 = vadd.f32 %v818, %v788
      %v820 = vadd.f32 %v819, %v789
      %v821 = vadd.f32 %v820, %v790
      %v822 = vadd.f32 %v821, %v791
      %v823 = vadd.f32 %v822, %v792
      %v824 = vadd.f32 %v823, %v793
      %v825 = vadd.f32 %v824, %v794
      %v826 = vadd.f32 %v825, %v795
      %v827 = vadd.f32 %v826, %v796
      %v828 = vadd.f32 %v827, %v797
      %v829 = vadd.f32 %v828, %v798
      %v830 = vadd.f32 %v829, %v799
      %v831 = vadd.f32 %v830, %v800
      %v832 = vrot.slane %v831, 4
      %v833 = vadd.f32 %v831, %v832
      %v834 = vrot.slane %v833, 2
      %v835 = vadd.f32 %v833, %v834
      %v836 = vrot.slane %v835, 1
      %v837 = vadd.f32 %v835, %v836
      %838 = vst [vmem:[%s184 + $0x1] sm:$0x1] %v837
      %s839 = smul.u32 32, %s15
      %p840 = scmp.lt.s32.totalorder %s839, 63
      %s841 = scalar_select %p840, %s839, 63
      %s842 = smul.addr %s841, 4
      %s843 = scalar_lea.vmem %s2, %s842
      %p844 = scmp.lt.s32.totalorder %s15, 1
      %s845 = scalar_select %p844, %s15, 1
      %s846 = smul.addr %s845, 2
      %s847 = scalar_lea.vmem %s3, %s846
      // Predicated region
      $region29: #{bottleneck_forward.4} parent=27 // pred_check
        %p848 = pneg %p80
      $region30: #{bottleneck_forward.4} parent=27 // pred_check_branch
        %850 = sbr.rel (%p848) target = $region32
      $region31: #{bottleneck_forward.4} parent=27 // pred_region
        %s851 = smul.u32 32, %s15
      $region32: #{bottleneck_forward.4} parent=27 // pred_fallthru
        _
      // Predicated region
      $region33: #{bottleneck_forward.4} parent=27 // pred_check
        %p852 = pneg %p106
      $region34: #{bottleneck_forward.4} parent=27 // pred_check_branch
        %854 = sbr.rel (%p852) target = $region36
      $region35: #{bottleneck_forward.4} parent=27 // pred_region
        _
      $region36: #{bottleneck_forward.4} parent=27 // pred_fallthru
        _
    $region28: #{bottleneck_forward.4} parent=5 // pred_fallthru
      _
    %p855 = scmp.le.s32.totalorder 2, %s10
    // Predicated region
    $region37: #{bottleneck_forward.4} parent=5 // pred_check
      %p856 = pneg %p855
    $region38: #{bottleneck_forward.4} parent=5 // pred_check_branch
      %858 = sbr.rel (%p856) target = $region40
    $region39: #{bottleneck_forward.4} parent=5 // pred_region
      %s859 = ssub.s32 %s10, 2
      // Predicated region
      $region41: #{bottleneck_forward.4} parent=39 // pred_check
        %p860 = pneg %p86
      $region42: #{bottleneck_forward.4} parent=39 // pred_check_branch
        %862 = sbr.rel (%p860) target = $region44
      $region43: #{bottleneck_forward.4} parent=39 // pred_region
        %s863 = smul.u32 32, %s16
        %p864 = scmp.lt.s32.totalorder %s863, 63
        %s865 = scalar_select %p864, %s863, 63
        %s866 = smul.addr %s865, 4
        %s867 = scalar_lea.vmem %s2, %s866
      $region44: #{bottleneck_forward.4} parent=39 // pred_fallthru
        _
      // Predicated region
      $region45: #{bottleneck_forward.4} parent=39 // pred_check
        %p868 = pneg %p112
      $region46: #{bottleneck_forward.4} parent=39 // pred_check_branch
        %870 = sbr.rel (%p868) target = $region48
      $region47: #{bottleneck_forward.4} parent=39 // pred_region
        %p871 = scmp.lt.s32.totalorder %s16, 1
        %s872 = scalar_select %p871, %s16, 1
        %s873 = smul.addr %s872, 2
        %s874 = scalar_lea.vmem %s3, %s873
      $region48: #{bottleneck_forward.4} parent=39 // pred_fallthru
        _
    $region40: #{bottleneck_forward.4} parent=5 // pred_fallthru
      _
  $region6: #{bottleneck_forward.4} parent=0 // loop_footer
    %s14 = sadd.s32 1, %s10
  $region7: #{bottleneck_forward.4} parent=0 // loop_footer_branch
    %9 = sbr.rel target = $region3
  $region8: #{bottleneck_forward.4} parent=0 // loop_exit
    _

// kernel: bottleneck_forward.6
$region0: #{bottleneck_forward.6}
  #allocation0 [shape = 'u32[]', space=smem, size = 0x4, offset = 0x4, fixed_abs, tag = 'smem constant byte address 0x4 - core index']
  #allocation1 [shape = 'u32[144,128]{1,0:T(1,128)}', space=vmem, size = 0x12000, scoped, tag = 'internal scratch']
  %s0 = inlined_call_operand.vmem [shape: bf16[512,128], index: 0, kind: input, shape index: {}]
  %s1 = inlined_call_operand.vmem [shape: f32[1,128], index: 1, kind: input, shape index: {}]
  %s2 = inlined_call_operand.vmem [shape: f32[1,128], index: 2, kind: input, shape index: {}]
  %s3 = inlined_call_operand.vmem [shape: bf16[128,128], index: 3, kind: input, shape index: {}]
  %s4 = inlined_call_operand.vmem [shape: bf16[512,128], index: 4, kind: output, shape index: {0}]
  %s5 = inlined_call_operand.vmem [shape: f32[2,2,128], index: 5, kind: output, shape index: {1}]
  %6 = xla_tuple %s4, %s5
  %s7 = sld [smem:[#allocation0]]
  $region57: #{bottleneck_forward.6} parent=0
    _
  %s9 = ssub.s32 1, %s7
  %s10 = scalar_select 0, %s9, %s7
  loop: start=0, step=1, limit=4
  $region2: #{bottleneck_forward.6} parent=0 // loop_pre_header
    _
  $region3: #{bottleneck_forward.6} parent=0 // loop_header
    %s12 = sphi 0, %s16
    %p13 = scmp.ge.s32.totalorder %s12, 4
    %s22 = sphi 0, %s24
    %s25 = sphi 0, %s22
    %s26 = sphi 0, %s25
    %s42 = sphi 0, %s26
    %s46 = sphi 0, %s46
    %s48 = sphi 0, %s46
    %s49 = sphi 0, %s48
    %s63 = sphi 0, %s49
    %s67 = sphi 0, %s67
    %s69 = sphi 0, %s67
    %s70 = sphi 0, %s69
    %s84 = sphi 0, %s70
    %s88 = sphi 0, %s88
    %s90 = sphi 0, %s88
    %s91 = sphi 0, %s90
    %s105 = sphi 0, %s91
    %s111 = sphi 0, %s113
    %s114 = sphi 0, %s111
    %s115 = sphi 0, %s114
    %s131 = sphi 0, %s115
    %s137 = sphi 0, %s139
    %s140 = sphi 0, %s137
    %s141 = sphi 0, %s140
    %s157 = sphi 0, %s141
  $region4: #{bottleneck_forward.6} parent=0 // loop_header_branch
    %15 = sbr.rel (%p13) target = $region8
  $region5: #{bottleneck_forward.6} parent=0 // loop_body
    %s17 = ssub.s32 %s12, 1
    %s18 = ssub.s32 %s12, 2
    %s19 = sadd.s32 %s12, 1
    %s20 = ssub.s32 %s12, %s19
    %p21 = scmp.eq.s32.totalorder %s20, 0
    %s23 = sadd.s32 %s22, 1
    %s24 = scalar_select %p21, %s22, %s23
    %p27 = pneg %p21
    %p28 = scmp.eq.s32.totalorder %s12, 1
    %p29 = por %p27, %p28
    %p30 = scmp.ne.s32.totalorder %s22, %s25
    %p31 = scmp.eq.s32.totalorder %s12, 0
    %p32 = por %p30, %p31
    %p33 = scmp.ne.s32.totalorder %s22, %s25
    %p34 = scmp.eq.s32.totalorder %s17, 1
    %p35 = por %p33, %p34
    %p36 = scmp.ne.s32.totalorder %s25, %s26
    %p37 = scmp.eq.s32.totalorder %s17, 0
    %p38 = por %p36, %p37
    %p39 = scmp.ne.s32.totalorder %s25, %s26
    %p40 = scmp.eq.s32.totalorder %s18, 1
    %p41 = por %p39, %p40
    %p43 = scmp.ne.s32.totalorder %s26, %s42
    %p44 = scmp.eq.s32.totalorder %s18, 0
    %p45 = por %p43, %p44
    %s47 = sadd.s32 %s46, 1
    %p50 = scmp.eq.s32.totalorder %s12, 1
    %p51 = scmp.ne.s32.totalorder %s46, %s48
    %p52 = scmp.eq.s32.totalorder %s12, 0
    %p53 = por %p51, %p52
    %p54 = scmp.ne.s32.totalorder %s46, %s48
    %p55 = scmp.eq.s32.totalorder %s17, 1
    %p56 = por %p54, %p55
    %p57 = scmp.ne.s32.totalorder %s48, %s49
    %p58 = scmp.eq.s32.totalorder %s17, 0
    %p59 = por %p57, %p58
    %p60 = scmp.ne.s32.totalorder %s48, %s49
    %p61 = scmp.eq.s32.totalorder %s18, 1
    %p62 = por %p60, %p61
    %p64 = scmp.ne.s32.totalorder %s49, %s63
    %p65 = scmp.eq.s32.totalorder %s18, 0
    %p66 = por %p64, %p65
    %s68 = sadd.s32 %s67, 1
    %p71 = scmp.eq.s32.totalorder %s12, 1
    %p72 = scmp.ne.s32.totalorder %s67, %s69
    %p73 = scmp.eq.s32.totalorder %s12, 0
    %p74 = por %p72, %p73
    %p75 = scmp.ne.s32.totalorder %s67, %s69
    %p76 = scmp.eq.s32.totalorder %s17, 1
    %p77 = por %p75, %p76
    %p78 = scmp.ne.s32.totalorder %s69, %s70
    %p79 = scmp.eq.s32.totalorder %s17, 0
    %p80 = por %p78, %p79
    %p81 = scmp.ne.s32.totalorder %s69, %s70
    %p82 = scmp.eq.s32.totalorder %s18, 1
    %p83 = por %p81, %p82
    %p85 = scmp.ne.s32.totalorder %s70, %s84
    %p86 = scmp.eq.s32.totalorder %s18, 0
    %p87 = por %p85, %p86
    %s89 = sadd.s32 %s88, 1
    %p92 = scmp.eq.s32.totalorder %s12, 1
    %p93 = scmp.ne.s32.totalorder %s88, %s90
    %p94 = scmp.eq.s32.totalorder %s12, 0
    %p95 = por %p93, %p94
    %p96 = scmp.ne.s32.totalorder %s88, %s90
    %p97 = scmp.eq.s32.totalorder %s17, 1
    %p98 = por %p96, %p97
    %p99 = scmp.ne.s32.totalorder %s90, %s91
    %p100 = scmp.eq.s32.totalorder %s17, 0
    %p101 = por %p99, %p100
    %p102 = scmp.ne.s32.totalorder %s90, %s91
    %p103 = scmp.eq.s32.totalorder %s18, 1
    %p104 = por %p102, %p103
    %p106 = scmp.ne.s32.totalorder %s91, %s105
    %p107 = scmp.eq.s32.totalorder %s18, 0
    %p108 = por %p106, %p107
    %s109 = ssub.s32 %s12, %s19
    %p110 = scmp.eq.s32.totalorder %s109, 0
    %s112 = sadd.s32 %s111, 1
    %s113 = scalar_select %p110, %s111, %s112
    %p116 = pneg %p110
    %p117 = scmp.eq.s32.totalorder %s12, 1
    %p118 = por %p116, %p117
    %p119 = scmp.ne.s32.totalorder %s111, %s114
    %p120 = scmp.eq.s32.totalorder %s12, 0
    %p121 = por %p119, %p120
    %p122 = scmp.ne.s32.totalorder %s111, %s114
    %p123 = scmp.eq.s32.totalorder %s17, 1
    %p124 = por %p122, %p123
    %p125 = scmp.ne.s32.totalorder %s114, %s115
    %p126 = scmp.eq.s32.totalorder %s17, 0
    %p127 = por %p125, %p126
    %p128 = scmp.ne.s32.totalorder %s114, %s115
    %p129 = scmp.eq.s32.totalorder %s18, 1
    %p130 = por %p128, %p129
    %p132 = scmp.ne.s32.totalorder %s115, %s131
    %p133 = scmp.eq.s32.totalorder %s18, 0
    %p134 = por %p132, %p133
    %s135 = ssub.s32 %s12, %s19
    %p136 = scmp.eq.s32.totalorder %s135, 0
    %s138 = sadd.s32 %s137, 1
    %s139 = scalar_select %p136, %s137, %s138
    %p142 = pneg %p136
    %p143 = scmp.eq.s32.totalorder %s12, 1
    %p144 = por %p142, %p143
    %p145 = scmp.ne.s32.totalorder %s137, %s140
    %p146 = scmp.eq.s32.totalorder %s12, 0
    %p147 = por %p145, %p146
    %p148 = scmp.ne.s32.totalorder %s137, %s140
    %p149 = scmp.eq.s32.totalorder %s17, 1
    %p150 = por %p148, %p149
    %p151 = scmp.ne.s32.totalorder %s140, %s141
    %p152 = scmp.eq.s32.totalorder %s17, 0
    %p153 = por %p151, %p152
    %p154 = scmp.ne.s32.totalorder %s140, %s141
    %p155 = scmp.eq.s32.totalorder %s18, 1
    %p156 = por %p154, %p155
    %p158 = scmp.ne.s32.totalorder %s141, %s157
    %p159 = scmp.eq.s32.totalorder %s18, 0
    %p160 = por %p158, %p159
    %p161 = scmp.le.s32.totalorder 1, %s12
    %p162 = scmp.lt.s32.totalorder %s12, 3
    %p163 = pnand %p161, %p162
    %p164 = pneg %p163
    // Predicated region
    $region9: #{bottleneck_forward.6} parent=5 // pred_check
      _
    $region10: #{bottleneck_forward.6} parent=5 // pred_check_branch
      %166 = sbr.rel (%p163) target = $region12
    $region11: #{bottleneck_forward.6} parent=5 // pred_region
      %s167 = ssub.s32 %s12, 1
      // Predicated region
      $region13: #{bottleneck_forward.6} parent=11 // pred_check
        %p168 = pneg %p59
      $region14: #{bottleneck_forward.6} parent=11 // pred_check_branch
        %170 = sbr.rel (%p168) target = $region16
      $region15: #{bottleneck_forward.6} parent=11 // pred_region
        _
      $region16: #{bottleneck_forward.6} parent=11 // pred_fallthru
        _
      // Predicated region
      $region17: #{bottleneck_forward.6} parent=11 // pred_check
        %p171 = pneg %p80
      $region18: #{bottleneck_forward.6} parent=11 // pred_check_branch
        %173 = sbr.rel (%p171) target = $region20
      $region19: #{bottleneck_forward.6} parent=11 // pred_region
        _
      $region20: #{bottleneck_forward.6} parent=11 // pred_fallthru
        _
      // Predicated region
      $region21: #{bottleneck_forward.6} parent=11 // pred_check
        %p174 = pneg %p101
      $region22: #{bottleneck_forward.6} parent=11 // pred_check_branch
        %176 = sbr.rel (%p174) target = $region24
      $region23: #{bottleneck_forward.6} parent=11 // pred_region
        _
      $region24: #{bottleneck_forward.6} parent=11 // pred_fallthru
        _
    $region12: #{bottleneck_forward.6} parent=5 // pred_fallthru
      _
    %p177 = scmp.lt.s32.totalorder %s12, 2
    // Predicated region
    $region25: #{bottleneck_forward.6} parent=5 // pred_check
      %p178 = pneg %p177
    $region26: #{bottleneck_forward.6} parent=5 // pred_check_branch
      %180 = sbr.rel (%p178) target = $region28
    $region27: #{bottleneck_forward.6} parent=5 // pred_region
      // Predicated region
      $region29: #{bottleneck_forward.6} parent=27 // pred_check
        %p181 = pneg %p32
      $region30: #{bottleneck_forward.6} parent=27 // pred_check_branch
        %183 = sbr.rel (%p181) target = $region32
      $region31: #{bottleneck_forward.6} parent=27 // pred_region
        %s184 = smul.u32 32, %s12
        %p185 = scmp.lt.s32.totalorder %s184, 63
        %s186 = scalar_select %p185, %s184, 63
        %s187 = smul.addr %s186, 4
        %s188 = scalar_lea.vmem %s0, %s187
        %s189 = smul.u32 32, %s12
      $region32: #{bottleneck_forward.6} parent=27 // pred_fallthru
        _
    $region28: #{bottleneck_forward.6} parent=5 // pred_fallthru
      _
    %p190 = scmp.le.s32.totalorder 1, %s12
    %p191 = scmp.lt.s32.totalorder %s12, 3
    %p192 = pnand %p190, %p191
    %p193 = pneg %p192
    // Predicated region
    $region33: #{bottleneck_forward.6} parent=5 // pred_check
      _
    $region34: #{bottleneck_forward.6} parent=5 // pred_check_branch
      %195 = sbr.rel (%p192) target = $region36
    $region35: #{bottleneck_forward.6} parent=5 // pred_region
      %s196 = ssub.s32 %s12, 1
      %s197 = smul.u32 32, %s17
      %p198 = scmp.lt.s32.totalorder %s197, 63
      %s199 = scalar_select %p198, %s197, 63
      %s200 = smul.addr %s199, 4
      %s201 = scalar_lea.vmem %s0, %s200
      %p202 = pneg %p38
      %p203 = pneg %p35
      %p204 = pneg %p59
      %p205 = pneg %p56
      %p206 = pneg %p80
      %p207 = pneg %p77
      %p208 = pneg %p101
      %p209 = pneg %p98
      %p210 = pneg %p127
      %p211 = pneg %p124
      %s212 = smul.u32 32, %s17
      %p213 = scmp.lt.s32.totalorder %s212, 63
      %s214 = scalar_select %p213, %s212, 63
      %s215 = smul.addr %s214, 4
      %s216 = scalar_lea.vmem %s4, %s215
      %p217 = pneg %p153
      %p218 = pneg %p150
      %p219 = scmp.lt.s32.totalorder %s17, 1
      %s220 = scalar_select %p219, %s17, 1
      %s221 = smul.addr %s220, 2
      %s222 = scalar_lea.vmem %s5, %s221
      %s223 = smul.u32 32, %s17
      %p224 = scmp.lt.s32.totalorder %s223, 63
      %s225 = scalar_select %p224, %s223, 63
      %s226 = smul.addr %s225, 4
      %s227 = scalar_lea.vmem %s0, %s226
      %s228 = smul.u32 32, %s17
      %s229 = smul.u32 32, %s17
      %p230 = scmp.lt.s32.totalorder %s229, 63
      %s231 = scalar_select %p230, %s229, 63
      %s232 = smul.addr %s231, 4
      %s233 = scalar_lea.vmem %s4, %s232
      %s234 = smul.u32 32, %s17
      %p235 = scmp.lt.s32.totalorder %s17, 1
      %s236 = scalar_select %p235, %s17, 1
      %s237 = smul.addr %s236, 2
      %s238 = scalar_lea.vmem %s5, %s237
      %v240 = vld [vmem:[%s227] sm:$0xf]
      %v241 = vld [vmem:[%s227 + $0x4] sm:$0xf]
      %v242 = vld [vmem:[%s227 + $0x8] sm:$0xf]
      %v243 = vld [vmem:[%s227 + $0xc] sm:$0xf]
      %v244 = vld [vmem:[%s227 + $0x10] sm:$0xf]
      %v245 = vld [vmem:[%s227 + $0x14] sm:$0xf]
      %v246 = vld [vmem:[%s227 + $0x18] sm:$0xf]
      %v247 = vld [vmem:[%s227 + $0x1c] sm:$0xf]
      %v248 = vld [vmem:[%s227 + $0x20] sm:$0xf]
      %v249 = vld [vmem:[%s227 + $0x24] sm:$0xf]
      %v250 = vld [vmem:[%s227 + $0x28] sm:$0xf]
      %v251 = vld [vmem:[%s227 + $0x2c] sm:$0xf]
      %v252 = vld [vmem:[%s227 + $0x30] sm:$0xf]
      %v253 = vld [vmem:[%s227 + $0x34] sm:$0xf]
      %v254 = vld [vmem:[%s227 + $0x38] sm:$0xf]
      %v255 = vld [vmem:[%s227 + $0x3c] sm:$0xf]
      %v256 = vld [vmem:[%s227 + $0x40] sm:$0xf]
      %v257 = vld [vmem:[%s227 + $0x44] sm:$0xf]
      %v258 = vld [vmem:[%s227 + $0x48] sm:$0xf]
      %v259 = vld [vmem:[%s227 + $0x4c] sm:$0xf]
      %v260 = vld [vmem:[%s227 + $0x50] sm:$0xf]
      %v261 = vld [vmem:[%s227 + $0x54] sm:$0xf]
      %v262 = vld [vmem:[%s227 + $0x58] sm:$0xf]
      %v263 = vld [vmem:[%s227 + $0x5c] sm:$0xf]
      %v264 = vld [vmem:[%s227 + $0x60] sm:$0xf]
      %v265 = vld [vmem:[%s227 + $0x64] sm:$0xf]
      %v266 = vld [vmem:[%s227 + $0x68] sm:$0xf]
      %v267 = vld [vmem:[%s227 + $0x6c] sm:$0xf]
      %v268 = vld [vmem:[%s227 + $0x70] sm:$0xf]
      %v269 = vld [vmem:[%s227 + $0x74] sm:$0xf]
      %v270 = vld [vmem:[%s227 + $0x78] sm:$0xf]
      %v271 = vld [vmem:[%s227 + $0x7c] sm:$0xf]
      %v272 = vunpack.c.l.bf16 %v240
      %v273 = vunpack.c.l.bf16 %v241
      %v274 = vunpack.c.l.bf16 %v242
      %v275 = vunpack.c.l.bf16 %v243
      %v276 = vunpack.c.l.bf16 %v244
      %v277 = vunpack.c.l.bf16 %v245
      %v278 = vunpack.c.l.bf16 %v246
      %v279 = vunpack.c.l.bf16 %v247
      %v280 = vunpack.c.l.bf16 %v248
      %v281 = vunpack.c.l.bf16 %v249
      %v282 = vunpack.c.l.bf16 %v250
      %v283 = vunpack.c.l.bf16 %v251
      %v284 = vunpack.c.l.bf16 %v252
      %v285 = vunpack.c.l.bf16 %v253
      %v286 = vunpack.c.l.bf16 %v254
      %v287 = vunpack.c.l.bf16 %v255
      %v288 = vunpack.c.l.bf16 %v256
      %v289 = vunpack.c.l.bf16 %v257
      %v290 = vunpack.c.l.bf16 %v258
      %v291 = vunpack.c.l.bf16 %v259
      %v292 = vunpack.c.l.bf16 %v260
      %v293 = vunpack.c.l.bf16 %v261
      %v294 = vunpack.c.l.bf16 %v262
      %v295 = vunpack.c.l.bf16 %v263
      %v296 = vunpack.c.l.bf16 %v264
      %v297 = vunpack.c.l.bf16 %v265
      %v298 = vunpack.c.l.bf16 %v266
      %v299 = vunpack.c.l.bf16 %v267
      %v300 = vunpack.c.l.bf16 %v268
      %v301 = vunpack.c.l.bf16 %v269
      %v302 = vunpack.c.l.bf16 %v270
      %v303 = vunpack.c.l.bf16 %v271
      %v304 = vld [vmem:[%s1] sm:$0x1]
      %v306 = vlaneseq
      %v307 = vshrl.u32 %v306, 7
      %v308 = vsub.s32 0, %v307
      %v309 = vrot.slane %v304, %v308
      %v311 = vmul.f32 %v272, %v309
      %v312 = vmul.f32 %v273, %v309
      %v313 = vmul.f32 %v274, %v309
      %v314 = vmul.f32 %v275, %v309
      %v315 = vmul.f32 %v276, %v309
      %v316 = vmul.f32 %v277, %v309
      %v317 = vmul.f32 %v278, %v309
      %v318 = vmul.f32 %v279, %v309
      %v319 = vmul.f32 %v280, %v309
      %v320 = vmul.f32 %v281, %v309
      %v321 = vmul.f32 %v282, %v309
      %v322 = vmul.f32 %v283, %v309
      %v323 = vmul.f32 %v284, %v309
      %v324 = vmul.f32 %v285, %v309
      %v325 = vmul.f32 %v286, %v309
      %v326 = vmul.f32 %v287, %v309
      %v327 = vmul.f32 %v288, %v309
      %v328 = vmul.f32 %v289, %v309
      %v329 = vmul.f32 %v290, %v309
      %v330 = vmul.f32 %v291, %v309
      %v331 = vmul.f32 %v292, %v309
      %v332 = vmul.f32 %v293, %v309
      %v333 = vmul.f32 %v294, %v309
      %v334 = vmul.f32 %v295, %v309
      %v335 = vmul.f32 %v296, %v309
      %v336 = vmul.f32 %v297, %v309
      %v337 = vmul.f32 %v298, %v309
      %v338 = vmul.f32 %v299, %v309
      %v339 = vmul.f32 %v300, %v309
      %v340 = vmul.f32 %v301, %v309
      %v341 = vmul.f32 %v302, %v309
      %v342 = vmul.f32 %v303, %v309
      %v343 = vld [vmem:[%s2] sm:$0x1]
      %v345 = vlaneseq
      %v346 = vshrl.u32 %v345, 7
      %v347 = vsub.s32 0, %v346
      %v348 = vrot.slane %v343, %v347
      %v350 = vadd.f32 %v311, %v348
      %v351 = vadd.f32 %v312, %v348
      %v352 = vadd.f32 %v313, %v348
      %v353 = vadd.f32 %v314, %v348
      %v354 = vadd.f32 %v315, %v348
      %v355 = vadd.f32 %v316, %v348
      %v356 = vadd.f32 %v317, %v348
      %v357 = vadd.f32 %v318, %v348
      %v358 = vadd.f32 %v319, %v348
      %v359 = vadd.f32 %v320, %v348
      %v360 = vadd.f32 %v321, %v348
      %v361 = vadd.f32 %v322, %v348
      %v362 = vadd.f32 %v323, %v348
      %v363 = vadd.f32 %v324, %v348
      %v364 = vadd.f32 %v325, %v348
      %v365 = vadd.f32 %v326, %v348
      %v366 = vadd.f32 %v327, %v348
      %v367 = vadd.f32 %v328, %v348
      %v368 = vadd.f32 %v329, %v348
      %v369 = vadd.f32 %v330, %v348
      %v370 = vadd.f32 %v331, %v348
      %v371 = vadd.f32 %v332, %v348
      %v372 = vadd.f32 %v333, %v348
      %v373 = vadd.f32 %v334, %v348
      %v374 = vadd.f32 %v335, %v348
      %v375 = vadd.f32 %v336, %v348
      %v376 = vadd.f32 %v337, %v348
      %v377 = vadd.f32 %v338, %v348
      %v378 = vadd.f32 %v339, %v348
      %v379 = vadd.f32 %v340, %v348
      %v380 = vadd.f32 %v341, %v348
      %v381 = vadd.f32 %v342, %v348
      %v382 = vmax.f32 %v350, 0.0
      %v383 = vmax.f32 %v351, 0.0
      %v384 = vmax.f32 %v352, 0.0
      %v385 = vmax.f32 %v353, 0.0
      %v386 = vmax.f32 %v354, 0.0
      %v387 = vmax.f32 %v355, 0.0
      %v388 = vmax.f32 %v356, 0.0
      %v389 = vmax.f32 %v357, 0.0
      %v390 = vmax.f32 %v358, 0.0
      %v391 = vmax.f32 %v359, 0.0
      %v392 = vmax.f32 %v360, 0.0
      %v393 = vmax.f32 %v361, 0.0
      %v394 = vmax.f32 %v362, 0.0
      %v395 = vmax.f32 %v363, 0.0
      %v396 = vmax.f32 %v364, 0.0
      %v397 = vmax.f32 %v365, 0.0
      %v398 = vmax.f32 %v366, 0.0
      %v399 = vmax.f32 %v367, 0.0
      %v400 = vmax.f32 %v368, 0.0
      %v401 = vmax.f32 %v369, 0.0
      %v402 = vmax.f32 %v370, 0.0
      %v403 = vmax.f32 %v371, 0.0
      %v404 = vmax.f32 %v372, 0.0
      %v405 = vmax.f32 %v373, 0.0
      %v406 = vmax.f32 %v374, 0.0
      %v407 = vmax.f32 %v375, 0.0
      %v408 = vmax.f32 %v376, 0.0
      %v409 = vmax.f32 %v377, 0.0
      %v410 = vmax.f32 %v378, 0.0
      %v411 = vmax.f32 %v379, 0.0
      %v412 = vmax.f32 %v380, 0.0
      %v413 = vmax.f32 %v381, 0.0
      %v414 = vpack.c.bf16 %v383, %v382
      %v415 = vpack.c.bf16 %v385, %v384
      %v416 = vpack.c.bf16 %v387, %v386
      %v417 = vpack.c.bf16 %v389, %v388
      %v418 = vpack.c.bf16 %v391, %v390
      %v419 = vpack.c.bf16 %v393, %v392
      %v420 = vpack.c.bf16 %v395, %v394
      %v421 = vpack.c.bf16 %v397, %v396
      %v422 = vpack.c.bf16 %v399, %v398
      %v423 = vpack.c.bf16 %v401, %v400
      %v424 = vpack.c.bf16 %v403, %v402
      %v425 = vpack.c.bf16 %v405, %v404
      %v426 = vpack.c.bf16 %v407, %v406
      %v427 = vpack.c.bf16 %v409, %v408
      %v428 = vpack.c.bf16 %v411, %v410
      %v429 = vpack.c.bf16 %v413, %v412
      %v430 = vld [vmem:[%s3] sm:$0xf]
      %v431 = vld [vmem:[%s3 + $0x4] sm:$0xf]
      %v432 = vld [vmem:[%s3 + $0x8] sm:$0xf]
      %v433 = vld [vmem:[%s3 + $0xc] sm:$0xf]
      %v434 = vld [vmem:[%s3 + $0x10] sm:$0xf]
      %v435 = vld [vmem:[%s3 + $0x14] sm:$0xf]
      %v436 = vld [vmem:[%s3 + $0x18] sm:$0xf]
      %v437 = vld [vmem:[%s3 + $0x1c] sm:$0xf]
      %v438 = vld [vmem:[%s3 + $0x20] sm:$0xf]
      %v439 = vld [vmem:[%s3 + $0x24] sm:$0xf]
      %v440 = vld [vmem:[%s3 + $0x28] sm:$0xf]
      %v441 = vld [vmem:[%s3 + $0x2c] sm:$0xf]
      %v442 = vld [vmem:[%s3 + $0x30] sm:$0xf]
      %v443 = vld [vmem:[%s3 + $0x34] sm:$0xf]
      %v444 = vld [vmem:[%s3 + $0x38] sm:$0xf]
      %v445 = vld [vmem:[%s3 + $0x3c] sm:$0xf]
      %v462 = vunpack.c.l.b16 %v430
      %v463 = vunpack.c.l.b16 %v431
      %v464 = vunpack.c.l.b16 %v432
      %v465 = vunpack.c.l.b16 %v433
      %v466 = vunpack.c.l.b16 %v434
      %v467 = vunpack.c.l.b16 %v435
      %v468 = vunpack.c.l.b16 %v436
      %v469 = vunpack.c.l.b16 %v437
      %v470 = vunpack.c.l.b16 %v438
      %v471 = vunpack.c.l.b16 %v439
      %v472 = vunpack.c.l.b16 %v440
      %v473 = vunpack.c.l.b16 %v441
      %v474 = vunpack.c.l.b16 %v442
      %v475 = vunpack.c.l.b16 %v443
      %v476 = vunpack.c.l.b16 %v444
      %v477 = vunpack.c.l.b16 %v445
      %v478 = vpack.c.b16 %v463, %v462
      %v479 = vpack.c.b16 %v465, %v464
      %v480 = vpack.c.b16 %v467, %v466
      %v481 = vpack.c.b16 %v469, %v468
      %v482 = vpack.c.b16 %v471, %v470
      %v483 = vpack.c.b16 %v473, %v472
      %v484 = vpack.c.b16 %v475, %v474
      %v485 = vpack.c.b16 %v477, %v476
      %494 = vmatprep.subr.bf16.mxu0 0
      %495 = vmatpush1.bf16.msra.mxu0 %v478
      %496 = vmatprep.subr.bf16.mxu0 0
      %497 = vmatpush1.bf16.msra.mxu0 %v479
      %498 = vmatprep.subr.bf16.mxu0 0
      %499 = vmatpush1.bf16.msra.mxu0 %v480
      %500 = vmatprep.subr.bf16.mxu0 0
      %501 = vmatpush1.bf16.msra.mxu0 %v481
      %502 = vmatprep.subr.bf16.mxu0 0
      %503 = vmatpush1.bf16.msra.mxu0 %v482
      %504 = vmatprep.subr.bf16.mxu0 0
      %505 = vmatpush1.bf16.msra.mxu0 %v483
      %506 = vmatprep.subr.bf16.mxu0 0
      %507 = vmatpush1.bf16.msra.mxu0 %v484
      %508 = vmatprep.subr.bf16.mxu0 0
      %509 = vmatpush1.bf16.msra.mxu0 %v485
      %510 = vmatprep.subr.bf16.mxu0 0
      %511 = vmatpush1.bf16.msra.mxu0 0
      %512 = vmatprep.subr.bf16.mxu0 0
      %513 = vmatpush1.bf16.msra.mxu0 0
      %514 = vmatprep.subr.bf16.mxu0 0
      %515 = vmatpush1.bf16.msra.mxu0 0
      %516 = vmatprep.subr.bf16.mxu0 0
      %517 = vmatpush1.bf16.msra.mxu0 0
      %518 = vmatprep.subr.bf16.mxu0 0
      %519 = vmatpush1.bf16.msra.mxu0 0
      %520 = vmatprep.subr.bf16.mxu0 0
      %521 = vmatpush1.bf16.msra.mxu0 0
      %522 = vmatprep.subr.bf16.mxu0 0
      %523 = vmatpush1.bf16.msra.mxu0 0
      %524 = vmatprep.subr.bf16.mxu0 0
      %525 = vmatpush1.bf16.msra.mxu0 0
      %526 = vmatprep.mubr.bf16.mxu0 0
      %527 = vmatmul.mubr.bf16.gmra.mrb[0].mxu0 %v414
      %v528 = vpop.f32.mrb[0].mxu0
      %v529 = vadd.f32 0.0, %v528
      %v530 = vpop.f32.mrb[0].mxu0
      %v531 = vpop.f32.mrb[0].mxu0
      %v532 = vadd.f32 0.0, %v531
      %v533 = vpop.f32.mrb[0].mxu0
      %534 = vmatprep.mubr.bf16.mxu0 0
      %535 = vmatmul.mubr.bf16.gmra.mrb[0].mxu0 %v415
      %v536 = vpop.f32.mrb[0].mxu0
      %v537 = vadd.f32 0.0, %v536
      %v538 = vpop.f32.mrb[0].mxu0
      %v539 = vpop.f32.mrb[0].mxu0
      %v540 = vadd.f32 0.0, %v539
      %v541 = vpop.f32.mrb[0].mxu0
      %542 = vmatprep.mubr.bf16.mxu0 0
      %543 = vmatmul.mubr.bf16.gmra.mrb[0].mxu0 %v416
      %v544 = vpop.f32.mrb[0].mxu0
      %v545 = vadd.f32 0.0, %v544
      %v546 = vpop.f32.mrb[0].mxu0
      %v547 = vpop.f32.mrb[0].mxu0
      %v548 = vadd.f32 0.0, %v547
      %v549 = vpop.f32.mrb[0].mxu0
      %550 = vmatprep.mubr.bf16.mxu0 0
      %551 = vmatmul.mubr.bf16.gmra.mrb[0].mxu0 %v417
      %v552 = vpop.f32.mrb[0].mxu0
      %v553 = vadd.f32 0.0, %v552
      %v554 = vpop.f32.mrb[0].mxu0
      %v555 = vpop.f32.mrb[0].mxu0
      %v556 = vadd.f32 0.0, %v555
      %v557 = vpop.f32.mrb[0].mxu0
      %558 = vmatprep.mubr.bf16.mxu0 0
      %559 = vmatmul.mubr.bf16.gmra.mrb[0].mxu0 %v418
      %v560 = vpop.f32.mrb[0].mxu0
      %v561 = vadd.f32 0.0, %v560
      %v562 = vpop.f32.mrb[0].mxu0
      %v563 = vpop.f32.mrb[0].mxu0
      %v564 = vadd.f32 0.0, %v563
      %v565 = vpop.f32.mrb[0].mxu0
      %566 = vmatprep.mubr.bf16.mxu0 0
      %567 = vmatmul.mubr.bf16.gmra.mrb[0].mxu0 %v419
      %v568 = vpop.f32.mrb[0].mxu0
      %v569 = vadd.f32 0.0, %v568
      %v570 = vpop.f32.mrb[0].mxu0
      %v571 = vpop.f32.mrb[0].mxu0
      %v572 = vadd.f32 0.0, %v571
      %v573 = vpop.f32.mrb[0].mxu0
      %574 = vmatprep.mubr.bf16.mxu0 0
      %575 = vmatmul.mubr.bf16.gmra.mrb[0].mxu0 %v420
      %v576 = vpop.f32.mrb[0].mxu0
      %v577 = vadd.f32 0.0, %v576
      %v578 = vpop.f32.mrb[0].mxu0
      %v579 = vpop.f32.mrb[0].mxu0
      %v580 = vadd.f32 0.0, %v579
      %v581 = vpop.f32.mrb[0].mxu0
      %582 = vmatprep.mubr.bf16.mxu0 0
      %583 = vmatmul.mubr.bf16.gmra.mrb[0].mxu0 %v421
      %v584 = vpop.f32.mrb[0].mxu0
      %v585 = vadd.f32 0.0, %v584
      %v586 = vpop.f32.mrb[0].mxu0
      %v587 = vpop.f32.mrb[0].mxu0
      %v588 = vadd.f32 0.0, %v587
      %v589 = vpop.f32.mrb[0].mxu0
      %590 = vmatprep.mubr.bf16.mxu0 0
      %591 = vmatmul.mubr.bf16.gmra.mrb[0].mxu0 %v422
      %v592 = vpop.f32.mrb[0].mxu0
      %v593 = vadd.f32 0.0, %v592
      %v594 = vpop.f32.mrb[0].mxu0
      %v595 = vpop.f32.mrb[0].mxu0
      %v596 = vadd.f32 0.0, %v595
      %v597 = vpop.f32.mrb[0].mxu0
      %598 = vmatprep.mubr.bf16.mxu0 0
      %599 = vmatmul.mubr.bf16.gmra.mrb[0].mxu0 %v423
      %v600 = vpop.f32.mrb[0].mxu0
      %v601 = vadd.f32 0.0, %v600
      %v602 = vpop.f32.mrb[0].mxu0
      %v603 = vpop.f32.mrb[0].mxu0
      %v604 = vadd.f32 0.0, %v603
      %v605 = vpop.f32.mrb[0].mxu0
      %606 = vmatprep.mubr.bf16.mxu0 0
      %607 = vmatmul.mubr.bf16.gmra.mrb[0].mxu0 %v424
      %v608 = vpop.f32.mrb[0].mxu0
      %v609 = vadd.f32 0.0, %v608
      %v610 = vpop.f32.mrb[0].mxu0
      %v611 = vpop.f32.mrb[0].mxu0
      %v612 = vadd.f32 0.0, %v611
      %v613 = vpop.f32.mrb[0].mxu0
      %614 = vmatprep.mubr.bf16.mxu0 0
      %615 = vmatmul.mubr.bf16.gmra.mrb[0].mxu0 %v425
      %v616 = vpop.f32.mrb[0].mxu0
      %v617 = vadd.f32 0.0, %v616
      %v618 = vpop.f32.mrb[0].mxu0
      %v619 = vpop.f32.mrb[0].mxu0
      %v620 = vadd.f32 0.0, %v619
      %v621 = vpop.f32.mrb[0].mxu0
      %622 = vmatprep.mubr.bf16.mxu0 0
      %623 = vmatmul.mubr.bf16.gmra.mrb[0].mxu0 %v426
      %v624 = vpop.f32.mrb[0].mxu0
      %v625 = vadd.f32 0.0, %v624
      %v626 = vpop.f32.mrb[0].mxu0
      %v627 = vpop.f32.mrb[0].mxu0
      %v628 = vadd.f32 0.0, %v627
      %v629 = vpop.f32.mrb[0].mxu0
      %630 = vmatprep.mubr.bf16.mxu0 0
      %631 = vmatmul.mubr.bf16.gmra.mrb[0].mxu0 %v427
      %v632 = vpop.f32.mrb[0].mxu0
      %v633 = vadd.f32 0.0, %v632
      %v634 = vpop.f32.mrb[0].mxu0
      %v635 = vpop.f32.mrb[0].mxu0
      %v636 = vadd.f32 0.0, %v635
      %v637 = vpop.f32.mrb[0].mxu0
      %638 = vmatprep.mubr.bf16.mxu0 0
      %639 = vmatmul.mubr.bf16.gmra.mrb[0].mxu0 %v428
      %v640 = vpop.f32.mrb[0].mxu0
      %v641 = vadd.f32 0.0, %v640
      %v642 = vpop.f32.mrb[0].mxu0
      %v643 = vpop.f32.mrb[0].mxu0
      %v644 = vadd.f32 0.0, %v643
      %v645 = vpop.f32.mrb[0].mxu0
      %646 = vmatprep.mubr.bf16.mxu0 0
      %647 = vmatmul.mubr.bf16.gmra.mrb[0].mxu0 %v429
      %v648 = vpop.f32.mrb[0].mxu0
      %v649 = vadd.f32 0.0, %v648
      %v650 = vpop.f32.mrb[0].mxu0
      %v651 = vpop.f32.mrb[0].mxu0
      %v652 = vadd.f32 0.0, %v651
      %v653 = vpop.f32.mrb[0].mxu0
      %654 = vdwg.mxu0
      %v655 = vpack.c.bf16 %v532, %v529
      %v656 = vpack.c.bf16 %v540, %v537
      %v657 = vpack.c.bf16 %v548, %v545
      %v658 = vpack.c.bf16 %v556, %v553
      %v659 = vpack.c.bf16 %v564, %v561
      %v660 = vpack.c.bf16 %v572, %v569
      %v661 = vpack.c.bf16 %v580, %v577
      %v662 = vpack.c.bf16 %v588, %v585
      %v663 = vpack.c.bf16 %v596, %v593
      %v664 = vpack.c.bf16 %v604, %v601
      %v665 = vpack.c.bf16 %v612, %v609
      %v666 = vpack.c.bf16 %v620, %v617
      %v667 = vpack.c.bf16 %v628, %v625
      %v668 = vpack.c.bf16 %v636, %v633
      %v669 = vpack.c.bf16 %v644, %v641
      %v670 = vpack.c.bf16 %v652, %v649
      %v687 = vunpack.c.l.b16 %v655
      %v688 = vunpack.c.h.b16 %v655
      %v689 = vunpack.c.l.b16 %v656
      %v690 = vunpack.c.h.b16 %v656
      %v691 = vunpack.c.l.b16 %v657
      %v692 = vunpack.c.h.b16 %v657
      %v693 = vunpack.c.l.b16 %v658
      %v694 = vunpack.c.h.b16 %v658
      %v695 = vunpack.c.l.b16 %v659
      %v696 = vunpack.c.h.b16 %v659
      %v697 = vunpack.c.l.b16 %v660
      %v698 = vunpack.c.h.b16 %v660
      %v699 = vunpack.c.l.b16 %v661
      %v700 = vunpack.c.h.b16 %v661
      %v701 = vunpack.c.l.b16 %v662
      %v702 = vunpack.c.h.b16 %v662
      %v703 = vunpack.c.l.b16 %v663
      %v704 = vunpack.c.h.b16 %v663
      %v705 = vunpack.c.l.b16 %v664
      %v706 = vunpack.c.h.b16 %v664
      %v707 = vunpack.c.l.b16 %v665
      %v708 = vunpack.c.h.b16 %v665
      %v709 = vunpack.c.l.b16 %v666
      %v710 = vunpack.c.h.b16 %v666
      %v711 = vunpack.c.l.b16 %v667
      %v712 = vunpack.c.h.b16 %v667
      %v713 = vunpack.c.l.b16 %v668
      %v714 = vunpack.c.h.b16 %v668
      %v715 = vunpack.c.l.b16 %v669
      %v716 = vunpack.c.h.b16 %v669
      %v717 = vunpack.c.l.b16 %v670
      %v718 = vunpack.c.h.b16 %v670
      %v719 = vpack.c.b16 %v687, %v687
      %v720 = vpack.c.b16 %v688, %v688
      %v721 = vpack.c.b16 %v689, %v689
      %v722 = vpack.c.b16 %v690, %v690
      %v723 = vpack.c.b16 %v691, %v691
      %v724 = vpack.c.b16 %v692, %v692
      %v725 = vpack.c.b16 %v693, %v693
      %v726 = vpack.c.b16 %v694, %v694
      %v727 = vpack.c.b16 %v695, %v695
      %v728 = vpack.c.b16 %v696, %v696
      %v729 = vpack.c.b16 %v697, %v697
      %v730 = vpack.c.b16 %v698, %v698
      %v731 = vpack.c.b16 %v699, %v699
      %v732 = vpack.c.b16 %v700, %v700
      %v733 = vpack.c.b16 %v701, %v701
      %v734 = vpack.c.b16 %v702, %v702
      %v735 = vpack.c.b16 %v703, %v703
      %v736 = vpack.c.b16 %v704, %v704
      %v737 = vpack.c.b16 %v705, %v705
      %v738 = vpack.c.b16 %v706, %v706
      %v739 = vpack.c.b16 %v707, %v707
      %v740 = vpack.c.b16 %v708, %v708
      %v741 = vpack.c.b16 %v709, %v709
      %v742 = vpack.c.b16 %v710, %v710
      %v743 = vpack.c.b16 %v711, %v711
      %v744 = vpack.c.b16 %v712, %v712
      %v745 = vpack.c.b16 %v713, %v713
      %v746 = vpack.c.b16 %v714, %v714
      %v747 = vpack.c.b16 %v715, %v715
      %v748 = vpack.c.b16 %v716, %v716
      %v749 = vpack.c.b16 %v717, %v717
      %v750 = vpack.c.b16 %v718, %v718
      %783 = vst [vmem:[%s233] sm:$0xf] %v719
      %784 = vst [vmem:[%s233 + $0x4] sm:$0xf] %v720
      %785 = vst [vmem:[%s233 + $0x8] sm:$0xf] %v721
      %786 = vst [vmem:[%s233 + $0xc] sm:$0xf] %v722
      %787 = vst [vmem:[%s233 + $0x10] sm:$0xf] %v723
      %788 = vst [vmem:[%s233 + $0x14] sm:$0xf] %v724
      %789 = vst [vmem:[%s233 + $0x18] sm:$0xf] %v725
      %790 = vst [vmem:[%s233 + $0x1c] sm:$0xf] %v726
      %791 = vst [vmem:[%s233 + $0x20] sm:$0xf] %v727
      %792 = vst [vmem:[%s233 + $0x24] sm:$0xf] %v728
      %793 = vst [vmem:[%s233 + $0x28] sm:$0xf] %v729
      %794 = vst [vmem:[%s233 + $0x2c] sm:$0xf] %v730
      %795 = vst [vmem:[%s233 + $0x30] sm:$0xf] %v731
      %796 = vst [vmem:[%s233 + $0x34] sm:$0xf] %v732
      %797 = vst [vmem:[%s233 + $0x38] sm:$0xf] %v733
      %798 = vst [vmem:[%s233 + $0x3c] sm:$0xf] %v734
      %799 = vst [vmem:[%s233 + $0x40] sm:$0xf] %v735
      %800 = vst [vmem:[%s233 + $0x44] sm:$0xf] %v736
      %801 = vst [vmem:[%s233 + $0x48] sm:$0xf] %v737
      %802 = vst [vmem:[%s233 + $0x4c] sm:$0xf] %v738
      %803 = vst [vmem:[%s233 + $0x50] sm:$0xf] %v739
      %804 = vst [vmem:[%s233 + $0x54] sm:$0xf] %v740
      %805 = vst [vmem:[%s233 + $0x58] sm:$0xf] %v741
      %806 = vst [vmem:[%s233 + $0x5c] sm:$0xf] %v742
      %807 = vst [vmem:[%s233 + $0x60] sm:$0xf] %v743
      %808 = vst [vmem:[%s233 + $0x64] sm:$0xf] %v744
      %809 = vst [vmem:[%s233 + $0x68] sm:$0xf] %v745
      %810 = vst [vmem:[%s233 + $0x6c] sm:$0xf] %v746
      %811 = vst [vmem:[%s233 + $0x70] sm:$0xf] %v747
      %812 = vst [vmem:[%s233 + $0x74] sm:$0xf] %v748
      %813 = vst [vmem:[%s233 + $0x78] sm:$0xf] %v749
      %814 = vst [vmem:[%s233 + $0x7c] sm:$0xf] %v750
      %v815 = vunpack.c.l.bf16 %v655
      %v816 = vunpack.c.h.bf16 %v655
      %v817 = vunpack.c.l.bf16 %v656
      %v818 = vunpack.c.h.bf16 %v656
      %v819 = vunpack.c.l.bf16 %v657
      %v820 = vunpack.c.h.bf16 %v657
      %v821 = vunpack.c.l.bf16 %v658
      %v822 = vunpack.c.h.bf16 %v658
      %v823 = vunpack.c.l.bf16 %v659
      %v824 = vunpack.c.h.bf16 %v659
      %v825 = vunpack.c.l.bf16 %v660
      %v826 = vunpack.c.h.bf16 %v660
      %v827 = vunpack.c.l.bf16 %v661
      %v828 = vunpack.c.h.bf16 %v661
      %v829 = vunpack.c.l.bf16 %v662
      %v830 = vunpack.c.h.bf16 %v662
      %v831 = vunpack.c.l.bf16 %v663
      %v832 = vunpack.c.h.bf16 %v663
      %v833 = vunpack.c.l.bf16 %v664
      %v834 = vunpack.c.h.bf16 %v664
      %v835 = vunpack.c.l.bf16 %v665
      %v836 = vunpack.c.h.bf16 %v665
      %v837 = vunpack.c.l.bf16 %v666
      %v838 = vunpack.c.h.bf16 %v666
      %v839 = vunpack.c.l.bf16 %v667
      %v840 = vunpack.c.h.bf16 %v667
      %v841 = vunpack.c.l.bf16 %v668
      %v842 = vunpack.c.h.bf16 %v668
      %v843 = vunpack.c.l.bf16 %v669
      %v844 = vunpack.c.h.bf16 %v669
      %v845 = vunpack.c.l.bf16 %v670
      %v846 = vunpack.c.h.bf16 %v670
      %v847 = vadd.f32 %v815, %v816
      %v848 = vadd.f32 %v847, %v817
      %v849 = vadd.f32 %v848, %v818
      %v850 = vadd.f32 %v849, %v819
      %v851 = vadd.f32 %v850, %v820
      %v852 = vadd.f32 %v851, %v821
      %v853 = vadd.f32 %v852, %v822
      %v854 = vadd.f32 %v853, %v823
      %v855 = vadd.f32 %v854, %v824
      %v856 = vadd.f32 %v855, %v825
      %v857 = vadd.f32 %v856, %v826
      %v858 = vadd.f32 %v857, %v827
      %v859 = vadd.f32 %v858, %v828
      %v860 = vadd.f32 %v859, %v829
      %v861 = vadd.f32 %v860, %v830
      %v862 = vadd.f32 %v861, %v831
      %v863 = vadd.f32 %v862, %v832
      %v864 = vadd.f32 %v863, %v833
      %v865 = vadd.f32 %v864, %v834
      %v866 = vadd.f32 %v865, %v835
      %v867 = vadd.f32 %v866, %v836
      %v868 = vadd.f32 %v867, %v837
      %v869 = vadd.f32 %v868, %v838
      %v870 = vadd.f32 %v869, %v839
      %v871 = vadd.f32 %v870, %v840
      %v872 = vadd.f32 %v871, %v841
      %v873 = vadd.f32 %v872, %v842
      %v874 = vadd.f32 %v873, %v843
      %v875 = vadd.f32 %v874, %v844
      %v876 = vadd.f32 %v875, %v845
      %v877 = vadd.f32 %v876, %v846
      %v878 = vrot.slane %v877, 4
      %v879 = vadd.f32 %v877, %v878
      %v880 = vrot.slane %v879, 2
      %v881 = vadd.f32 %v879, %v880
      %v882 = vrot.slane %v881, 1
      %v883 = vadd.f32 %v881, %v882
      %884 = vst [vmem:[%s238] sm:$0x1] %v883
      %v885 = vmul.f32 %v815, %v815
      %v886 = vmul.f32 %v816, %v816
      %v887 = vmul.f32 %v817, %v817
      %v888 = vmul.f32 %v818, %v818
      %v889 = vmul.f32 %v819, %v819
      %v890 = vmul.f32 %v820, %v820
      %v891 = vmul.f32 %v821, %v821
      %v892 = vmul.f32 %v822, %v822
      %v893 = vmul.f32 %v823, %v823
      %v894 = vmul.f32 %v824, %v824
      %v895 = vmul.f32 %v825, %v825
      %v896 = vmul.f32 %v826, %v826
      %v897 = vmul.f32 %v827, %v827
      %v898 = vmul.f32 %v828, %v828
      %v899 = vmul.f32 %v829, %v829
      %v900 = vmul.f32 %v830, %v830
      %v901 = vmul.f32 %v831, %v831
      %v902 = vmul.f32 %v832, %v832
      %v903 = vmul.f32 %v833, %v833
      %v904 = vmul.f32 %v834, %v834
      %v905 = vmul.f32 %v835, %v835
      %v906 = vmul.f32 %v836, %v836
      %v907 = vmul.f32 %v837, %v837
      %v908 = vmul.f32 %v838, %v838
      %v909 = vmul.f32 %v839, %v839
      %v910 = vmul.f32 %v840, %v840
      %v911 = vmul.f32 %v841, %v841
      %v912 = vmul.f32 %v842, %v842
      %v913 = vmul.f32 %v843, %v843
      %v914 = vmul.f32 %v844, %v844
      %v915 = vmul.f32 %v845, %v845
      %v916 = vmul.f32 %v846, %v846
      %v917 = vadd.f32 %v885, %v886
      %v918 = vadd.f32 %v917, %v887
      %v919 = vadd.f32 %v918, %v888
      %v920 = vadd.f32 %v919, %v889
      %v921 = vadd.f32 %v920, %v890
      %v922 = vadd.f32 %v921, %v891
      %v923 = vadd.f32 %v922, %v892
      %v924 = vadd.f32 %v923, %v893
      %v925 = vadd.f32 %v924, %v894
      %v926 = vadd.f32 %v925, %v895
      %v927 = vadd.f32 %v926, %v896
      %v928 = vadd.f32 %v927, %v897
      %v929 = vadd.f32 %v928, %v898
      %v930 = vadd.f32 %v929, %v899
      %v931 = vadd.f32 %v930, %v900
      %v932 = vadd.f32 %v931, %v901
      %v933 = vadd.f32 %v932, %v902
      %v934 = vadd.f32 %v933, %v903
      %v935 = vadd.f32 %v934, %v904
      %v936 = vadd.f32 %v935, %v905
      %v937 = vadd.f32 %v936, %v906
      %v938 = vadd.f32 %v937, %v907
      %v939 = vadd.f32 %v938, %v908
      %v940 = vadd.f32 %v939, %v909
      %v941 = vadd.f32 %v940, %v910
      %v942 = vadd.f32 %v941, %v911
      %v943 = vadd.f32 %v942, %v912
      %v944 = vadd.f32 %v943, %v913
      %v945 = vadd.f32 %v944, %v914
      %v946 = vadd.f32 %v945, %v915
      %v947 = vadd.f32 %v946, %v916
      %v948 = vrot.slane %v947, 4
      %v949 = vadd.f32 %v947, %v948
      %v950 = vrot.slane %v949, 2
      %v951 = vadd.f32 %v949, %v950
      %v952 = vrot.slane %v951, 1
      %v953 = vadd.f32 %v951, %v952
      %954 = vst [vmem:[%s238 + $0x1] sm:$0x1] %v953
      %s955 = smul.u32 32, %s17
      %p956 = scmp.lt.s32.totalorder %s955, 63
      %s957 = scalar_select %p956, %s955, 63
      %s958 = smul.addr %s957, 4
      %s959 = scalar_lea.vmem %s4, %s958
      %p960 = scmp.lt.s32.totalorder %s17, 1
      %s961 = scalar_select %p960, %s17, 1
      %s962 = smul.addr %s961, 2
      %s963 = scalar_lea.vmem %s5, %s962
      // Predicated region
      $region37: #{bottleneck_forward.6} parent=35 // pred_check
        %p964 = pneg %p124
      $region38: #{bottleneck_forward.6} parent=35 // pred_check_branch
        %966 = sbr.rel (%p964) target = $region40
      $region39: #{bottleneck_forward.6} parent=35 // pred_region
        %s967 = smul.u32 32, %s17
      $region40: #{bottleneck_forward.6} parent=35 // pred_fallthru
        _
      // Predicated region
      $region41: #{bottleneck_forward.6} parent=35 // pred_check
        %p968 = pneg %p150
      $region42: #{bottleneck_forward.6} parent=35 // pred_check_branch
        %970 = sbr.rel (%p968) target = $region44
      $region43: #{bottleneck_forward.6} parent=35 // pred_region
        _
      $region44: #{bottleneck_forward.6} parent=35 // pred_fallthru
        _
    $region36: #{bottleneck_forward.6} parent=5 // pred_fallthru
      _
    %p971 = scmp.le.s32.totalorder 2, %s12
    // Predicated region
    $region45: #{bottleneck_forward.6} parent=5 // pred_check
      %p972 = pneg %p971
    $region46: #{bottleneck_forward.6} parent=5 // pred_check_branch
      %974 = sbr.rel (%p972) target = $region48
    $region47: #{bottleneck_forward.6} parent=5 // pred_region
      %s975 = ssub.s32 %s12, 2
      // Predicated region
      $region49: #{bottleneck_forward.6} parent=47 // pred_check
        %p976 = pneg %p130
      $region50: #{bottleneck_forward.6} parent=47 // pred_check_branch
        %978 = sbr.rel (%p976) target = $region52
      $region51: #{bottleneck_forward.6} parent=47 // pred_region
        %s979 = smul.u32 32, %s18
        %p980 = scmp.lt.s32.totalorder %s979, 63
        %s981 = scalar_select %p980, %s979, 63
        %s982 = smul.addr %s981, 4
        %s983 = scalar_lea.vmem %s4, %s982
      $region52: #{bottleneck_forward.6} parent=47 // pred_fallthru
        _
      // Predicated region
      $region53: #{bottleneck_forward.6} parent=47 // pred_check
        %p984 = pneg %p156
      $region54: #{bottleneck_forward.6} parent=47 // pred_check_branch
        %986 = sbr.rel (%p984) target = $region56
      $region55: #{bottleneck_forward.6} parent=47 // pred_region
        %p987 = scmp.lt.s32.totalorder %s18, 1
        %s988 = scalar_select %p987, %s18, 1
        %s989 = smul.addr %s988, 2
        %s990 = scalar_lea.vmem %s5, %s989
      $region56: #{bottleneck_forward.6} parent=47 // pred_fallthru
        _
    $region48: #{bottleneck_forward.6} parent=5 // pred_fallthru
      _
  $region6: #{bottleneck_forward.6} parent=0 // loop_footer
    %s16 = sadd.s32 1, %s12
  $region7: #{bottleneck_forward.6} parent=0 // loop_footer_branch
    %11 = sbr.rel target = $region3
  $region8: #{bottleneck_forward.6} parent=0 // loop_exit
    _

// kernel: bottleneck_forward.5
$region0: #{bottleneck_forward.5}
  #allocation0 [shape = 'u32[]', space=smem, size = 0x4, offset = 0x4, fixed_abs, tag = 'smem constant byte address 0x4 - core index']
  #allocation1 [shape = 'u32[144,128]{1,0:T(1,128)}', space=vmem, size = 0x12000, scoped, tag = 'internal scratch']
  #allocation2 [shape = 'bf16[10,18,128]{2,1,0:T(8,128)(2,1)}', space=vmem, size = 0xf000, scoped, tag = 'scratch operand']
  %s0 = inlined_call_operand.vmem [shape: bf16[2,16,16,128], index: 0, kind: input, shape index: {}]
  %s1 = inlined_call_operand.vmem [shape: f32[1,128], index: 1, kind: input, shape index: {}]
  %s2 = inlined_call_operand.vmem [shape: f32[1,128], index: 2, kind: input, shape index: {}]
  %s3 = inlined_call_operand.vmem [shape: bf16[1152,128], index: 3, kind: input, shape index: {}]
  %s4 = inlined_call_operand.vmem [shape: bf16[2,16,16,128], index: 4, kind: output, shape index: {0}]
  %s5 = inlined_call_operand.vmem [shape: f32[2,2,2,128], index: 5, kind: output, shape index: {1}]
  %6 = xla_tuple %s4, %s5
  %s7 = sld [smem:[#allocation0]]
  $region57: #{bottleneck_forward.5} parent=0
    _
  %s9 = ssub.s32 1, %s7
  %s10 = scalar_select 0, %s9, %s7
  loop: start=0, step=1, limit=6
  $region2: #{bottleneck_forward.5} parent=0 // loop_pre_header
    _
  $region3: #{bottleneck_forward.5} parent=0 // loop_header
    %s12 = sphi 0, %s16
    %p13 = scmp.ge.s32.totalorder %s12, 6
    %s19 = sphi 0, %s31
    %s20 = sphi 0, %s27
    %s21 = sphi 0, %s19
    %s22 = sphi 0, %s20
    %s23 = sphi 0, %s21
    %s24 = sphi 0, %s22
    %s34 = sphi 0, %s36
    %s37 = sphi 0, %s34
    %s38 = sphi 0, %s37
    %s54 = sphi 0, %s38
    %s58 = sphi 0, %s58
    %s60 = sphi 0, %s58
    %s61 = sphi 0, %s60
    %s75 = sphi 0, %s61
    %s79 = sphi 0, %s79
    %s81 = sphi 0, %s79
    %s82 = sphi 0, %s81
    %s96 = sphi 0, %s82
    %s100 = sphi 0, %s100
    %s102 = sphi 0, %s100
    %s103 = sphi 0, %s102
    %s117 = sphi 0, %s103
    %s125 = sphi 0, %s127
    %s128 = sphi 0, %s125
    %s129 = sphi 0, %s128
    %s145 = sphi 0, %s129
    %s153 = sphi 0, %s155
    %s156 = sphi 0, %s153
    %s157 = sphi 0, %s156
    %s173 = sphi 0, %s157
  $region4: #{bottleneck_forward.5} parent=0 // loop_header_branch
    %15 = sbr.rel (%p13) target = $region8
  $region5: #{bottleneck_forward.5} parent=0 // loop_body
    %s17 = ssub.s32 %s12, 1
    %s18 = ssub.s32 %s12, 2
    %s25 = sadd.s32 1, %s20
    %p26 = scmp.ge.s32.totalorder %s25, 2
    %s27 = scalar_select %p26, 0, %s25
    %s28 = sadd.s32 1, %s19
    %s29 = scalar_select %p26, %s28, %s19
    %p30 = scmp.ge.s32.totalorder %s29, 2
    %s31 = scalar_select %p30, 0, %s29
    %s32 = ssub.s32 %s19, %s31
    %p33 = scmp.eq.s32.totalorder %s32, 0
    %s35 = sadd.s32 %s34, 1
    %s36 = scalar_select %p33, %s34, %s35
    %p39 = pneg %p33
    %p40 = scmp.eq.s32.totalorder %s12, 3
    %p41 = por %p39, %p40
    %p42 = scmp.ne.s32.totalorder %s34, %s37
    %p43 = scmp.eq.s32.totalorder %s12, 0
    %p44 = por %p42, %p43
    %p45 = scmp.ne.s32.totalorder %s34, %s37
    %p46 = scmp.eq.s32.totalorder %s17, 3
    %p47 = por %p45, %p46
    %p48 = scmp.ne.s32.totalorder %s37, %s38
    %p49 = scmp.eq.s32.totalorder %s17, 0
    %p50 = por %p48, %p49
    %p51 = scmp.ne.s32.totalorder %s37, %s38
    %p52 = scmp.eq.s32.totalorder %s18, 3
    %p53 = por %p51, %p52
    %p55 = scmp.ne.s32.totalorder %s38, %s54
    %p56 = scmp.eq.s32.totalorder %s18, 0
    %p57 = por %p55, %p56
    %s59 = sadd.s32 %s58, 1
    %p62 = scmp.eq.s32.totalorder %s12, 3
    %p63 = scmp.ne.s32.totalorder %s58, %s60
    %p64 = scmp.eq.s32.totalorder %s12, 0
    %p65 = por %p63, %p64
    %p66 = scmp.ne.s32.totalorder %s58, %s60
    %p67 = scmp.eq.s32.totalorder %s17, 3
    %p68 = por %p66, %p67
    %p69 = scmp.ne.s32.totalorder %s60, %s61
    %p70 = scmp.eq.s32.totalorder %s17, 0
    %p71 = por %p69, %p70
    %p72 = scmp.ne.s32.totalorder %s60, %s61
    %p73 = scmp.eq.s32.totalorder %s18, 3
    %p74 = por %p72, %p73
    %p76 = scmp.ne.s32.totalorder %s61, %s75
    %p77 = scmp.eq.s32.totalorder %s18, 0
    %p78 = por %p76, %p77
    %s80 = sadd.s32 %s79, 1
    %p83 = scmp.eq.s32.totalorder %s12, 3
    %p84 = scmp.ne.s32.totalorder %s79, %s81
    %p85 = scmp.eq.s32.totalorder %s12, 0
    %p86 = por %p84, %p85
    %p87 = scmp.ne.s32.totalorder %s79, %s81
    %p88 = scmp.eq.s32.totalorder %s17, 3
    %p89 = por %p87, %p88
    %p90 = scmp.ne.s32.totalorder %s81, %s82
    %p91 = scmp.eq.s32.totalorder %s17, 0
    %p92 = por %p90, %p91
    %p93 = scmp.ne.s32.totalorder %s81, %s82
    %p94 = scmp.eq.s32.totalorder %s18, 3
    %p95 = por %p93, %p94
    %p97 = scmp.ne.s32.totalorder %s82, %s96
    %p98 = scmp.eq.s32.totalorder %s18, 0
    %p99 = por %p97, %p98
    %s101 = sadd.s32 %s100, 1
    %p104 = scmp.eq.s32.totalorder %s12, 3
    %p105 = scmp.ne.s32.totalorder %s100, %s102
    %p106 = scmp.eq.s32.totalorder %s12, 0
    %p107 = por %p105, %p106
    %p108 = scmp.ne.s32.totalorder %s100, %s102
    %p109 = scmp.eq.s32.totalorder %s17, 3
    %p110 = por %p108, %p109
    %p111 = scmp.ne.s32.totalorder %s102, %s103
    %p112 = scmp.eq.s32.totalorder %s17, 0
    %p113 = por %p111, %p112
    %p114 = scmp.ne.s32.totalorder %s102, %s103
    %p115 = scmp.eq.s32.totalorder %s18, 3
    %p116 = por %p114, %p115
    %p118 = scmp.ne.s32.totalorder %s103, %s117
    %p119 = scmp.eq.s32.totalorder %s18, 0
    %p120 = por %p118, %p119
    %s121 = ssub.s32 %s19, %s31
    %s122 = ssub.s32 %s20, %s27
    %s123 = sor.u32 %s121, %s122
    %p124 = scmp.eq.s32.totalorder %s123, 0
    %s126 = sadd.s32 %s125, 1
    %s127 = scalar_select %p124, %s125, %s126
    %p130 = pneg %p124
    %p131 = scmp.eq.s32.totalorder %s12, 3
    %p132 = por %p130, %p131
    %p133 = scmp.ne.s32.totalorder %s125, %s128
    %p134 = scmp.eq.s32.totalorder %s12, 0
    %p135 = por %p133, %p134
    %p136 = scmp.ne.s32.totalorder %s125, %s128
    %p137 = scmp.eq.s32.totalorder %s17, 3
    %p138 = por %p136, %p137
    %p139 = scmp.ne.s32.totalorder %s128, %s129
    %p140 = scmp.eq.s32.totalorder %s17, 0
    %p141 = por %p139, %p140
    %p142 = scmp.ne.s32.totalorder %s128, %s129
    %p143 = scmp.eq.s32.totalorder %s18, 3
    %p144 = por %p142, %p143
    %p146 = scmp.ne.s32.totalorder %s129, %s145
    %p147 = scmp.eq.s32.totalorder %s18, 0
    %p148 = por %p146, %p147
    %s149 = ssub.s32 %s19, %s31
    %s150 = ssub.s32 %s20, %s27
    %s151 = sor.u32 %s149, %s150
    %p152 = scmp.eq.s32.totalorder %s151, 0
    %s154 = sadd.s32 %s153, 1
    %s155 = scalar_select %p152, %s153, %s154
    %p158 = pneg %p152
    %p159 = scmp.eq.s32.totalorder %s12, 3
    %p160 = por %p158, %p159
    %p161 = scmp.ne.s32.totalorder %s153, %s156
    %p162 = scmp.eq.s32.totalorder %s12, 0
    %p163 = por %p161, %p162
    %p164 = scmp.ne.s32.totalorder %s153, %s156
    %p165 = scmp.eq.s32.totalorder %s17, 3
    %p166 = por %p164, %p165
    %p167 = scmp.ne.s32.totalorder %s156, %s157
    %p168 = scmp.eq.s32.totalorder %s17, 0
    %p169 = por %p167, %p168
    %p170 = scmp.ne.s32.totalorder %s156, %s157
    %p171 = scmp.eq.s32.totalorder %s18, 3
    %p172 = por %p170, %p171
    %p174 = scmp.ne.s32.totalorder %s157, %s173
    %p175 = scmp.eq.s32.totalorder %s18, 0
    %p176 = por %p174, %p175
    %p177 = scmp.le.s32.totalorder 1, %s12
    %p178 = scmp.lt.s32.totalorder %s12, 5
    %p179 = pnand %p177, %p178
    %p180 = pneg %p179
    // Predicated region
    $region9: #{bottleneck_forward.5} parent=5 // pred_check
      _
    $region10: #{bottleneck_forward.5} parent=5 // pred_check_branch
      %182 = sbr.rel (%p179) target = $region12
    $region11: #{bottleneck_forward.5} parent=5 // pred_region
      %s183 = ssub.s32 %s12, 1
      // Predicated region
      $region13: #{bottleneck_forward.5} parent=11 // pred_check
        %p184 = pneg %p71
      $region14: #{bottleneck_forward.5} parent=11 // pred_check_branch
        %186 = sbr.rel (%p184) target = $region16
      $region15: #{bottleneck_forward.5} parent=11 // pred_region
        _
      $region16: #{bottleneck_forward.5} parent=11 // pred_fallthru
        _
      // Predicated region
      $region17: #{bottleneck_forward.5} parent=11 // pred_check
        %p187 = pneg %p92
      $region18: #{bottleneck_forward.5} parent=11 // pred_check_branch
        %189 = sbr.rel (%p187) target = $region20
      $region19: #{bottleneck_forward.5} parent=11 // pred_region
        _
      $region20: #{bottleneck_forward.5} parent=11 // pred_fallthru
        _
      // Predicated region
      $region21: #{bottleneck_forward.5} parent=11 // pred_check
        %p190 = pneg %p113
      $region22: #{bottleneck_forward.5} parent=11 // pred_check_branch
        %192 = sbr.rel (%p190) target = $region24
      $region23: #{bottleneck_forward.5} parent=11 // pred_region
        _
      $region24: #{bottleneck_forward.5} parent=11 // pred_fallthru
        _
    $region12: #{bottleneck_forward.5} parent=5 // pred_fallthru
      _
    %p193 = scmp.lt.s32.totalorder %s12, 4
    // Predicated region
    $region25: #{bottleneck_forward.5} parent=5 // pred_check
      %p194 = pneg %p193
    $region26: #{bottleneck_forward.5} parent=5 // pred_check_branch
      %196 = sbr.rel (%p194) target = $region28
    $region27: #{bottleneck_forward.5} parent=5 // pred_region
      // Predicated region
      $region29: #{bottleneck_forward.5} parent=27 // pred_check
        %p197 = pneg %p44
      $region30: #{bottleneck_forward.5} parent=27 // pred_check_branch
        %199 = sbr.rel (%p197) target = $region32
      $region31: #{bottleneck_forward.5} parent=27 // pred_region
        %p200 = scmp.lt.s32.totalorder %s19, 1
        %s201 = scalar_select %p200, %s19, 1
        %s202 = smul.addr %s201, 32
        %s203 = smul.addr %s202, 4
        %s204 = scalar_lea.vmem %s0, %s203
      $region32: #{bottleneck_forward.5} parent=27 // pred_fallthru
        _
    $region28: #{bottleneck_forward.5} parent=5 // pred_fallthru
      _
    %p205 = scmp.le.s32.totalorder 1, %s12
    %p206 = scmp.lt.s32.totalorder %s12, 5
    %p207 = pnand %p205, %p206
    %p208 = pneg %p207
    // Predicated region
    $region33: #{bottleneck_forward.5} parent=5 // pred_check
      _
    $region34: #{bottleneck_forward.5} parent=5 // pred_check_branch
      %210 = sbr.rel (%p207) target = $region36
    $region35: #{bottleneck_forward.5} parent=5 // pred_region
      %s211 = ssub.s32 %s12, 1
      %p212 = scmp.lt.s32.totalorder %s21, 1
      %s213 = scalar_select %p212, %s21, 1
      %s214 = smul.addr %s213, 32
      %s215 = smul.addr %s214, 4
      %s216 = scalar_lea.vmem %s0, %s215
      %p217 = pneg %p50
      %p218 = pneg %p47
      %p219 = pneg %p71
      %p220 = pneg %p68
      %p221 = pneg %p92
      %p222 = pneg %p89
      %p223 = pneg %p113
      %p224 = pneg %p110
      %p225 = pneg %p141
      %p226 = pneg %p138
      %s227 = smul.u32 8, %s22
      %p228 = scmp.lt.s32.totalorder %s21, 1
      %s229 = scalar_select %p228, %s21, 1
      %p230 = scmp.lt.s32.totalorder %s227, 15
      %s231 = scalar_select %p230, %s227, 15
      %s232 = smul.addr %s231, 2
      %s233 = smul.addr %s229, 32
      %s234 = sadd.s32 %s232, %s233
      %s235 = smul.addr %s234, 4
      %s236 = scalar_lea.vmem %s4, %s235
      %p237 = pneg %p169
      %p238 = pneg %p166
      %p239 = scmp.lt.s32.totalorder %s21, 1
      %s240 = scalar_select %p239, %s21, 1
      %p241 = scmp.lt.s32.totalorder %s22, 1
      %s242 = scalar_select %p241, %s22, 1
      %s243 = smul.addr %s240, 2
      %s244 = sadd.s32 %s242, %s243
      %s245 = smul.addr %s244, 2
      %s246 = scalar_lea.vmem %s5, %s245
      %p247 = scmp.lt.s32.totalorder %s21, 1
      %s248 = scalar_select %p247, %s21, 1
      %s249 = smul.addr %s248, 32
      %s250 = smul.addr %s249, 4
      %s251 = scalar_lea.vmem %s0, %s250
      %s252 = smul.u32 8, %s22
      %p253 = scmp.lt.s32.totalorder %s21, 1
      %s254 = scalar_select %p253, %s21, 1
      %p255 = scmp.lt.s32.totalorder %s252, 15
      %s256 = scalar_select %p255, %s252, 15
      %s257 = smul.addr %s256, 2
      %s258 = smul.addr %s254, 32
      %s259 = sadd.s32 %s257, %s258
      %s260 = smul.addr %s259, 4
      %s261 = scalar_lea.vmem %s4, %s260
      %s262 = smul.u32 8, %s22
      %p263 = scmp.lt.s32.totalorder %s21, 1
      %s264 = scalar_select %p263, %s21, 1
      %p265 = scmp.lt.s32.totalorder %s22, 1
      %s266 = scalar_select %p265, %s22, 1
      %s267 = smul.addr %s264, 2
      %s268 = sadd.s32 %s266, %s267
      %s269 = smul.addr %s268, 2
      %s270 = scalar_lea.vmem %s5, %s269
      %v272 = vld [vmem:[%s1] sm:$0x1]
      %v273 = vld [vmem:[%s2] sm:$0x1]
      %s274 = smul.u32 %s22, 8
      %s275 = smul.u32 %s274, 2
      %s276 = smul.addr %s275, 4
      %s277 = scalar_lea.vmem %s251, %s276
      %v278 = vld [vmem:[%s277] sm:$0xf]
      %v279 = vld [vmem:[%s277 + $0x4] sm:$0xf]
      %v280 = vld [vmem:[%s277 + $0x8] sm:$0xf]
      %v281 = vld [vmem:[%s277 + $0xc] sm:$0xf]
      %v282 = vld [vmem:[%s277 + $0x10] sm:$0xf]
      %v283 = vld [vmem:[%s277 + $0x14] sm:$0xf]
      %v284 = vld [vmem:[%s277 + $0x18] sm:$0xf]
      %v285 = vld [vmem:[%s277 + $0x1c] sm:$0xf]
      %v286 = vld [vmem:[%s277 + $0x20] sm:$0xf]
      %v287 = vld [vmem:[%s277 + $0x24] sm:$0xf]
      %v288 = vld [vmem:[%s277 + $0x28] sm:$0xf]
      %v289 = vld [vmem:[%s277 + $0x2c] sm:$0xf]
      %v290 = vld [vmem:[%s277 + $0x30] sm:$0xf]
      %v291 = vld [vmem:[%s277 + $0x34] sm:$0xf]
      %v292 = vld [vmem:[%s277 + $0x38] sm:$0xf]
      %v293 = vld [vmem:[%s277 + $0x3c] sm:$0xf]
      %v294 = vunpack.c.l.bf16 %v278
      %v295 = vunpack.c.l.bf16 %v279
      %v296 = vunpack.c.l.bf16 %v280
      %v297 = vunpack.c.l.bf16 %v281
      %v298 = vunpack.c.l.bf16 %v282
      %v299 = vunpack.c.l.bf16 %v283
      %v300 = vunpack.c.l.bf16 %v284
      %v301 = vunpack.c.l.bf16 %v285
      %v302 = vunpack.c.l.bf16 %v286
      %v303 = vunpack.c.l.bf16 %v287
      %v304 = vunpack.c.l.bf16 %v288
      %v305 = vunpack.c.l.bf16 %v289
      %v306 = vunpack.c.l.bf16 %v290
      %v307 = vunpack.c.l.bf16 %v291
      %v308 = vunpack.c.l.bf16 %v292
      %v309 = vunpack.c.l.bf16 %v293
      %v311 = vlaneseq
      %v312 = vshrl.u32 %v311, 7
      %v313 = vsub.s32 0, %v312
      %v314 = vrot.slane %v272, %v313
      %v316 = vmul.f32 %v294, %v314
      %v317 = vmul.f32 %v295, %v314
      %v318 = vmul.f32 %v296, %v314
      %v319 = vmul.f32 %v297, %v314
      %v320 = vmul.f32 %v298, %v314
      %v321 = vmul.f32 %v299, %v314
      %v322 = vmul.f32 %v300, %v314
      %v323 = vmul.f32 %v301, %v314
      %v324 = vmul.f32 %v302, %v314
      %v325 = vmul.f32 %v303, %v314
      %v326 = vmul.f32 %v304, %v314
      %v327 = vmul.f32 %v305, %v314
      %v328 = vmul.f32 %v306, %v314
      %v329 = vmul.f32 %v307, %v314
      %v330 = vmul.f32 %v308, %v314
      %v331 = vmul.f32 %v309, %v314
      %v333 = vlaneseq
      %v334 = vshrl.u32 %v333, 7
      %v335 = vsub.s32 0, %v334
      %v336 = vrot.slane %v273, %v335
      %v338 = vadd.f32 %v316, %v336
      %v339 = vadd.f32 %v317, %v336
      %v340 = vadd.f32 %v318, %v336
      %v341 = vadd.f32 %v319, %v336
      %v342 = vadd.f32 %v320, %v336
      %v343 = vadd.f32 %v321, %v336
      %v344 = vadd.f32 %v322, %v336
      %v345 = vadd.f32 %v323, %v336
      %v346 = vadd.f32 %v324, %v336
      %v347 = vadd.f32 %v325, %v336
      %v348 = vadd.f32 %v326, %v336
      %v349 = vadd.f32 %v327, %v336
      %v350 = vadd.f32 %v328, %v336
      %v351 = vadd.f32 %v329, %v336
      %v352 = vadd.f32 %v330, %v336
      %v353 = vadd.f32 %v331, %v336
      %v354 = vmax.f32 %v338, 0.0
      %v355 = vmax.f32 %v339, 0.0
      %v356 = vmax.f32 %v340, 0.0
      %v357 = vmax.f32 %v341, 0.0
      %v358 = vmax.f32 %v342, 0.0
      %v359 = vmax.f32 %v343, 0.0
      %v360 = vmax.f32 %v344, 0.0
      %v361 = vmax.f32 %v345, 0.0
      %v362 = vmax.f32 %v346, 0.0
      %v363 = vmax.f32 %v347, 0.0
      %v364 = vmax.f32 %v348, 0.0
      %v365 = vmax.f32 %v349, 0.0
      %v366 = vmax.f32 %v350, 0.0
      %v367 = vmax.f32 %v351, 0.0
      %v368 = vmax.f32 %v352, 0.0
      %v369 = vmax.f32 %v353, 0.0
      %s370 = ssub.s32 %s274, 1
      %p371 = scmp.gt.s32.totalorder %s370, 0
      %s372 = scalar_select %p371, %s370, 0
      %s373 = smul.u32 %s372, 2
      %s374 = smul.addr %s373, 4
      %s375 = scalar_lea.vmem %s251, %s374
      %v376 = vld [vmem:[%s375] sm:$0xf]
      %v377 = vld [vmem:[%s375 + $0x4] sm:$0xf]
      %v378 = vunpack.c.l.bf16 %v376
      %v379 = vunpack.c.l.bf16 %v377
      %v380 = vmul.f32 %v378, %v314
      %v381 = vmul.f32 %v379, %v314
      %v382 = vadd.f32 %v380, %v336
      %v383 = vadd.f32 %v381, %v336
      %v384 = vmax.f32 %v382, 0.0
      %v385 = vmax.f32 %v383, 0.0
      %s386 = sadd.s32 %s274, 8
      %p387 = scmp.lt.s32.totalorder %s386, 15
      %s388 = scalar_select %p387, %s386, 15
      %s389 = smul.u32 %s388, 2
      %s390 = smul.addr %s389, 4
      %s391 = scalar_lea.vmem %s251, %s390
      %v392 = vld [vmem:[%s391] sm:$0xf]
      %v393 = vld [vmem:[%s391 + $0x4] sm:$0xf]
      %v394 = vunpack.c.l.bf16 %v392
      %v395 = vunpack.c.l.bf16 %v393
      %v396 = vmul.f32 %v394, %v314
      %v397 = vmul.f32 %v395, %v314
      %v398 = vadd.f32 %v396, %v336
      %v399 = vadd.f32 %v397, %v336
      %v400 = vmax.f32 %v398, 0.0
      %v401 = vmax.f32 %v399, 0.0
      %p402 = scmp.gt.s32.totalorder %s22, 0
      %s403 = scalar_select %p402, 1.0, 0.0
      %v404 = vstv %s403
      %v405 = vmul.f32 %v384, %v404
      %v406 = vmul.f32 %v385, %v404
      %p407 = scmp.lt.s32.totalorder %s22, 1
      %s408 = scalar_select %p407, 1.0, 0.0
      %v409 = vstv %s408
      %v410 = vmul.f32 %v400, %v409
      %v411 = vmul.f32 %v401, %v409
      %vm412 = vcmask 1040384
      %vm413 = vsmask.f32 256
      %vm414 = vmand %vm412, %vm413
      %v415 = vld [vmem:[#allocation2] sm:$0x1]
      %v416 = vsel %vm414, 0, %v415
      %417 = vst [vmem:[#allocation2] sm:$0x1] %v416
      %v418 = vld [vmem:[#allocation2 + $0xc] sm:$0x1]
      %v419 = vsel %vm414, 0, %v418
      %420 = vst [vmem:[#allocation2 + $0xc] sm:$0x1] %v419
      %v421 = vld [vmem:[#allocation2 + $0x18] sm:$0x1]
      %v422 = vsel %vm414, 0, %v421
      %423 = vst [vmem:[#allocation2 + $0x18] sm:$0x1] %v422
      %v424 = vld [vmem:[#allocation2 + $0x24] sm:$0x1]
      %v425 = vsel %vm414, 0, %v424
      %426 = vst [vmem:[#allocation2 + $0x24] sm:$0x1] %v425
      %v427 = vld [vmem:[#allocation2 + $0x30] sm:$0x1]
      %v428 = vsel %vm414, 0, %v427
      %429 = vst [vmem:[#allocation2 + $0x30] sm:$0x1] %v428
      %v430 = vld [vmem:[#allocation2 + $0x3c] sm:$0x1]
      %v431 = vsel %vm414, 0, %v430
      %432 = vst [vmem:[#allocation2 + $0x3c] sm:$0x1] %v431
      %v433 = vld [vmem:[#allocation2 + $0x48] sm:$0x1]
      %v434 = vsel %vm414, 0, %v433
      %435 = vst [vmem:[#allocation2 + $0x48] sm:$0x1] %v434
      %v436 = vld [vmem:[#allocation2 + $0x54] sm:$0x1]
      %v437 = vsel %vm414, 0, %v436
      %438 = vst [vmem:[#allocation2 + $0x54] sm:$0x1] %v437
      %v439 = vld [vmem:[#allocation2 + $0x60] sm:$0x1]
      %v440 = vsel %vm414, 0, %v439
      %441 = vst [vmem:[#allocation2 + $0x60] sm:$0x1] %v440
      %v442 = vld [vmem:[#allocation2 + $0x6c] sm:$0x1]
      %v443 = vsel %vm414, 0, %v442
      %444 = vst [vmem:[#allocation2 + $0x6c] sm:$0x1] %v443
      %vm445 = vsmask.f32 7938
      %vm446 = vmand %vm412, %vm445
      %v447 = vld [vmem:[#allocation2 + $0x8] sm:$0x1]
      %v448 = vsel %vm446, 0, %v447
      %449 = vst [vmem:[#allocation2 + $0x8] sm:$0x1] %v448
      %v450 = vld [vmem:[#allocation2 + $0x14] sm:$0x1]
      %v451 = vsel %vm446, 0, %v450
      %452 = vst [vmem:[#allocation2 + $0x14] sm:$0x1] %v451
      %v453 = vld [vmem:[#allocation2 + $0x20] sm:$0x1]
      %v454 = vsel %vm446, 0, %v453
      %455 = vst [vmem:[#allocation2 + $0x20] sm:$0x1] %v454
      %v456 = vld [vmem:[#allocation2 + $0x2c] sm:$0x1]
      %v457 = vsel %vm446, 0, %v456
      %458 = vst [vmem:[#allocation2 + $0x2c] sm:$0x1] %v457
      %v459 = vld [vmem:[#allocation2 + $0x38] sm:$0x1]
      %v460 = vsel %vm446, 0, %v459
      %461 = vst [vmem:[#allocation2 + $0x38] sm:$0x1] %v460
      %v462 = vld [vmem:[#allocation2 + $0x44] sm:$0x1]
      %v463 = vsel %vm446, 0, %v462
      %464 = vst [vmem:[#allocation2 + $0x44] sm:$0x1] %v463
      %v465 = vld [vmem:[#allocation2 + $0x50] sm:$0x1]
      %v466 = vsel %vm446, 0, %v465
      %467 = vst [vmem:[#allocation2 + $0x50] sm:$0x1] %v466
      %v468 = vld [vmem:[#allocation2 + $0x5c] sm:$0x1]
      %v469 = vsel %vm446, 0, %v468
      %470 = vst [vmem:[#allocation2 + $0x5c] sm:$0x1] %v469
      %v471 = vld [vmem:[#allocation2 + $0x68] sm:$0x1]
      %v472 = vsel %vm446, 0, %v471
      %473 = vst [vmem:[#allocation2 + $0x68] sm:$0x1] %v472
      %v474 = vld [vmem:[#allocation2 + $0x74] sm:$0x1]
      %v475 = vsel %vm446, 0, %v474
      %476 = vst [vmem:[#allocation2 + $0x74] sm:$0x1] %v475
      %v477 = vpack.c.bf16 %v406, %v405
      %v479 = vunpack.c.l.b16 %v477
      %v480 = vunpack.c.h.b16 %v477
      %v481 = vpack.c.b16 %v479, %v479
      %v482 = vpack.c.b16 %v480, %v480
      %vm483 = vsmask.f32 4368
      %vm484 = vmor %vm413, %vm483
      %v486 = vshrl.u32 %v481, 16
      %v488 = vrot.slane %v486, 7
      %v489 = vshll.u32 %v481, 16
      %v491 = vor.u32 %v488, %v489
      %v492 = vrot.slane %v488, 4
      %v494 = vshrl.u32 %v482, 16
      %v496 = vrot.slane %v494, 7
      %v497 = vshll.u32 %v482, 16
      %v499 = vor.u32 %v496, %v497
      %v500 = vsel %vm484, %v492, %v499
      %v501 = vrot.slane %v496, 4
      %vm505 = vcmask 1043456
      %vm506 = vmand %vm505, %vm445
      %v507 = vld [vmem:[#allocation2] sm:$0xf]
      %v508 = vsel %vm506, %v491, %v507
      %509 = vst [vmem:[#allocation2] sm:$0xf] %v508
      %510 = vst [vmem:[#allocation2 + $0x4] sm:$0xf] %v500
      %v511 = vld [vmem:[#allocation2 + $0x8] sm:$0x1]
      %v512 = vsel %vm414, %v501, %v511
      %513 = vst [vmem:[#allocation2 + $0x8] sm:$0x1] %v512
      %v514 = vpack.c.bf16 %v355, %v354
      %v515 = vpack.c.bf16 %v357, %v356
      %v516 = vpack.c.bf16 %v359, %v358
      %v517 = vpack.c.bf16 %v361, %v360
      %v518 = vpack.c.bf16 %v363, %v362
      %v519 = vpack.c.bf16 %v365, %v364
      %v520 = vpack.c.bf16 %v367, %v366
      %v521 = vpack.c.bf16 %v369, %v368
      %v530 = vunpack.c.l.b16 %v514
      %v531 = vunpack.c.h.b16 %v514
      %v532 = vunpack.c.l.b16 %v515
      %v533 = vunpack.c.h.b16 %v515
      %v534 = vunpack.c.l.b16 %v516
      %v535 = vunpack.c.h.b16 %v516
      %v536 = vunpack.c.l.b16 %v517
      %v537 = vunpack.c.h.b16 %v517
      %v538 = vunpack.c.l.b16 %v518
      %v539 = vunpack.c.h.b16 %v518
      %v540 = vunpack.c.l.b16 %v519
      %v541 = vunpack.c.h.b16 %v519
      %v542 = vunpack.c.l.b16 %v520
      %v543 = vunpack.c.h.b16 %v520
      %v544 = vunpack.c.l.b16 %v521
      %v545 = vunpack.c.h.b16 %v521
      %v546 = vpack.c.b16 %v530, %v530
      %v547 = vpack.c.b16 %v531, %v531
      %v548 = vpack.c.b16 %v532, %v532
      %v549 = vpack.c.b16 %v533, %v533
      %v550 = vpack.c.b16 %v534, %v534
      %v551 = vpack.c.b16 %v535, %v535
      %v552 = vpack.c.b16 %v536, %v536
      %v553 = vpack.c.b16 %v537, %v537
      %v554 = vpack.c.b16 %v538, %v538
      %v555 = vpack.c.b16 %v539, %v539
      %v556 = vpack.c.b16 %v540, %v540
      %v557 = vpack.c.b16 %v541, %v541
      %v558 = vpack.c.b16 %v542, %v542
      %v559 = vpack.c.b16 %v543, %v543
      %v560 = vpack.c.b16 %v544, %v544
      %v561 = vpack.c.b16 %v545, %v545
      %v563 = vshrl.u32 %v546, 16
      %v565 = vrot.slane %v563, 7
      %v566 = vshll.u32 %v546, 16
      %v568 = vor.u32 %v565, %v566
      %v569 = vrot.slane %v565, 4
      %v571 = vshrl.u32 %v547, 16
      %v573 = vrot.slane %v571, 7
      %v574 = vshll.u32 %v547, 16
      %v576 = vor.u32 %v573, %v574
      %v577 = vsel %vm484, %v569, %v576
      %v578 = vrot.slane %v573, 4
      %v580 = vshrl.u32 %v548, 16
      %v582 = vrot.slane %v580, 7
      %v583 = vshll.u32 %v548, 16
      %v585 = vor.u32 %v582, %v583
      %v586 = vrot.slane %v582, 4
      %v588 = vshrl.u32 %v549, 16
      %v590 = vrot.slane %v588, 7
      %v591 = vshll.u32 %v549, 16
      %v593 = vor.u32 %v590, %v591
      %v594 = vsel %vm484, %v586, %v593
      %v595 = vrot.slane %v590, 4
      %v597 = vshrl.u32 %v550, 16
      %v599 = vrot.slane %v597, 7
      %v600 = vshll.u32 %v550, 16
      %v602 = vor.u32 %v599, %v600
      %v603 = vrot.slane %v599, 4
      %v605 = vshrl.u32 %v551, 16
      %v607 = vrot.slane %v605, 7
      %v608 = vshll.u32 %v551, 16
      %v610 = vor.u32 %v607, %v608
      %v611 = vsel %vm484, %v603, %v610
      %v612 = vrot.slane %v607, 4
      %v614 = vshrl.u32 %v552, 16
      %v616 = vrot.slane %v614, 7
      %v617 = vshll.u32 %v552, 16
      %v619 = vor.u32 %v616, %v617
      %v620 = vrot.slane %v616, 4
      %v622 = vshrl.u32 %v553, 16
      %v624 = vrot.slane %v622, 7
      %v625 = vshll.u32 %v553, 16
      %v627 = vor.u32 %v624, %v625
      %v628 = vsel %vm484, %v620, %v627
      %v629 = vrot.slane %v624, 4
      %v631 = vshrl.u32 %v554, 16
      %v633 = vrot.slane %v631, 7
      %v634 = vshll.u32 %v554, 16
      %v636 = vor.u32 %v633, %v634
      %v637 = vrot.slane %v633, 4
      %v639 = vshrl.u32 %v555, 16
      %v641 = vrot.slane %v639, 7
      %v642 = vshll.u32 %v555, 16
      %v644 = vor.u32 %v641, %v642
      %v645 = vsel %vm484, %v637, %v644
      %v646 = vrot.slane %v641, 4
      %v648 = vshrl.u32 %v556, 16
      %v650 = vrot.slane %v648, 7
      %v651 = vshll.u32 %v556, 16
      %v653 = vor.u32 %v650, %v651
      %v654 = vrot.slane %v650, 4
      %v656 = vshrl.u32 %v557, 16
      %v658 = vrot.slane %v656, 7
      %v659 = vshll.u32 %v557, 16
      %v661 = vor.u32 %v658, %v659
      %v662 = vsel %vm484, %v654, %v661
      %v663 = vrot.slane %v658, 4
      %v665 = vshrl.u32 %v558, 16
      %v667 = vrot.slane %v665, 7
      %v668 = vshll.u32 %v558, 16
      %v670 = vor.u32 %v667, %v668
      %v671 = vrot.slane %v667, 4
      %v673 = vshrl.u32 %v559, 16
      %v675 = vrot.slane %v673, 7
      %v676 = vshll.u32 %v559, 16
      %v678 = vor.u32 %v675, %v676
      %v679 = vsel %vm484, %v671, %v678
      %v680 = vrot.slane %v675, 4
      %v682 = vshrl.u32 %v560, 16
      %v684 = vrot.slane %v682, 7
      %v685 = vshll.u32 %v560, 16
      %v687 = vor.u32 %v684, %v685
      %v688 = vrot.slane %v684, 4
      %v690 = vshrl.u32 %v561, 16
      %v692 = vrot.slane %v690, 7
      %v693 = vshll.u32 %v561, 16
      %v695 = vor.u32 %v692, %v693
      %v696 = vsel %vm484, %v688, %v695
      %v697 = vrot.slane %v692, 4
      %s722 = scalar_lea.vmem [#allocation2], 12
      %v723 = vld [vmem:[%s722] sm:$0xf]
      %v724 = vsel %vm506, %v568, %v723
      %725 = vst [vmem:[%s722] sm:$0xf] %v724
      %726 = vst [vmem:[%s722 + $0x4] sm:$0xf] %v577
      %v727 = vld [vmem:[%s722 + $0x8] sm:$0x1]
      %v728 = vsel %vm414, %v578, %v727
      %729 = vst [vmem:[%s722 + $0x8] sm:$0x1] %v728
      %v730 = vld [vmem:[%s722 + $0xc] sm:$0xf]
      %v731 = vsel %vm506, %v585, %v730
      %732 = vst [vmem:[%s722 + $0xc] sm:$0xf] %v731
      %733 = vst [vmem:[%s722 + $0x10] sm:$0xf] %v594
      %v734 = vld [vmem:[%s722 + $0x14] sm:$0x1]
      %v735 = vsel %vm414, %v595, %v734
      %736 = vst [vmem:[%s722 + $0x14] sm:$0x1] %v735
      %v737 = vld [vmem:[%s722 + $0x18] sm:$0xf]
      %v738 = vsel %vm506, %v602, %v737
      %739 = vst [vmem:[%s722 + $0x18] sm:$0xf] %v738
      %740 = vst [vmem:[%s722 + $0x1c] sm:$0xf] %v611
      %v741 = vld [vmem:[%s722 + $0x20] sm:$0x1]
      %v742 = vsel %vm414, %v612, %v741
      %743 = vst [vmem:[%s722 + $0x20] sm:$0x1] %v742
      %v744 = vld [vmem:[%s722 + $0x24] sm:$0xf]
      %v745 = vsel %vm506, %v619, %v744
      %746 = vst [vmem:[%s722 + $0x24] sm:$0xf] %v745
      %747 = vst [vmem:[%s722 + $0x28] sm:$0xf] %v628
      %v748 = vld [vmem:[%s722 + $0x2c] sm:$0x1]
      %v749 = vsel %vm414, %v629, %v748
      %750 = vst [vmem:[%s722 + $0x2c] sm:$0x1] %v749
      %v751 = vld [vmem:[%s722 + $0x30] sm:$0xf]
      %v752 = vsel %vm506, %v636, %v751
      %753 = vst [vmem:[%s722 + $0x30] sm:$0xf] %v752
      %754 = vst [vmem:[%s722 + $0x34] sm:$0xf] %v645
      %v755 = vld [vmem:[%s722 + $0x38] sm:$0x1]
      %v756 = vsel %vm414, %v646, %v755
      %757 = vst [vmem:[%s722 + $0x38] sm:$0x1] %v756
      %v758 = vld [vmem:[%s722 + $0x3c] sm:$0xf]
      %v759 = vsel %vm506, %v653, %v758
      %760 = vst [vmem:[%s722 + $0x3c] sm:$0xf] %v759
      %761 = vst [vmem:[%s722 + $0x40] sm:$0xf] %v662
      %v762 = vld [vmem:[%s722 + $0x44] sm:$0x1]
      %v763 = vsel %vm414, %v663, %v762
      %764 = vst [vmem:[%s722 + $0x44] sm:$0x1] %v763
      %v765 = vld [vmem:[%s722 + $0x48] sm:$0xf]
      %v766 = vsel %vm506, %v670, %v765
      %767 = vst [vmem:[%s722 + $0x48] sm:$0xf] %v766
      %768 = vst [vmem:[%s722 + $0x4c] sm:$0xf] %v679
      %v769 = vld [vmem:[%s722 + $0x50] sm:$0x1]
      %v770 = vsel %vm414, %v680, %v769
      %771 = vst [vmem:[%s722 + $0x50] sm:$0x1] %v770
      %v772 = vld [vmem:[%s722 + $0x54] sm:$0xf]
      %v773 = vsel %vm506, %v687, %v772
      %774 = vst [vmem:[%s722 + $0x54] sm:$0xf] %v773
      %775 = vst [vmem:[%s722 + $0x58] sm:$0xf] %v696
      %v776 = vld [vmem:[%s722 + $0x5c] sm:$0x1]
      %v777 = vsel %vm414, %v697, %v776
      %778 = vst [vmem:[%s722 + $0x5c] sm:$0x1] %v777
      %v779 = vpack.c.bf16 %v411, %v410
      %v781 = vunpack.c.l.b16 %v779
      %v782 = vunpack.c.h.b16 %v779
      %v783 = vpack.c.b16 %v781, %v781
      %v784 = vpack.c.b16 %v782, %v782
      %v786 = vshrl.u32 %v783, 16
      %v788 = vrot.slane %v786, 7
      %v789 = vshll.u32 %v783, 16
      %v791 = vor.u32 %v788, %v789
      %v792 = vrot.slane %v788, 4
      %v794 = vshrl.u32 %v784, 16
      %v796 = vrot.slane %v794, 7
      %v797 = vshll.u32 %v784, 16
      %v799 = vor.u32 %v796, %v797
      %v800 = vsel %vm484, %v792, %v799
      %v801 = vrot.slane %v796, 4
      %s805 = scalar_lea.vmem [#allocation2], 108
      %v806 = vld [vmem:[%s805] sm:$0xf]
      %v807 = vsel %vm506, %v791, %v806
      %808 = vst [vmem:[%s805] sm:$0xf] %v807
      %809 = vst [vmem:[%s805 + $0x4] sm:$0xf] %v800
      %v810 = vld [vmem:[%s805 + $0x8] sm:$0x1]
      %v811 = vsel %vm414, %v801, %v810
      %812 = vst [vmem:[%s805 + $0x8] sm:$0x1] %v811
      %v813 = vld [vmem:[#allocation2] sm:$0xf]
      %v814 = vld [vmem:[#allocation2 + $0x4] sm:$0xf]
      %v815 = vld [vmem:[#allocation2 + $0xc] sm:$0xf]
      %v816 = vld [vmem:[#allocation2 + $0x10] sm:$0xf]
      %v817 = vld [vmem:[#allocation2 + $0x18] sm:$0xf]
      %v818 = vld [vmem:[#allocation2 + $0x1c] sm:$0xf]
      %v819 = vld [vmem:[#allocation2 + $0x24] sm:$0xf]
      %v820 = vld [vmem:[#allocation2 + $0x28] sm:$0xf]
      %v821 = vld [vmem:[#allocation2 + $0x30] sm:$0xf]
      %v822 = vld [vmem:[#allocation2 + $0x34] sm:$0xf]
      %v823 = vld [vmem:[#allocation2 + $0x3c] sm:$0xf]
      %v824 = vld [vmem:[#allocation2 + $0x40] sm:$0xf]
      %v825 = vld [vmem:[#allocation2 + $0x48] sm:$0xf]
      %v826 = vld [vmem:[#allocation2 + $0x4c] sm:$0xf]
      %v827 = vld [vmem:[#allocation2 + $0x54] sm:$0xf]
      %v828 = vld [vmem:[#allocation2 + $0x58] sm:$0xf]
      %v829 = vld [vmem:[%s3] sm:$0xf]
      %v830 = vld [vmem:[%s3 + $0x4] sm:$0xf]
      %v831 = vld [vmem:[%s3 + $0x8] sm:$0xf]
      %v832 = vld [vmem:[%s3 + $0xc] sm:$0xf]
      %v833 = vld [vmem:[%s3 + $0x10] sm:$0xf]
      %v834 = vld [vmem:[%s3 + $0x14] sm:$0xf]
      %v835 = vld [vmem:[%s3 + $0x18] sm:$0xf]
      %v836 = vld [vmem:[%s3 + $0x1c] sm:$0xf]
      %v837 = vld [vmem:[%s3 + $0x20] sm:$0xf]
      %v838 = vld [vmem:[%s3 + $0x24] sm:$0xf]
      %v839 = vld [vmem:[%s3 + $0x28] sm:$0xf]
      %v840 = vld [vmem:[%s3 + $0x2c] sm:$0xf]
      %v841 = vld [vmem:[%s3 + $0x30] sm:$0xf]
      %v842 = vld [vmem:[%s3 + $0x34] sm:$0xf]
      %v843 = vld [vmem:[%s3 + $0x38] sm:$0xf]
      %v844 = vld [vmem:[%s3 + $0x3c] sm:$0xf]
      %v845 = vld [vmem:[#allocation2 + $0x8] sm:$0x1]
      %v846 = vld [vmem:[#allocation2 + $0x14] sm:$0x1]
      %v847 = vld [vmem:[#allocation2 + $0x20] sm:$0x1]
      %v848 = vld [vmem:[#allocation2 + $0x2c] sm:$0x1]
      %v849 = vld [vmem:[#allocation2 + $0x38] sm:$0x1]
      %v850 = vld [vmem:[#allocation2 + $0x44] sm:$0x1]
      %v851 = vld [vmem:[#allocation2 + $0x50] sm:$0x1]
      %v852 = vld [vmem:[#allocation2 + $0x5c] sm:$0x1]
      %vm853 = vsmask.f32 3328
      %vm854 = vsmask.f32 7440
      %vm855 = vmor %vm853, %vm854
      %v857 = vshrl.u32 %v813, 16
      %v859 = vrot.slane %v857, 4
      %v860 = vshll.u32 %v813, 16
      %v862 = vrot.slane %v860, 5
      %v863 = vor.u32 %v859, %v862
      %v864 = vrot.slane %v863, 4
      %v866 = vshll.u32 %v814, 16
      %v868 = vrot.slane %v866, 5
      %v869 = vsel %vm855, %v864, %v868
      %v870 = vshrl.u32 %v814, 16
      %v872 = vrot.slane %v870, 4
      %v873 = vor.u32 %v872, %v868
      %v874 = vrot.slane %v873, 4
      %v876 = vshll.u32 %v845, 16
      %v878 = vrot.slane %v876, 5
      %v879 = vsel %vm855, %v874, %v878
      %v881 = vshrl.u32 %v815, 16
      %v883 = vrot.slane %v881, 4
      %v884 = vshll.u32 %v815, 16
      %v886 = vrot.slane %v884, 5
      %v887 = vor.u32 %v883, %v886
      %v888 = vrot.slane %v887, 4
      %v890 = vshll.u32 %v816, 16
      %v892 = vrot.slane %v890, 5
      %v893 = vsel %vm855, %v888, %v892
      %v894 = vshrl.u32 %v816, 16
      %v896 = vrot.slane %v894, 4
      %v897 = vor.u32 %v896, %v892
      %v898 = vrot.slane %v897, 4
      %v900 = vshll.u32 %v846, 16
      %v902 = vrot.slane %v900, 5
      %v903 = vsel %vm855, %v898, %v902
      %v905 = vshrl.u32 %v817, 16
      %v907 = vrot.slane %v905, 4
      %v908 = vshll.u32 %v817, 16
      %v910 = vrot.slane %v908, 5
      %v911 = vor.u32 %v907, %v910
      %v912 = vrot.slane %v911, 4
      %v914 = vshll.u32 %v818, 16
      %v916 = vrot.slane %v914, 5
      %v917 = vsel %vm855, %v912, %v916
      %v918 = vshrl.u32 %v818, 16
      %v920 = vrot.slane %v918, 4
      %v921 = vor.u32 %v920, %v916
      %v922 = vrot.slane %v921, 4
      %v924 = vshll.u32 %v847, 16
      %v926 = vrot.slane %v924, 5
      %v927 = vsel %vm855, %v922, %v926
      %v929 = vshrl.u32 %v819, 16
      %v931 = vrot.slane %v929, 4
      %v932 = vshll.u32 %v819, 16
      %v934 = vrot.slane %v932, 5
      %v935 = vor.u32 %v931, %v934
      %v936 = vrot.slane %v935, 4
      %v938 = vshll.u32 %v820, 16
      %v940 = vrot.slane %v938, 5
      %v941 = vsel %vm855, %v936, %v940
      %v942 = vshrl.u32 %v820, 16
      %v944 = vrot.slane %v942, 4
      %v945 = vor.u32 %v944, %v940
      %v946 = vrot.slane %v945, 4
      %v948 = vshll.u32 %v848, 16
      %v950 = vrot.slane %v948, 5
      %v951 = vsel %vm855, %v946, %v950
      %v953 = vshrl.u32 %v821, 16
      %v955 = vrot.slane %v953, 4
      %v956 = vshll.u32 %v821, 16
      %v958 = vrot.slane %v956, 5
      %v959 = vor.u32 %v955, %v958
      %v960 = vrot.slane %v959, 4
      %v962 = vshll.u32 %v822, 16
      %v964 = vrot.slane %v962, 5
      %v965 = vsel %vm855, %v960, %v964
      %v966 = vshrl.u32 %v822, 16
      %v968 = vrot.slane %v966, 4
      %v969 = vor.u32 %v968, %v964
      %v970 = vrot.slane %v969, 4
      %v972 = vshll.u32 %v849, 16
      %v974 = vrot.slane %v972, 5
      %v975 = vsel %vm855, %v970, %v974
      %v977 = vshrl.u32 %v823, 16
      %v979 = vrot.slane %v977, 4
      %v980 = vshll.u32 %v823, 16
      %v982 = vrot.slane %v980, 5
      %v983 = vor.u32 %v979, %v982
      %v984 = vrot.slane %v983, 4
      %v986 = vshll.u32 %v824, 16
      %v988 = vrot.slane %v986, 5
      %v989 = vsel %vm855, %v984, %v988
      %v990 = vshrl.u32 %v824, 16
      %v992 = vrot.slane %v990, 4
      %v993 = vor.u32 %v992, %v988
      %v994 = vrot.slane %v993, 4
      %v996 = vshll.u32 %v850, 16
      %v998 = vrot.slane %v996, 5
      %v999 = vsel %vm855, %v994, %v998
      %v1001 = vshrl.u32 %v825, 16
      %v1003 = vrot.slane %v1001, 4
      %v1004 = vshll.u32 %v825, 16
      %v1006 = vrot.slane %v1004, 5
      %v1007 = vor.u32 %v1003, %v1006
      %v1008 = vrot.slane %v1007, 4
      %v1010 = vshll.u32 %v826, 16
      %v1012 = vrot.slane %v1010, 5
      %v1013 = vsel %vm855, %v1008, %v1012
      %v1014 = vshrl.u32 %v826, 16
      %v1016 = vrot.slane %v1014, 4
      %v1017 = vor.u32 %v1016, %v1012
      %v1018 = vrot.slane %v1017, 4
      %v1020 = vshll.u32 %v851, 16
      %v1022 = vrot.slane %v1020, 5
      %v1023 = vsel %vm855, %v1018, %v1022
      %v1025 = vshrl.u32 %v827, 16
      %v1027 = vrot.slane %v1025, 4
      %v1028 = vshll.u32 %v827, 16
      %v1030 = vrot.slane %v1028, 5
      %v1031 = vor.u32 %v1027, %v1030
      %v1032 = vrot.slane %v1031, 4
      %v1034 = vshll.u32 %v828, 16
      %v1036 = vrot.slane %v1034, 5
      %v1037 = vsel %vm855, %v1032, %v1036
      %v1038 = vshrl.u32 %v828, 16
      %v1040 = vrot.slane %v1038, 4
      %v1041 = vor.u32 %v1040, %v1036
      %v1042 = vrot.slane %v1041, 4
      %v1044 = vshll.u32 %v852, 16
      %v1046 = vrot.slane %v1044, 5
      %v1047 = vsel %vm855, %v1042, %v1046
      %v1048 = vld [vmem:[%s3 + $0x40] sm:$0xf]
      %v1049 = vld [vmem:[%s3 + $0x44] sm:$0xf]
      %v1050 = vld [vmem:[%s3 + $0x48] sm:$0xf]
      %v1051 = vld [vmem:[%s3 + $0x4c] sm:$0xf]
      %v1052 = vld [vmem:[%s3 + $0x50] sm:$0xf]
      %v1053 = vld [vmem:[%s3 + $0x54] sm:$0xf]
      %v1054 = vld [vmem:[%s3 + $0x58] sm:$0xf]
      %v1055 = vld [vmem:[%s3 + $0x5c] sm:$0xf]
      %v1056 = vld [vmem:[%s3 + $0x60] sm:$0xf]
      %v1057 = vld [vmem:[%s3 + $0x64] sm:$0xf]
      %v1058 = vld [vmem:[%s3 + $0x68] sm:$0xf]
      %v1059 = vld [vmem:[%s3 + $0x6c] sm:$0xf]
      %v1060 = vld [vmem:[%s3 + $0x70] sm:$0xf]
      %v1061 = vld [vmem:[%s3 + $0x74] sm:$0xf]
      %v1062 = vld [vmem:[%s3 + $0x78] sm:$0xf]
      %v1063 = vld [vmem:[%s3 + $0x7c] sm:$0xf]
      %v1064 = vunpack.c.l.b16 %v869
      %v1065 = vunpack.c.l.b16 %v879
      %v1066 = vunpack.c.l.b16 %v893
      %v1067 = vunpack.c.l.b16 %v903
      %v1068 = vunpack.c.l.b16 %v917
      %v1069 = vunpack.c.l.b16 %v927
      %v1070 = vunpack.c.l.b16 %v941
      %v1071 = vunpack.c.l.b16 %v951
      %v1072 = vunpack.c.l.b16 %v965
      %v1073 = vunpack.c.l.b16 %v975
      %v1074 = vunpack.c.l.b16 %v989
      %v1075 = vunpack.c.l.b16 %v999
      %v1076 = vunpack.c.l.b16 %v1013
      %v1077 = vunpack.c.l.b16 %v1023
      %v1078 = vunpack.c.l.b16 %v1037
      %v1079 = vunpack.c.l.b16 %v1047
      %v1080 = vpack.c.b16 %v1065, %v1064
      %v1081 = vpack.c.b16 %v1067, %v1066
      %v1082 = vpack.c.b16 %v1069, %v1068
      %v1083 = vpack.c.b16 %v1071, %v1070
      %v1084 = vpack.c.b16 %v1073, %v1072
      %v1085 = vpack.c.b16 %v1075, %v1074
      %v1086 = vpack.c.b16 %v1077, %v1076
      %v1087 = vpack.c.b16 %v1079, %v1078
      %v1112 = vunpack.c.l.b16 %v1048
      %v1113 = vunpack.c.l.b16 %v1049
      %v1114 = vunpack.c.l.b16 %v1050
      %v1115 = vunpack.c.l.b16 %v1051
      %v1116 = vunpack.c.l.b16 %v1052
      %v1117 = vunpack.c.l.b16 %v1053
      %v1118 = vunpack.c.l.b16 %v1054
      %v1119 = vunpack.c.l.b16 %v1055
      %v1120 = vunpack.c.l.b16 %v1056
      %v1121 = vunpack.c.l.b16 %v1057
      %v1122 = vunpack.c.l.b16 %v1058
      %v1123 = vunpack.c.l.b16 %v1059
      %v1124 = vunpack.c.l.b16 %v1060
      %v1125 = vunpack.c.l.b16 %v1061
      %v1126 = vunpack.c.l.b16 %v1062
      %v1127 = vunpack.c.l.b16 %v1063
      %v1128 = vpack.c.b16 %v1113, %v1112
      %v1129 = vpack.c.b16 %v1115, %v1114
      %v1130 = vpack.c.b16 %v1117, %v1116
      %v1131 = vpack.c.b16 %v1119, %v1118
      %v1132 = vpack.c.b16 %v1121, %v1120
      %v1133 = vpack.c.b16 %v1123, %v1122
      %v1134 = vpack.c.b16 %v1125, %v1124
      %v1135 = vpack.c.b16 %v1127, %v1126
      %1144 = vmatprep.subr.bf16.mxu0 0
      %1145 = vmatpush1.bf16.msra.mxu0 %v1128
      %1146 = vmatprep.subr.bf16.mxu0 0
      %1147 = vmatpush1.bf16.msra.mxu0 %v1129
      %1148 = vmatprep.subr.bf16.mxu0 0
      %1149 = vmatpush1.bf16.msra.mxu0 %v1130
      %1150 = vmatprep.subr.bf16.mxu0 0
      %1151 = vmatpush1.bf16.msra.mxu0 %v1131
      %1152 = vmatprep.subr.bf16.mxu0 0
      %1153 = vmatpush1.bf16.msra.mxu0 %v1132
      %1154 = vmatprep.subr.bf16.mxu0 0
      %1155 = vmatpush1.bf16.msra.mxu0 %v1133
      %1156 = vmatprep.subr.bf16.mxu0 0
      %1157 = vmatpush1.bf16.msra.mxu0 %v1134
      %1158 = vmatprep.subr.bf16.mxu0 0
      %1159 = vmatpush1.bf16.msra.mxu0 %v1135
      %1160 = vmatprep.subr.bf16.mxu0 0
      %1161 = vmatpush1.bf16.msra.mxu0 0
      %1162 = vmatprep.subr.bf16.mxu0 0
      %1163 = vmatpush1.bf16.msra.mxu0 0
      %1164 = vmatprep.subr.bf16.mxu0 0
      %1165 = vmatpush1.bf16.msra.mxu0 0
      %1166 = vmatprep.subr.bf16.mxu0 0
      %1167 = vmatpush1.bf16.msra.mxu0 0
      %1168 = vmatprep.subr.bf16.mxu0 0
      %1169 = vmatpush1.bf16.msra.mxu0 0
      %1170 = vmatprep.subr.bf16.mxu0 0
      %1171 = vmatpush1.bf16.msra.mxu0 0
      %1172 = vmatprep.subr.bf16.mxu0 0
      %1173 = vmatpush1.bf16.msra.mxu0 0
      %1174 = vmatprep.subr.bf16.mxu0 0
      %1175 = vmatpush1.bf16.msra.mxu0 0
      %1176 = vmatprep.mubr.bf16.mxu0 0
      %1177 = vmatmul.mubr.bf16.gmra.mrb[0].mxu0 %v1080
      %v1178 = vpop.f32.mrb[0].mxu0
      %v1179 = vadd.f32 0.0, %v1178
      %v1180 = vpop.f32.mrb[0].mxu0
      %v1181 = vpop.f32.mrb[0].mxu0
      %v1182 = vadd.f32 0.0, %v1181
      %v1183 = vpop.f32.mrb[0].mxu0
      %1184 = vmatprep.mubr.bf16.mxu0 0
      %1185 = vmatmul.mubr.bf16.gmra.mrb[0].mxu0 %v1081
      %v1186 = vpop.f32.mrb[0].mxu0
      %v1187 = vadd.f32 0.0, %v1186
      %v1188 = vpop.f32.mrb[0].mxu0
      %v1189 = vpop.f32.mrb[0].mxu0
      %v1190 = vadd.f32 0.0, %v1189
      %v1191 = vpop.f32.mrb[0].mxu0
      %1192 = vmatprep.mubr.bf16.mxu0 0
      %1193 = vmatmul.mubr.bf16.gmra.mrb[0].mxu0 %v1082
      %v1194 = vpop.f32.mrb[0].mxu0
      %v1195 = vadd.f32 0.0, %v1194
      %v1196 = vpop.f32.mrb[0].mxu0
      %v1197 = vpop.f32.mrb[0].mxu0
      %v1198 = vadd.f32 0.0, %v1197
      %v1199 = vpop.f32.mrb[0].mxu0
      %1200 = vmatprep.mubr.bf16.mxu0 0
      %1201 = vmatmul.mubr.bf16.gmra.mrb[0].mxu0 %v1083
      %v1202 = vpop.f32.mrb[0].mxu0
      %v1203 = vadd.f32 0.0, %v1202
      %v1204 = vpop.f32.mrb[0].mxu0
      %v1205 = vpop.f32.mrb[0].mxu0
      %v1206 = vadd.f32 0.0, %v1205
      %v1207 = vpop.f32.mrb[0].mxu0
      %1208 = vmatprep.mubr.bf16.mxu0 0
      %1209 = vmatmul.mubr.bf16.gmra.mrb[0].mxu0 %v1084
      %v1210 = vpop.f32.mrb[0].mxu0
      %v1211 = vadd.f32 0.0, %v1210
      %v1212 = vpop.f32.mrb[0].mxu0
      %v1213 = vpop.f32.mrb[0].mxu0
      %v1214 = vadd.f32 0.0, %v1213
      %v1215 = vpop.f32.mrb[0].mxu0
      %1216 = vmatprep.mubr.bf16.mxu0 0
      %1217 = vmatmul.mubr.bf16.gmra.mrb[0].mxu0 %v1085
      %v1218 = vpop.f32.mrb[0].mxu0
      %v1219 = vadd.f32 0.0, %v1218
      %v1220 = vpop.f32.mrb[0].mxu0
      %v1221 = vpop.f32.mrb[0].mxu0
      %v1222 = vadd.f32 0.0, %v1221
      %v1223 = vpop.f32.mrb[0].mxu0
      %1224 = vmatprep.mubr.bf16.mxu0 0
      %1225 = vmatmul.mubr.bf16.gmra.mrb[0].mxu0 %v1086
      %v1226 = vpop.f32.mrb[0].mxu0
      %v1227 = vadd.f32 0.0, %v1226
      %v1228 = vpop.f32.mrb[0].mxu0
      %v1229 = vpop.f32.mrb[0].mxu0
      %v1230 = vadd.f32 0.0, %v1229
      %v1231 = vpop.f32.mrb[0].mxu0
      %1232 = vmatprep.mubr.bf16.mxu0 0
      %1233 = vmatmul.mubr.bf16.gmra.mrb[0].mxu0 %v1087
      %v1234 = vpop.f32.mrb[0].mxu0
      %v1235 = vadd.f32 0.0, %v1234
      %v1236 = vpop.f32.mrb[0].mxu0
      %v1237 = vpop.f32.mrb[0].mxu0
      %v1238 = vadd.f32 0.0, %v1237
      %v1239 = vpop.f32.mrb[0].mxu0
      %1240 = vdwg.mxu0
      %v1257 = vunpack.c.l.b16 %v813
      %v1258 = vunpack.c.l.b16 %v814
      %v1259 = vunpack.c.l.b16 %v815
      %v1260 = vunpack.c.l.b16 %v816
      %v1261 = vunpack.c.l.b16 %v817
      %v1262 = vunpack.c.l.b16 %v818
      %v1263 = vunpack.c.l.b16 %v819
      %v1264 = vunpack.c.l.b16 %v820
      %v1265 = vunpack.c.l.b16 %v821
      %v1266 = vunpack.c.l.b16 %v822
      %v1267 = vunpack.c.l.b16 %v823
      %v1268 = vunpack.c.l.b16 %v824
      %v1269 = vunpack.c.l.b16 %v825
      %v1270 = vunpack.c.l.b16 %v826
      %v1271 = vunpack.c.l.b16 %v827
      %v1272 = vunpack.c.l.b16 %v828
      %v1273 = vpack.c.b16 %v1258, %v1257
      %v1274 = vpack.c.b16 %v1260, %v1259
      %v1275 = vpack.c.b16 %v1262, %v1261
      %v1276 = vpack.c.b16 %v1264, %v1263
      %v1277 = vpack.c.b16 %v1266, %v1265
      %v1278 = vpack.c.b16 %v1268, %v1267
      %v1279 = vpack.c.b16 %v1270, %v1269
      %v1280 = vpack.c.b16 %v1272, %v1271
      %v1305 = vunpack.c.l.b16 %v829
      %v1306 = vunpack.c.l.b16 %v830
      %v1307 = vunpack.c.l.b16 %v831
      %v1308 = vunpack.c.l.b16 %v832
      %v1309 = vunpack.c.l.b16 %v833
      %v1310 = vunpack.c.l.b16 %v834
      %v1311 = vunpack.c.l.b16 %v835
      %v1312 = vunpack.c.l.b16 %v836
      %v1313 = vunpack.c.l.b16 %v837
      %v1314 = vunpack.c.l.b16 %v838
      %v1315 = vunpack.c.l.b16 %v839
      %v1316 = vunpack.c.l.b16 %v840
      %v1317 = vunpack.c.l.b16 %v841
      %v1318 = vunpack.c.l.b16 %v842
      %v1319 = vunpack.c.l.b16 %v843
      %v1320 = vunpack.c.l.b16 %v844
      %v1321 = vpack.c.b16 %v1306, %v1305
      %v1322 = vpack.c.b16 %v1308, %v1307
      %v1323 = vpack.c.b16 %v1310, %v1309
      %v1324 = vpack.c.b16 %v1312, %v1311
      %v1325 = vpack.c.b16 %v1314, %v1313
      %v1326 = vpack.c.b16 %v1316, %v1315
      %v1327 = vpack.c.b16 %v1318, %v1317
      %v1328 = vpack.c.b16 %v1320, %v1319
      %1337 = vmatprep.subr.bf16.mxu0 0
      %1338 = vmatpush1.bf16.msra.mxu0 %v1321
      %1339 = vmatprep.subr.bf16.mxu0 0
      %1340 = vmatpush1.bf16.msra.mxu0 %v1322
      %1341 = vmatprep.subr.bf16.mxu0 0
      %1342 = vmatpush1.bf16.msra.mxu0 %v1323
      %1343 = vmatprep.subr.bf16.mxu0 0
      %1344 = vmatpush1.bf16.msra.mxu0 %v1324
      %1345 = vmatprep.subr.bf16.mxu0 0
      %1346 = vmatpush1.bf16.msra.mxu0 %v1325
      %1347 = vmatprep.subr.bf16.mxu0 0
      %1348 = vmatpush1.bf16.msra.mxu0 %v1326
      %1349 = vmatprep.subr.bf16.mxu0 0
      %1350 = vmatpush1.bf16.msra.mxu0 %v1327
      %1351 = vmatprep.subr.bf16.mxu0 0
      %1352 = vmatpush1.bf16.msra.mxu0 %v1328
      %1353 = vmatprep.subr.bf16.mxu0 0
      %1354 = vmatpush1.bf16.msra.mxu0 0
      %1355 = vmatprep.subr.bf16.mxu0 0
      %1356 = vmatpush1.bf16.msra.mxu0 0
      %1357 = vmatprep.subr.bf16.mxu0 0
      %1358 = vmatpush1.bf16.msra.mxu0 0
      %1359 = vmatprep.subr.bf16.mxu0 0
      %1360 = vmatpush1.bf16.msra.mxu0 0
      %1361 = vmatprep.subr.bf16.mxu0 0
      %1362 = vmatpush1.bf16.msra.mxu0 0
      %1363 = vmatprep.subr.bf16.mxu0 0
      %1364 = vmatpush1.bf16.msra.mxu0 0
      %1365 = vmatprep.subr.bf16.mxu0 0
      %1366 = vmatpush1.bf16.msra.mxu0 0
      %1367 = vmatprep.subr.bf16.mxu0 0
      %1368 = vmatpush1.bf16.msra.mxu0 0
      %1369 = vmatprep.mubr.bf16.mxu0 0
      %1370 = vmatmul.mubr.bf16.gmra.mrb[0].mxu0 %v1273
      %v1371 = vpop.f32.mrb[0].mxu0
      %v1372 = vadd.f32 %v1179, %v1371
      %v1373 = vpop.f32.mrb[0].mxu0
      %v1374 = vpop.f32.mrb[0].mxu0
      %v1375 = vadd.f32 %v1182, %v1374
      %v1376 = vpop.f32.mrb[0].mxu0
      %1377 = vmatprep.mubr.bf16.mxu0 0
      %1378 = vmatmul.mubr.bf16.gmra.mrb[0].mxu0 %v1274
      %v1379 = vpop.f32.mrb[0].mxu0
      %v1380 = vadd.f32 %v1187, %v1379
      %v1381 = vpop.f32.mrb[0].mxu0
      %v1382 = vpop.f32.mrb[0].mxu0
      %v1383 = vadd.f32 %v1190, %v1382
      %v1384 = vpop.f32.mrb[0].mxu0
      %1385 = vmatprep.mubr.bf16.mxu0 0
      %1386 = vmatmul.mubr.bf16.gmra.mrb[0].mxu0 %v1275
      %v1387 = vpop.f32.mrb[0].mxu0
      %v1388 = vadd.f32 %v1195, %v1387
      %v1389 = vpop.f32.mrb[0].mxu0
      %v1390 = vpop.f32.mrb[0].mxu0
      %v1391 = vadd.f32 %v1198, %v1390
      %v1392 = vpop.f32.mrb[0].mxu0
      %1393 = vmatprep.mubr.bf16.mxu0 0
      %1394 = vmatmul.mubr.bf16.gmra.mrb[0].mxu0 %v1276
      %v1395 = vpop.f32.mrb[0].mxu0
      %v1396 = vadd.f32 %v1203, %v1395
      %v1397 = vpop.f32.mrb[0].mxu0
      %v1398 = vpop.f32.mrb[0].mxu0
      %v1399 = vadd.f32 %v1206, %v1398
      %v1400 = vpop.f32.mrb[0].mxu0
      %1401 = vmatprep.mubr.bf16.mxu0 0
      %1402 = vmatmul.mubr.bf16.gmra.mrb[0].mxu0 %v1277
      %v1403 = vpop.f32.mrb[0].mxu0
      %v1404 = vadd.f32 %v1211, %v1403
      %v1405 = vpop.f32.mrb[0].mxu0
      %v1406 = vpop.f32.mrb[0].mxu0
      %v1407 = vadd.f32 %v1214, %v1406
      %v1408 = vpop.f32.mrb[0].mxu0
      %1409 = vmatprep.mubr.bf16.mxu0 0
      %1410 = vmatmul.mubr.bf16.gmra.mrb[0].mxu0 %v1278
      %v1411 = vpop.f32.mrb[0].mxu0
      %v1412 = vadd.f32 %v1219, %v1411
      %v1413 = vpop.f32.mrb[0].mxu0
      %v1414 = vpop.f32.mrb[0].mxu0
      %v1415 = vadd.f32 %v1222, %v1414
      %v1416 = vpop.f32.mrb[0].mxu0
      %1417 = vmatprep.mubr.bf16.mxu0 0
      %1418 = vmatmul.mubr.bf16.gmra.mrb[0].mxu0 %v1279
      %v1419 = vpop.f32.mrb[0].mxu0
      %v1420 = vadd.f32 %v1227, %v1419
      %v1421 = vpop.f32.mrb[0].mxu0
      %v1422 = vpop.f32.mrb[0].mxu0
      %v1423 = vadd.f32 %v1230, %v1422
      %v1424 = vpop.f32.mrb[0].mxu0
      %1425 = vmatprep.mubr.bf16.mxu0 0
      %1426 = vmatmul.mubr.bf16.gmra.mrb[0].mxu0 %v1280
      %v1427 = vpop.f32.mrb[0].mxu0
      %v1428 = vadd.f32 %v1235, %v1427
      %v1429 = vpop.f32.mrb[0].mxu0
      %v1430 = vpop.f32.mrb[0].mxu0
      %v1431 = vadd.f32 %v1238, %v1430
      %v1432 = vpop.f32.mrb[0].mxu0
      %1433 = vdwg.mxu0
      %v1434 = vld [vmem:[#allocation2] sm:$0xe]
      %v1435 = vld [vmem:[#allocation2 + $0xc] sm:$0xe]
      %v1436 = vld [vmem:[#allocation2 + $0x18] sm:$0xe]
      %v1437 = vld [vmem:[#allocation2 + $0x24] sm:$0xe]
      %v1438 = vld [vmem:[#allocation2 + $0x30] sm:$0xe]
      %v1439 = vld [vmem:[#allocation2 + $0x3c] sm:$0xe]
      %v1440 = vld [vmem:[#allocation2 + $0x48] sm:$0xe]
      %v1441 = vld [vmem:[#allocation2 + $0x54] sm:$0xe]
      %vm1458 = vcmask 1042432
      %vm1459 = vcmask 1046532
      %vm1460 = vmor %vm1458, %vm1459
      %v1461 = vrot.slane %v1434, 5
      %v1462 = vrot.slane %v1461, 4
      %v1463 = vrot.slane %v814, 5
      %v1464 = vsel %vm1460, %v1462, %v1463
      %v1465 = vrot.slane %v1463, 4
      %v1466 = vrot.slane %v845, 5
      %v1467 = vsel %vm1460, %v1465, %v1466
      %v1468 = vrot.slane %v1435, 5
      %v1469 = vrot.slane %v1468, 4
      %v1470 = vrot.slane %v816, 5
      %v1471 = vsel %vm1460, %v1469, %v1470
      %v1472 = vrot.slane %v1470, 4
      %v1473 = vrot.slane %v846, 5
      %v1474 = vsel %vm1460, %v1472, %v1473
      %v1475 = vrot.slane %v1436, 5
      %v1476 = vrot.slane %v1475, 4
      %v1477 = vrot.slane %v818, 5
      %v1478 = vsel %vm1460, %v1476, %v1477
      %v1479 = vrot.slane %v1477, 4
      %v1480 = vrot.slane %v847, 5
      %v1481 = vsel %vm1460, %v1479, %v1480
      %v1482 = vrot.slane %v1437, 5
      %v1483 = vrot.slane %v1482, 4
      %v1484 = vrot.slane %v820, 5
      %v1485 = vsel %vm1460, %v1483, %v1484
      %v1486 = vrot.slane %v1484, 4
      %v1487 = vrot.slane %v848, 5
      %v1488 = vsel %vm1460, %v1486, %v1487
      %v1489 = vrot.slane %v1438, 5
      %v1490 = vrot.slane %v1489, 4
      %v1491 = vrot.slane %v822, 5
      %v1492 = vsel %vm1460, %v1490, %v1491
      %v1493 = vrot.slane %v1491, 4
      %v1494 = vrot.slane %v849, 5
      %v1495 = vsel %vm1460, %v1493, %v1494
      %v1496 = vrot.slane %v1439, 5
      %v1497 = vrot.slane %v1496, 4
      %v1498 = vrot.slane %v824, 5
      %v1499 = vsel %vm1460, %v1497, %v1498
      %v1500 = vrot.slane %v1498, 4
      %v1501 = vrot.slane %v850, 5
      %v1502 = vsel %vm1460, %v1500, %v1501
      %v1503 = vrot.slane %v1440, 5
      %v1504 = vrot.slane %v1503, 4
      %v1505 = vrot.slane %v826, 5
      %v1506 = vsel %vm1460, %v1504, %v1505
      %v1507 = vrot.slane %v1505, 4
      %v1508 = vrot.slane %v851, 5
      %v1509 = vsel %vm1460, %v1507, %v1508
      %v1510 = vrot.slane %v1441, 5
      %v1511 = vrot.slane %v1510, 4
      %v1512 = vrot.slane %v828, 5
      %v1513 = vsel %vm1460, %v1511, %v1512
      %v1514 = vrot.slane %v1512, 4
      %v1515 = vrot.slane %v852, 5
      %v1516 = vsel %vm1460, %v1514, %v1515
      %v1517 = vld [vmem:[%s3 + $0x80] sm:$0xf]
      %v1518 = vld [vmem:[%s3 + $0x84] sm:$0xf]
      %v1519 = vld [vmem:[%s3 + $0x88] sm:$0xf]
      %v1520 = vld [vmem:[%s3 + $0x8c] sm:$0xf]
      %v1521 = vld [vmem:[%s3 + $0x90] sm:$0xf]
      %v1522 = vld [vmem:[%s3 + $0x94] sm:$0xf]
      %v1523 = vld [vmem:[%s3 + $0x98] sm:$0xf]
      %v1524 = vld [vmem:[%s3 + $0x9c] sm:$0xf]
      %v1525 = vld [vmem:[%s3 + $0xa0] sm:$0xf]
      %v1526 = vld [vmem:[%s3 + $0xa4] sm:$0xf]
      %v1527 = vld [vmem:[%s3 + $0xa8] sm:$0xf]
      %v1528 = vld [vmem:[%s3 + $0xac] sm:$0xf]
      %v1529 = vld [vmem:[%s3 + $0xb0] sm:$0xf]
      %v1530 = vld [vmem:[%s3 + $0xb4] sm:$0xf]
      %v1531 = vld [vmem:[%s3 + $0xb8] sm:$0xf]
      %v1532 = vld [vmem:[%s3 + $0xbc] sm:$0xf]
      %v1533 = vunpack.c.l.b16 %v1464
      %v1534 = vunpack.c.l.b16 %v1467
      %v1535 = vunpack.c.l.b16 %v1471
      %v1536 = vunpack.c.l.b16 %v1474
      %v1537 = vunpack.c.l.b16 %v1478
      %v1538 = vunpack.c.l.b16 %v1481
      %v1539 = vunpack.c.l.b16 %v1485
      %v1540 = vunpack.c.l.b16 %v1488
      %v1541 = vunpack.c.l.b16 %v1492
      %v1542 = vunpack.c.l.b16 %v1495
      %v1543 = vunpack.c.l.b16 %v1499
      %v1544 = vunpack.c.l.b16 %v1502
      %v1545 = vunpack.c.l.b16 %v1506
      %v1546 = vunpack.c.l.b16 %v1509
      %v1547 = vunpack.c.l.b16 %v1513
      %v1548 = vunpack.c.l.b16 %v1516
      %v1549 = vpack.c.b16 %v1534, %v1533
      %v1550 = vpack.c.b16 %v1536, %v1535
      %v1551 = vpack.c.b16 %v1538, %v1537
      %v1552 = vpack.c.b16 %v1540, %v1539
      %v1553 = vpack.c.b16 %v1542, %v1541
      %v1554 = vpack.c.b16 %v1544, %v1543
      %v1555 = vpack.c.b16 %v1546, %v1545
      %v1556 = vpack.c.b16 %v1548, %v1547
      %v1581 = vunpack.c.l.b16 %v1517
      %v1582 = vunpack.c.l.b16 %v1518
      %v1583 = vunpack.c.l.b16 %v1519
      %v1584 = vunpack.c.l.b16 %v1520
      %v1585 = vunpack.c.l.b16 %v1521
      %v1586 = vunpack.c.l.b16 %v1522
      %v1587 = vunpack.c.l.b16 %v1523
      %v1588 = vunpack.c.l.b16 %v1524
      %v1589 = vunpack.c.l.b16 %v1525
      %v1590 = vunpack.c.l.b16 %v1526
      %v1591 = vunpack.c.l.b16 %v1527
      %v1592 = vunpack.c.l.b16 %v1528
      %v1593 = vunpack.c.l.b16 %v1529
      %v1594 = vunpack.c.l.b16 %v1530
      %v1595 = vunpack.c.l.b16 %v1531
      %v1596 = vunpack.c.l.b16 %v1532
      %v1597 = vpack.c.b16 %v1582, %v1581
      %v1598 = vpack.c.b16 %v1584, %v1583
      %v1599 = vpack.c.b16 %v1586, %v1585
      %v1600 = vpack.c.b16 %v1588, %v1587
      %v1601 = vpack.c.b16 %v1590, %v1589
      %v1602 = vpack.c.b16 %v1592, %v1591
      %v1603 = vpack.c.b16 %v1594, %v1593
      %v1604 = vpack.c.b16 %v1596, %v1595
      %1613 = vmatprep.subr.bf16.mxu0 0
      %1614 = vmatpush1.bf16.msra.mxu0 %v1597
      %1615 = vmatprep.subr.bf16.mxu0 0
      %1616 = vmatpush1.bf16.msra.mxu0 %v1598
      %1617 = vmatprep.subr.bf16.mxu0 0
      %1618 = vmatpush1.bf16.msra.mxu0 %v1599
      %1619 = vmatprep.subr.bf16.mxu0 0
      %1620 = vmatpush1.bf16.msra.mxu0 %v1600
      %1621 = vmatprep.subr.bf16.mxu0 0
      %1622 = vmatpush1.bf16.msra.mxu0 %v1601
      %1623 = vmatprep.subr.bf16.mxu0 0
      %1624 = vmatpush1.bf16.msra.mxu0 %v1602
      %1625 = vmatprep.subr.bf16.mxu0 0
      %1626 = vmatpush1.bf16.msra.mxu0 %v1603
      %1627 = vmatprep.subr.bf16.mxu0 0
      %1628 = vmatpush1.bf16.msra.mxu0 %v1604
      %1629 = vmatprep.subr.bf16.mxu0 0
      %1630 = vmatpush1.bf16.msra.mxu0 0
      %1631 = vmatprep.subr.bf16.mxu0 0
      %1632 = vmatpush1.bf16.msra.mxu0 0
      %1633 = vmatprep.subr.bf16.mxu0 0
      %1634 = vmatpush1.bf16.msra.mxu0 0
      %1635 = vmatprep.subr.bf16.mxu0 0
      %1636 = vmatpush1.bf16.msra.mxu0 0
      %1637 = vmatprep.subr.bf16.mxu0 0
      %1638 = vmatpush1.bf16.msra.mxu0 0
      %1639 = vmatprep.subr.bf16.mxu0 0
      %1640 = vmatpush1.bf16.msra.mxu0 0
      %1641 = vmatprep.subr.bf16.mxu0 0
      %1642 = vmatpush1.bf16.msra.mxu0 0
      %1643 = vmatprep.subr.bf16.mxu0 0
      %1644 = vmatpush1.bf16.msra.mxu0 0
      %1645 = vmatprep.mubr.bf16.mxu0 0
      %1646 = vmatmul.mubr.bf16.gmra.mrb[0].mxu0 %v1549
      %v1647 = vpop.f32.mrb[0].mxu0
      %v1648 = vadd.f32 0.0, %v1647
      %v1649 = vpop.f32.mrb[0].mxu0
      %v1650 = vpop.f32.mrb[0].mxu0
      %v1651 = vadd.f32 0.0, %v1650
      %v1652 = vpop.f32.mrb[0].mxu0
      %1653 = vmatprep.mubr.bf16.mxu0 0
      %1654 = vmatmul.mubr.bf16.gmra.mrb[0].mxu0 %v1550
      %v1655 = vpop.f32.mrb[0].mxu0
      %v1656 = vadd.f32 0.0, %v1655
      %v1657 = vpop.f32.mrb[0].mxu0
      %v1658 = vpop.f32.mrb[0].mxu0
      %v1659 = vadd.f32 0.0, %v1658
      %v1660 = vpop.f32.mrb[0].mxu0
      %1661 = vmatprep.mubr.bf16.mxu0 0
      %1662 = vmatmul.mubr.bf16.gmra.mrb[0].mxu0 %v1551
      %v1663 = vpop.f32.mrb[0].mxu0
      %v1664 = vadd.f32 0.0, %v1663
      %v1665 = vpop.f32.mrb[0].mxu0
      %v1666 = vpop.f32.mrb[0].mxu0
      %v1667 = vadd.f32 0.0, %v1666
      %v1668 = vpop.f32.mrb[0].mxu0
      %1669 = vmatprep.mubr.bf16.mxu0 0
      %1670 = vmatmul.mubr.bf16.gmra.mrb[0].mxu0 %v1552
      %v1671 = vpop.f32.mrb[0].mxu0
      %v1672 = vadd.f32 0.0, %v1671
      %v1673 = vpop.f32.mrb[0].mxu0
      %v1674 = vpop.f32.mrb[0].mxu0
      %v1675 = vadd.f32 0.0, %v1674
      %v1676 = vpop.f32.mrb[0].mxu0
      %1677 = vmatprep.mubr.bf16.mxu0 0
      %1678 = vmatmul.mubr.bf16.gmra.mrb[0].mxu0 %v1553
      %v1679 = vpop.f32.mrb[0].mxu0
      %v1680 = vadd.f32 0.0, %v1679
      %v1681 = vpop.f32.mrb[0].mxu0
      %v1682 = vpop.f32.mrb[0].mxu0
      %v1683 = vadd.f32 0.0, %v1682
      %v1684 = vpop.f32.mrb[0].mxu0
      %1685 = vmatprep.mubr.bf16.mxu0 0
      %1686 = vmatmul.mubr.bf16.gmra.mrb[0].mxu0 %v1554
      %v1687 = vpop.f32.mrb[0].mxu0
      %v1688 = vadd.f32 0.0, %v1687
      %v1689 = vpop.f32.mrb[0].mxu0
      %v1690 = vpop.f32.mrb[0].mxu0
      %v1691 = vadd.f32 0.0, %v1690
      %v1692 = vpop.f32.mrb[0].mxu0
      %1693 = vmatprep.mubr.bf16.mxu0 0
      %1694 = vmatmul.mubr.bf16.gmra.mrb[0].mxu0 %v1555
      %v1695 = vpop.f32.mrb[0].mxu0
      %v1696 = vadd.f32 0.0, %v1695
      %v1697 = vpop.f32.mrb[0].mxu0
      %v1698 = vpop.f32.mrb[0].mxu0
      %v1699 = vadd.f32 0.0, %v1698
      %v1700 = vpop.f32.mrb[0].mxu0
      %1701 = vmatprep.mubr.bf16.mxu0 0
      %1702 = vmatmul.mubr.bf16.gmra.mrb[0].mxu0 %v1556
      %v1703 = vpop.f32.mrb[0].mxu0
      %v1704 = vadd.f32 0.0, %v1703
      %v1705 = vpop.f32.mrb[0].mxu0
      %v1706 = vpop.f32.mrb[0].mxu0
      %v1707 = vadd.f32 0.0, %v1706
      %v1708 = vpop.f32.mrb[0].mxu0
      %1709 = vdwg.mxu0
      %v1710 = vadd.f32 %v1372, %v1648
      %v1711 = vadd.f32 %v1375, %v1651
      %v1712 = vadd.f32 %v1380, %v1656
      %v1713 = vadd.f32 %v1383, %v1659
      %v1714 = vadd.f32 %v1388, %v1664
      %v1715 = vadd.f32 %v1391, %v1667
      %v1716 = vadd.f32 %v1396, %v1672
      %v1717 = vadd.f32 %v1399, %v1675
      %v1718 = vadd.f32 %v1404, %v1680
      %v1719 = vadd.f32 %v1407, %v1683
      %v1720 = vadd.f32 %v1412, %v1688
      %v1721 = vadd.f32 %v1415, %v1691
      %v1722 = vadd.f32 %v1420, %v1696
      %v1723 = vadd.f32 %v1423, %v1699
      %v1724 = vadd.f32 %v1428, %v1704
      %v1725 = vadd.f32 %v1431, %v1707
      %v1726 = vld [vmem:[%s722] sm:$0xf]
      %v1727 = vld [vmem:[%s722 + $0x4] sm:$0xf]
      %v1728 = vld [vmem:[%s722 + $0xc] sm:$0xf]
      %v1729 = vld [vmem:[%s722 + $0x10] sm:$0xf]
      %v1730 = vld [vmem:[%s722 + $0x18] sm:$0xf]
      %v1731 = vld [vmem:[%s722 + $0x1c] sm:$0xf]
      %v1732 = vld [vmem:[%s722 + $0x24] sm:$0xf]
      %v1733 = vld [vmem:[%s722 + $0x28] sm:$0xf]
      %v1734 = vld [vmem:[%s722 + $0x30] sm:$0xf]
      %v1735 = vld [vmem:[%s722 + $0x34] sm:$0xf]
      %v1736 = vld [vmem:[%s722 + $0x3c] sm:$0xf]
      %v1737 = vld [vmem:[%s722 + $0x40] sm:$0xf]
      %v1738 = vld [vmem:[%s722 + $0x48] sm:$0xf]
      %v1739 = vld [vmem:[%s722 + $0x4c] sm:$0xf]
      %v1740 = vld [vmem:[%s722 + $0x54] sm:$0xf]
      %v1741 = vld [vmem:[%s722 + $0x58] sm:$0xf]
      %v1742 = vld [vmem:[%s3 + $0xc0] sm:$0xf]
      %v1743 = vld [vmem:[%s3 + $0xc4] sm:$0xf]
      %v1744 = vld [vmem:[%s3 + $0xc8] sm:$0xf]
      %v1745 = vld [vmem:[%s3 + $0xcc] sm:$0xf]
      %v1746 = vld [vmem:[%s3 + $0xd0] sm:$0xf]
      %v1747 = vld [vmem:[%s3 + $0xd4] sm:$0xf]
      %v1748 = vld [vmem:[%s3 + $0xd8] sm:$0xf]
      %v1749 = vld [vmem:[%s3 + $0xdc] sm:$0xf]
      %v1750 = vld [vmem:[%s3 + $0xe0] sm:$0xf]
      %v1751 = vld [vmem:[%s3 + $0xe4] sm:$0xf]
      %v1752 = vld [vmem:[%s3 + $0xe8] sm:$0xf]
      %v1753 = vld [vmem:[%s3 + $0xec] sm:$0xf]
      %v1754 = vld [vmem:[%s3 + $0xf0] sm:$0xf]
      %v1755 = vld [vmem:[%s3 + $0xf4] sm:$0xf]
      %v1756 = vld [vmem:[%s3 + $0xf8] sm:$0xf]
      %v1757 = vld [vmem:[%s3 + $0xfc] sm:$0xf]
      %v1774 = vunpack.c.l.b16 %v1726
      %v1775 = vunpack.c.l.b16 %v1727
      %v1776 = vunpack.c.l.b16 %v1728
      %v1777 = vunpack.c.l.b16 %v1729
      %v1778 = vunpack.c.l.b16 %v1730
      %v1779 = vunpack.c.l.b16 %v1731
      %v1780 = vunpack.c.l.b16 %v1732
      %v1781 = vunpack.c.l.b16 %v1733
      %v1782 = vunpack.c.l.b16 %v1734
      %v1783 = vunpack.c.l.b16 %v1735
      %v1784 = vunpack.c.l.b16 %v1736
      %v1785 = vunpack.c.l.b16 %v1737
      %v1786 = vunpack.c.l.b16 %v1738
      %v1787 = vunpack.c.l.b16 %v1739
      %v1788 = vunpack.c.l.b16 %v1740
      %v1789 = vunpack.c.l.b16 %v1741
      %v1790 = vpack.c.b16 %v1775, %v1774
      %v1791 = vpack.c.b16 %v1777, %v1776
      %v1792 = vpack.c.b16 %v1779, %v1778
      %v1793 = vpack.c.b16 %v1781, %v1780
      %v1794 = vpack.c.b16 %v1783, %v1782
      %v1795 = vpack.c.b16 %v1785, %v1784
      %v1796 = vpack.c.b16 %v1787, %v1786
      %v1797 = vpack.c.b16 %v1789, %v1788
      %v1822 = vunpack.c.l.b16 %v1742
      %v1823 = vunpack.c.l.b16 %v1743
      %v1824 = vunpack.c.l.b16 %v1744
      %v1825 = vunpack.c.l.b16 %v1745
      %v1826 = vunpack.c.l.b16 %v1746
      %v1827 = vunpack.c.l.b16 %v1747
      %v1828 = vunpack.c.l.b16 %v1748
      %v1829 = vunpack.c.l.b16 %v1749
      %v1830 = vunpack.c.l.b16 %v1750
      %v1831 = vunpack.c.l.b16 %v1751
      %v1832 = vunpack.c.l.b16 %v1752
      %v1833 = vunpack.c.l.b16 %v1753
      %v1834 = vunpack.c.l.b16 %v1754
      %v1835 = vunpack.c.l.b16 %v1755
      %v1836 = vunpack.c.l.b16 %v1756
      %v1837 = vunpack.c.l.b16 %v1757
      %v1838 = vpack.c.b16 %v1823, %v1822
      %v1839 = vpack.c.b16 %v1825, %v1824
      %v1840 = vpack.c.b16 %v1827, %v1826
      %v1841 = vpack.c.b16 %v1829, %v1828
      %v1842 = vpack.c.b16 %v1831, %v1830
      %v1843 = vpack.c.b16 %v1833, %v1832
      %v1844 = vpack.c.b16 %v1835, %v1834
      %v1845 = vpack.c.b16 %v1837, %v1836
      %1854 = vmatprep.subr.bf16.mxu0 0
      %1855 = vmatpush1.bf16.msra.mxu0 %v1838
      %1856 = vmatprep.subr.bf16.mxu0 0
      %1857 = vmatpush1.bf16.msra.mxu0 %v1839
      %1858 = vmatprep.subr.bf16.mxu0 0
      %1859 = vmatpush1.bf16.msra.mxu0 %v1840
      %1860 = vmatprep.subr.bf16.mxu0 0
      %1861 = vmatpush1.bf16.msra.mxu0 %v1841
      %1862 = vmatprep.subr.bf16.mxu0 0
      %1863 = vmatpush1.bf16.msra.mxu0 %v1842
      %1864 = vmatprep.subr.bf16.mxu0 0
      %1865 = vmatpush1.bf16.msra.mxu0 %v1843
      %1866 = vmatprep.subr.bf16.mxu0 0
      %1867 = vmatpush1.bf16.msra.mxu0 %v1844
      %1868 = vmatprep.subr.bf16.mxu0 0
      %1869 = vmatpush1.bf16.msra.mxu0 %v1845
      %1870 = vmatprep.subr.bf16.mxu0 0
      %1871 = vmatpush1.bf16.msra.mxu0 0
      %1872 = vmatprep.subr.bf16.mxu0 0
      %1873 = vmatpush1.bf16.msra.mxu0 0
      %1874 = vmatprep.subr.bf16.mxu0 0
      %1875 = vmatpush1.bf16.msra.mxu0 0
      %1876 = vmatprep.subr.bf16.mxu0 0
      %1877 = vmatpush1.bf16.msra.mxu0 0
      %1878 = vmatprep.subr.bf16.mxu0 0
      %1879 = vmatpush1.bf16.msra.mxu0 0
      %1880 = vmatprep.subr.bf16.mxu0 0
      %1881 = vmatpush1.bf16.msra.mxu0 0
      %1882 = vmatprep.subr.bf16.mxu0 0
      %1883 = vmatpush1.bf16.msra.mxu0 0
      %1884 = vmatprep.subr.bf16.mxu0 0
      %1885 = vmatpush1.bf16.msra.mxu0 0
      %1886 = vmatprep.mubr.bf16.mxu0 0
      %1887 = vmatmul.mubr.bf16.gmra.mrb[0].mxu0 %v1790
      %v1888 = vpop.f32.mrb[0].mxu0
      %v1889 = vadd.f32 0.0, %v1888
      %v1890 = vpop.f32.mrb[0].mxu0
      %v1891 = vpop.f32.mrb[0].mxu0
      %v1892 = vadd.f32 0.0, %v1891
      %v1893 = vpop.f32.mrb[0].mxu0
      %1894 = vmatprep.mubr.bf16.mxu0 0
      %1895 = vmatmul.mubr.bf16.gmra.mrb[0].mxu0 %v1791
      %v1896 = vpop.f32.mrb[0].mxu0
      %v1897 = vadd.f32 0.0, %v1896
      %v1898 = vpop.f32.mrb[0].mxu0
      %v1899 = vpop.f32.mrb[0].mxu0
      %v1900 = vadd.f32 0.0, %v1899
      %v1901 = vpop.f32.mrb[0].mxu0
      %1902 = vmatprep.mubr.bf16.mxu0 0
      %1903 = vmatmul.mubr.bf16.gmra.mrb[0].mxu0 %v1792
      %v1904 = vpop.f32.mrb[0].mxu0
      %v1905 = vadd.f32 0.0, %v1904
      %v1906 = vpop.f32.mrb[0].mxu0
      %v1907 = vpop.f32.mrb[0].mxu0
      %v1908 = vadd.f32 0.0, %v1907
      %v1909 = vpop.f32.mrb[0].mxu0
      %1910 = vmatprep.mubr.bf16.mxu0 0
      %1911 = vmatmul.mubr.bf16.gmra.mrb[0].mxu0 %v1793
      %v1912 = vpop.f32.mrb[0].mxu0
      %v1913 = vadd.f32 0.0, %v1912
      %v1914 = vpop.f32.mrb[0].mxu0
      %v1915 = vpop.f32.mrb[0].mxu0
      %v1916 = vadd.f32 0.0, %v1915
      %v1917 = vpop.f32.mrb[0].mxu0
      %1918 = vmatprep.mubr.bf16.mxu0 0
      %1919 = vmatmul.mubr.bf16.gmra.mrb[0].mxu0 %v1794
      %v1920 = vpop.f32.mrb[0].mxu0
      %v1921 = vadd.f32 0.0, %v1920
      %v1922 = vpop.f32.mrb[0].mxu0
      %v1923 = vpop.f32.mrb[0].mxu0
      %v1924 = vadd.f32 0.0, %v1923
      %v1925 = vpop.f32.mrb[0].mxu0
      %1926 = vmatprep.mubr.bf16.mxu0 0
      %1927 = vmatmul.mubr.bf16.gmra.mrb[0].mxu0 %v1795
      %v1928 = vpop.f32.mrb[0].mxu0
      %v1929 = vadd.f32 0.0, %v1928
      %v1930 = vpop.f32.mrb[0].mxu0
      %v1931 = vpop.f32.mrb[0].mxu0
      %v1932 = vadd.f32 0.0, %v1931
      %v1933 = vpop.f32.mrb[0].mxu0
      %1934 = vmatprep.mubr.bf16.mxu0 0
      %1935 = vmatmul.mubr.bf16.gmra.mrb[0].mxu0 %v1796
      %v1936 = vpop.f32.mrb[0].mxu0
      %v1937 = vadd.f32 0.0, %v1936
      %v1938 = vpop.f32.mrb[0].mxu0
      %v1939 = vpop.f32.mrb[0].mxu0
      %v1940 = vadd.f32 0.0, %v1939
      %v1941 = vpop.f32.mrb[0].mxu0
      %1942 = vmatprep.mubr.bf16.mxu0 0
      %1943 = vmatmul.mubr.bf16.gmra.mrb[0].mxu0 %v1797
      %v1944 = vpop.f32.mrb[0].mxu0
      %v1945 = vadd.f32 0.0, %v1944
      %v1946 = vpop.f32.mrb[0].mxu0
      %v1947 = vpop.f32.mrb[0].mxu0
      %v1948 = vadd.f32 0.0, %v1947
      %v1949 = vpop.f32.mrb[0].mxu0
      %1950 = vdwg.mxu0
      %v1951 = vadd.f32 %v1710, %v1889
      %v1952 = vadd.f32 %v1711, %v1892
      %v1953 = vadd.f32 %v1712, %v1897
      %v1954 = vadd.f32 %v1713, %v1900
      %v1955 = vadd.f32 %v1714, %v1905
      %v1956 = vadd.f32 %v1715, %v1908
      %v1957 = vadd.f32 %v1716, %v1913
      %v1958 = vadd.f32 %v1717, %v1916
      %v1959 = vadd.f32 %v1718, %v1921
      %v1960 = vadd.f32 %v1719, %v1924
      %v1961 = vadd.f32 %v1720, %v1929
      %v1962 = vadd.f32 %v1721, %v1932
      %v1963 = vadd.f32 %v1722, %v1937
      %v1964 = vadd.f32 %v1723, %v1940
      %v1965 = vadd.f32 %v1724, %v1945
      %v1966 = vadd.f32 %v1725, %v1948
      %v1967 = vld [vmem:[%s722] sm:$0xf]
      %v1968 = vld [vmem:[%s722 + $0x4] sm:$0xf]
      %v1969 = vld [vmem:[%s722 + $0x8] sm:$0x1]
      %v1970 = vld [vmem:[%s722 + $0xc] sm:$0xf]
      %v1971 = vld [vmem:[%s722 + $0x10] sm:$0xf]
      %v1972 = vld [vmem:[%s722 + $0x14] sm:$0x1]
      %v1973 = vld [vmem:[%s722 + $0x18] sm:$0xf]
      %v1974 = vld [vmem:[%s722 + $0x1c] sm:$0xf]
      %v1975 = vld [vmem:[%s722 + $0x20] sm:$0x1]
      %v1976 = vld [vmem:[%s722 + $0x24] sm:$0xf]
      %v1977 = vld [vmem:[%s722 + $0x28] sm:$0xf]
      %v1978 = vld [vmem:[%s722 + $0x2c] sm:$0x1]
      %v1979 = vld [vmem:[%s722 + $0x30] sm:$0xf]
      %v1980 = vld [vmem:[%s722 + $0x34] sm:$0xf]
      %v1981 = vld [vmem:[%s722 + $0x38] sm:$0x1]
      %v1982 = vld [vmem:[%s722 + $0x3c] sm:$0xf]
      %v1983 = vld [vmem:[%s722 + $0x40] sm:$0xf]
      %v1984 = vld [vmem:[%s722 + $0x44] sm:$0x1]
      %v1985 = vld [vmem:[%s722 + $0x48] sm:$0xf]
      %v1986 = vld [vmem:[%s722 + $0x4c] sm:$0xf]
      %v1987 = vld [vmem:[%s722 + $0x50] sm:$0x1]
      %v1988 = vld [vmem:[%s722 + $0x54] sm:$0xf]
      %v1989 = vld [vmem:[%s722 + $0x58] sm:$0xf]
      %v1990 = vld [vmem:[%s722 + $0x5c] sm:$0x1]
      %v1992 = vshrl.u32 %v1967, 16
      %v1994 = vrot.slane %v1992, 4
      %v1995 = vshll.u32 %v1967, 16
      %v1997 = vrot.slane %v1995, 5
      %v1998 = vor.u32 %v1994, %v1997
      %v1999 = vrot.slane %v1998, 4
      %v2001 = vshll.u32 %v1968, 16
      %v2003 = vrot.slane %v2001, 5
      %v2004 = vsel %vm855, %v1999, %v2003
      %v2005 = vshrl.u32 %v1968, 16
      %v2007 = vrot.slane %v2005, 4
      %v2008 = vor.u32 %v2007, %v2003
      %v2009 = vrot.slane %v2008, 4
      %v2011 = vshll.u32 %v1969, 16
      %v2013 = vrot.slane %v2011, 5
      %v2014 = vsel %vm855, %v2009, %v2013
      %v2016 = vshrl.u32 %v1970, 16
      %v2018 = vrot.slane %v2016, 4
      %v2019 = vshll.u32 %v1970, 16
      %v2021 = vrot.slane %v2019, 5
      %v2022 = vor.u32 %v2018, %v2021
      %v2023 = vrot.slane %v2022, 4
      %v2025 = vshll.u32 %v1971, 16
      %v2027 = vrot.slane %v2025, 5
      %v2028 = vsel %vm855, %v2023, %v2027
      %v2029 = vshrl.u32 %v1971, 16
      %v2031 = vrot.slane %v2029, 4
      %v2032 = vor.u32 %v2031, %v2027
      %v2033 = vrot.slane %v2032, 4
      %v2035 = vshll.u32 %v1972, 16
      %v2037 = vrot.slane %v2035, 5
      %v2038 = vsel %vm855, %v2033, %v2037
      %v2040 = vshrl.u32 %v1973, 16
      %v2042 = vrot.slane %v2040, 4
      %v2043 = vshll.u32 %v1973, 16
      %v2045 = vrot.slane %v2043, 5
      %v2046 = vor.u32 %v2042, %v2045
      %v2047 = vrot.slane %v2046, 4
      %v2049 = vshll.u32 %v1974, 16
      %v2051 = vrot.slane %v2049, 5
      %v2052 = vsel %vm855, %v2047, %v2051
      %v2053 = vshrl.u32 %v1974, 16
      %v2055 = vrot.slane %v2053, 4
      %v2056 = vor.u32 %v2055, %v2051
      %v2057 = vrot.slane %v2056, 4
      %v2059 = vshll.u32 %v1975, 16
      %v2061 = vrot.slane %v2059, 5
      %v2062 = vsel %vm855, %v2057, %v2061
      %v2064 = vshrl.u32 %v1976, 16
      %v2066 = vrot.slane %v2064, 4
      %v2067 = vshll.u32 %v1976, 16
      %v2069 = vrot.slane %v2067, 5
      %v2070 = vor.u32 %v2066, %v2069
      %v2071 = vrot.slane %v2070, 4
      %v2073 = vshll.u32 %v1977, 16
      %v2075 = vrot.slane %v2073, 5
      %v2076 = vsel %vm855, %v2071, %v2075
      %v2077 = vshrl.u32 %v1977, 16
      %v2079 = vrot.slane %v2077, 4
      %v2080 = vor.u32 %v2079, %v2075
      %v2081 = vrot.slane %v2080, 4
      %v2083 = vshll.u32 %v1978, 16
      %v2085 = vrot.slane %v2083, 5
      %v2086 = vsel %vm855, %v2081, %v2085
      %v2088 = vshrl.u32 %v1979, 16
      %v2090 = vrot.slane %v2088, 4
      %v2091 = vshll.u32 %v1979, 16
      %v2093 = vrot.slane %v2091, 5
      %v2094 = vor.u32 %v2090, %v2093
      %v2095 = vrot.slane %v2094, 4
      %v2097 = vshll.u32 %v1980, 16
      %v2099 = vrot.slane %v2097, 5
      %v2100 = vsel %vm855, %v2095, %v2099
      %v2101 = vshrl.u32 %v1980, 16
      %v2103 = vrot.slane %v2101, 4
      %v2104 = vor.u32 %v2103, %v2099
      %v2105 = vrot.slane %v2104, 4
      %v2107 = vshll.u32 %v1981, 16
      %v2109 = vrot.slane %v2107, 5
      %v2110 = vsel %vm855, %v2105, %v2109
      %v2112 = vshrl.u32 %v1982, 16
      %v2114 = vrot.slane %v2112, 4
      %v2115 = vshll.u32 %v1982, 16
      %v2117 = vrot.slane %v2115, 5
      %v2118 = vor.u32 %v2114, %v2117
      %v2119 = vrot.slane %v2118, 4
      %v2121 = vshll.u32 %v1983, 16
      %v2123 = vrot.slane %v2121, 5
      %v2124 = vsel %vm855, %v2119, %v2123
      %v2125 = vshrl.u32 %v1983, 16
      %v2127 = vrot.slane %v2125, 4
      %v2128 = vor.u32 %v2127, %v2123
      %v2129 = vrot.slane %v2128, 4
      %v2131 = vshll.u32 %v1984, 16
      %v2133 = vrot.slane %v2131, 5
      %v2134 = vsel %vm855, %v2129, %v2133
      %v2136 = vshrl.u32 %v1985, 16
      %v2138 = vrot.slane %v2136, 4
      %v2139 = vshll.u32 %v1985, 16
      %v2141 = vrot.slane %v2139, 5
      %v2142 = vor.u32 %v2138, %v2141
      %v2143 = vrot.slane %v2142, 4
      %v2145 = vshll.u32 %v1986, 16
      %v2147 = vrot.slane %v2145, 5
      %v2148 = vsel %vm855, %v2143, %v2147
      %v2149 = vshrl.u32 %v1986, 16
      %v2151 = vrot.slane %v2149, 4
      %v2152 = vor.u32 %v2151, %v2147
      %v2153 = vrot.slane %v2152, 4
      %v2155 = vshll.u32 %v1987, 16
      %v2157 = vrot.slane %v2155, 5
      %v2158 = vsel %vm855, %v2153, %v2157
      %v2160 = vshrl.u32 %v1988, 16
      %v2162 = vrot.slane %v2160, 4
      %v2163 = vshll.u32 %v1988, 16
      %v2165 = vrot.slane %v2163, 5
      %v2166 = vor.u32 %v2162, %v2165
      %v2167 = vrot.slane %v2166, 4
      %v2169 = vshll.u32 %v1989, 16
      %v2171 = vrot.slane %v2169, 5
      %v2172 = vsel %vm855, %v2167, %v2171
      %v2173 = vshrl.u32 %v1989, 16
      %v2175 = vrot.slane %v2173, 4
      %v2176 = vor.u32 %v2175, %v2171
      %v2177 = vrot.slane %v2176, 4
      %v2179 = vshll.u32 %v1990, 16
      %v2181 = vrot.slane %v2179, 5
      %v2182 = vsel %vm855, %v2177, %v2181
      %v2183 = vld [vmem:[%s3 + $0x100] sm:$0xf]
      %v2184 = vld [vmem:[%s3 + $0x104] sm:$0xf]
      %v2185 = vld [vmem:[%s3 + $0x108] sm:$0xf]
      %v2186 = vld [vmem:[%s3 + $0x10c] sm:$0xf]
      %v2187 = vld [vmem:[%s3 + $0x110] sm:$0xf]
      %v2188 = vld [vmem:[%s3 + $0x114] sm:$0xf]
      %v2189 = vld [vmem:[%s3 + $0x118] sm:$0xf]
      %v2190 = vld [vmem:[%s3 + $0x11c] sm:$0xf]
      %v2191 = vld [vmem:[%s3 + $0x120] sm:$0xf]
      %v2192 = vld [vmem:[%s3 + $0x124] sm:$0xf]
      %v2193 = vld [vmem:[%s3 + $0x128] sm:$0xf]
      %v2194 = vld [vmem:[%s3 + $0x12c] sm:$0xf]
      %v2195 = vld [vmem:[%s3 + $0x130] sm:$0xf]
      %v2196 = vld [vmem:[%s3 + $0x134] sm:$0xf]
      %v2197 = vld [vmem:[%s3 + $0x138] sm:$0xf]
      %v2198 = vld [vmem:[%s3 + $0x13c] sm:$0xf]
      %v2199 = vunpack.c.l.b16 %v2004
      %v2200 = vunpack.c.l.b16 %v2014
      %v2201 = vunpack.c.l.b16 %v2028
      %v2202 = vunpack.c.l.b16 %v2038
      %v2203 = vunpack.c.l.b16 %v2052
      %v2204 = vunpack.c.l.b16 %v2062
      %v2205 = vunpack.c.l.b16 %v2076
      %v2206 = vunpack.c.l.b16 %v2086
      %v2207 = vunpack.c.l.b16 %v2100
      %v2208 = vunpack.c.l.b16 %v2110
      %v2209 = vunpack.c.l.b16 %v2124
      %v2210 = vunpack.c.l.b16 %v2134
      %v2211 = vunpack.c.l.b16 %v2148
      %v2212 = vunpack.c.l.b16 %v2158
      %v2213 = vunpack.c.l.b16 %v2172
      %v2214 = vunpack.c.l.b16 %v2182
      %v2215 = vpack.c.b16 %v2200, %v2199
      %v2216 = vpack.c.b16 %v2202, %v2201
      %v2217 = vpack.c.b16 %v2204, %v2203
      %v2218 = vpack.c.b16 %v2206, %v2205
      %v2219 = vpack.c.b16 %v2208, %v2207
      %v2220 = vpack.c.b16 %v2210, %v2209
      %v2221 = vpack.c.b16 %v2212, %v2211
      %v2222 = vpack.c.b16 %v2214, %v2213
      %v2247 = vunpack.c.l.b16 %v2183
      %v2248 = vunpack.c.l.b16 %v2184
      %v2249 = vunpack.c.l.b16 %v2185
      %v2250 = vunpack.c.l.b16 %v2186
      %v2251 = vunpack.c.l.b16 %v2187
      %v2252 = vunpack.c.l.b16 %v2188
      %v2253 = vunpack.c.l.b16 %v2189
      %v2254 = vunpack.c.l.b16 %v2190
      %v2255 = vunpack.c.l.b16 %v2191
      %v2256 = vunpack.c.l.b16 %v2192
      %v2257 = vunpack.c.l.b16 %v2193
      %v2258 = vunpack.c.l.b16 %v2194
      %v2259 = vunpack.c.l.b16 %v2195
      %v2260 = vunpack.c.l.b16 %v2196
      %v2261 = vunpack.c.l.b16 %v2197
      %v2262 = vunpack.c.l.b16 %v2198
      %v2263 = vpack.c.b16 %v2248, %v2247
      %v2264 = vpack.c.b16 %v2250, %v2249
      %v2265 = vpack.c.b16 %v2252, %v2251
      %v2266 = vpack.c.b16 %v2254, %v2253
      %v2267 = vpack.c.b16 %v2256, %v2255
      %v2268 = vpack.c.b16 %v2258, %v2257
      %v2269 = vpack.c.b16 %v2260, %v2259
      %v2270 = vpack.c.b16 %v2262, %v2261
      %2279 = vmatprep.subr.bf16.mxu0 0
      %2280 = vmatpush1.bf16.msra.mxu0 %v2263
      %2281 = vmatprep.subr.bf16.mxu0 0
      %2282 = vmatpush1.bf16.msra.mxu0 %v2264
      %2283 = vmatprep.subr.bf16.mxu0 0
      %2284 = vmatpush1.bf16.msra.mxu0 %v2265
      %2285 = vmatprep.subr.bf16.mxu0 0
      %2286 = vmatpush1.bf16.msra.mxu0 %v2266
      %2287 = vmatprep.subr.bf16.mxu0 0
      %2288 = vmatpush1.bf16.msra.mxu0 %v2267
      %2289 = vmatprep.subr.bf16.mxu0 0
      %2290 = vmatpush1.bf16.msra.mxu0 %v2268
      %2291 = vmatprep.subr.bf16.mxu0 0
      %2292 = vmatpush1.bf16.msra.mxu0 %v2269
      %2293 = vmatprep.subr.bf16.mxu0 0
      %2294 = vmatpush1.bf16.msra.mxu0 %v2270
      %2295 = vmatprep.subr.bf16.mxu0 0
      %2296 = vmatpush1.bf16.msra.mxu0 0
      %2297 = vmatprep.subr.bf16.mxu0 0
      %2298 = vmatpush1.bf16.msra.mxu0 0
      %2299 = vmatprep.subr.bf16.mxu0 0
      %2300 = vmatpush1.bf16.msra.mxu0 0
      %2301 = vmatprep.subr.bf16.mxu0 0
      %2302 = vmatpush1.bf16.msra.mxu0 0
      %2303 = vmatprep.subr.bf16.mxu0 0
      %2304 = vmatpush1.bf16.msra.mxu0 0
      %2305 = vmatprep.subr.bf16.mxu0 0
      %2306 = vmatpush1.bf16.msra.mxu0 0
      %2307 = vmatprep.subr.bf16.mxu0 0
      %2308 = vmatpush1.bf16.msra.mxu0 0
      %2309 = vmatprep.subr.bf16.mxu0 0
      %2310 = vmatpush1.bf16.msra.mxu0 0
      %2311 = vmatprep.mubr.bf16.mxu0 0
      %2312 = vmatmul.mubr.bf16.gmra.mrb[0].mxu0 %v2215
      %v2313 = vpop.f32.mrb[0].mxu0
      %v2314 = vadd.f32 0.0, %v2313
      %v2315 = vpop.f32.mrb[0].mxu0
      %v2316 = vpop.f32.mrb[0].mxu0
      %v2317 = vadd.f32 0.0, %v2316
      %v2318 = vpop.f32.mrb[0].mxu0
      %2319 = vmatprep.mubr.bf16.mxu0 0
      %2320 = vmatmul.mubr.bf16.gmra.mrb[0].mxu0 %v2216
      %v2321 = vpop.f32.mrb[0].mxu0
      %v2322 = vadd.f32 0.0, %v2321
      %v2323 = vpop.f32.mrb[0].mxu0
      %v2324 = vpop.f32.mrb[0].mxu0
      %v2325 = vadd.f32 0.0, %v2324
      %v2326 = vpop.f32.mrb[0].mxu0
      %2327 = vmatprep.mubr.bf16.mxu0 0
      %2328 = vmatmul.mubr.bf16.gmra.mrb[0].mxu0 %v2217
      %v2329 = vpop.f32.mrb[0].mxu0
      %v2330 = vadd.f32 0.0, %v2329
      %v2331 = vpop.f32.mrb[0].mxu0
      %v2332 = vpop.f32.mrb[0].mxu0
      %v2333 = vadd.f32 0.0, %v2332
      %v2334 = vpop.f32.mrb[0].mxu0
      %2335 = vmatprep.mubr.bf16.mxu0 0
      %2336 = vmatmul.mubr.bf16.gmra.mrb[0].mxu0 %v2218
      %v2337 = vpop.f32.mrb[0].mxu0
      %v2338 = vadd.f32 0.0, %v2337
      %v2339 = vpop.f32.mrb[0].mxu0
      %v2340 = vpop.f32.mrb[0].mxu0
      %v2341 = vadd.f32 0.0, %v2340
      %v2342 = vpop.f32.mrb[0].mxu0
      %2343 = vmatprep.mubr.bf16.mxu0 0
      %2344 = vmatmul.mubr.bf16.gmra.mrb[0].mxu0 %v2219
      %v2345 = vpop.f32.mrb[0].mxu0
      %v2346 = vadd.f32 0.0, %v2345
      %v2347 = vpop.f32.mrb[0].mxu0
      %v2348 = vpop.f32.mrb[0].mxu0
      %v2349 = vadd.f32 0.0, %v2348
      %v2350 = vpop.f32.mrb[0].mxu0
      %2351 = vmatprep.mubr.bf16.mxu0 0
      %2352 = vmatmul.mubr.bf16.gmra.mrb[0].mxu0 %v2220
      %v2353 = vpop.f32.mrb[0].mxu0
      %v2354 = vadd.f32 0.0, %v2353
      %v2355 = vpop.f32.mrb[0].mxu0
      %v2356 = vpop.f32.mrb[0].mxu0
      %v2357 = vadd.f32 0.0, %v2356
      %v2358 = vpop.f32.mrb[0].mxu0
      %2359 = vmatprep.mubr.bf16.mxu0 0
      %2360 = vmatmul.mubr.bf16.gmra.mrb[0].mxu0 %v2221
      %v2361 = vpop.f32.mrb[0].mxu0
      %v2362 = vadd.f32 0.0, %v2361
      %v2363 = vpop.f32.mrb[0].mxu0
      %v2364 = vpop.f32.mrb[0].mxu0
      %v2365 = vadd.f32 0.0, %v2364
      %v2366 = vpop.f32.mrb[0].mxu0
      %2367 = vmatprep.mubr.bf16.mxu0 0
      %2368 = vmatmul.mubr.bf16.gmra.mrb[0].mxu0 %v2222
      %v2369 = vpop.f32.mrb[0].mxu0
      %v2370 = vadd.f32 0.0, %v2369
      %v2371 = vpop.f32.mrb[0].mxu0
      %v2372 = vpop.f32.mrb[0].mxu0
      %v2373 = vadd.f32 0.0, %v2372
      %v2374 = vpop.f32.mrb[0].mxu0
      %2375 = vdwg.mxu0
      %v2376 = vadd.f32 %v1951, %v2314
      %v2377 = vadd.f32 %v1952, %v2317
      %v2378 = vadd.f32 %v1953, %v2322
      %v2379 = vadd.f32 %v1954, %v2325
      %v2380 = vadd.f32 %v1955, %v2330
      %v2381 = vadd.f32 %v1956, %v2333
      %v2382 = vadd.f32 %v1957, %v2338
      %v2383 = vadd.f32 %v1958, %v2341
      %v2384 = vadd.f32 %v1959, %v2346
      %v2385 = vadd.f32 %v1960, %v2349
      %v2386 = vadd.f32 %v1961, %v2354
      %v2387 = vadd.f32 %v1962, %v2357
      %v2388 = vadd.f32 %v1963, %v2362
      %v2389 = vadd.f32 %v1964, %v2365
      %v2390 = vadd.f32 %v1965, %v2370
      %v2391 = vadd.f32 %v1966, %v2373
      %v2392 = vld [vmem:[%s722] sm:$0xe]
      %v2393 = vld [vmem:[%s722 + $0xc] sm:$0xe]
      %v2394 = vld [vmem:[%s722 + $0x18] sm:$0xe]
      %v2395 = vld [vmem:[%s722 + $0x24] sm:$0xe]
      %v2396 = vld [vmem:[%s722 + $0x30] sm:$0xe]
      %v2397 = vld [vmem:[%s722 + $0x3c] sm:$0xe]
      %v2398 = vld [vmem:[%s722 + $0x48] sm:$0xe]
      %v2399 = vld [vmem:[%s722 + $0x54] sm:$0xe]
      %v2424 = vrot.slane %v2392, 5
      %v2425 = vrot.slane %v2424, 4
      %v2426 = vrot.slane %v1968, 5
      %v2427 = vsel %vm1460, %v2425, %v2426
      %v2428 = vrot.slane %v2426, 4
      %v2429 = vrot.slane %v1969, 5
      %v2430 = vsel %vm1460, %v2428, %v2429
      %v2431 = vrot.slane %v2393, 5
      %v2432 = vrot.slane %v2431, 4
      %v2433 = vrot.slane %v1971, 5
      %v2434 = vsel %vm1460, %v2432, %v2433
      %v2435 = vrot.slane %v2433, 4
      %v2436 = vrot.slane %v1972, 5
      %v2437 = vsel %vm1460, %v2435, %v2436
      %v2438 = vrot.slane %v2394, 5
      %v2439 = vrot.slane %v2438, 4
      %v2440 = vrot.slane %v1974, 5
      %v2441 = vsel %vm1460, %v2439, %v2440
      %v2442 = vrot.slane %v2440, 4
      %v2443 = vrot.slane %v1975, 5
      %v2444 = vsel %vm1460, %v2442, %v2443
      %v2445 = vrot.slane %v2395, 5
      %v2446 = vrot.slane %v2445, 4
      %v2447 = vrot.slane %v1977, 5
      %v2448 = vsel %vm1460, %v2446, %v2447
      %v2449 = vrot.slane %v2447, 4
      %v2450 = vrot.slane %v1978, 5
      %v2451 = vsel %vm1460, %v2449, %v2450
      %v2452 = vrot.slane %v2396, 5
      %v2453 = vrot.slane %v2452, 4
      %v2454 = vrot.slane %v1980, 5
      %v2455 = vsel %vm1460, %v2453, %v2454
      %v2456 = vrot.slane %v2454, 4
      %v2457 = vrot.slane %v1981, 5
      %v2458 = vsel %vm1460, %v2456, %v2457
      %v2459 = vrot.slane %v2397, 5
      %v2460 = vrot.slane %v2459, 4
      %v2461 = vrot.slane %v1983, 5
      %v2462 = vsel %vm1460, %v2460, %v2461
      %v2463 = vrot.slane %v2461, 4
      %v2464 = vrot.slane %v1984, 5
      %v2465 = vsel %vm1460, %v2463, %v2464
      %v2466 = vrot.slane %v2398, 5
      %v2467 = vrot.slane %v2466, 4
      %v2468 = vrot.slane %v1986, 5
      %v2469 = vsel %vm1460, %v2467, %v2468
      %v2470 = vrot.slane %v2468, 4
      %v2471 = vrot.slane %v1987, 5
      %v2472 = vsel %vm1460, %v2470, %v2471
      %v2473 = vrot.slane %v2399, 5
      %v2474 = vrot.slane %v2473, 4
      %v2475 = vrot.slane %v1989, 5
      %v2476 = vsel %vm1460, %v2474, %v2475
      %v2477 = vrot.slane %v2475, 4
      %v2478 = vrot.slane %v1990, 5
      %v2479 = vsel %vm1460, %v2477, %v2478
      %v2480 = vld [vmem:[%s3 + $0x140] sm:$0xf]
      %v2481 = vld [vmem:[%s3 + $0x144] sm:$0xf]
      %v2482 = vld [vmem:[%s3 + $0x148] sm:$0xf]
      %v2483 = vld [vmem:[%s3 + $0x14c] sm:$0xf]
      %v2484 = vld [vmem:[%s3 + $0x150] sm:$0xf]
      %v2485 = vld [vmem:[%s3 + $0x154] sm:$0xf]
      %v2486 = vld [vmem:[%s3 + $0x158] sm:$0xf]
      %v2487 = vld [vmem:[%s3 + $0x15c] sm:$0xf]
      %v2488 = vld [vmem:[%s3 + $0x160] sm:$0xf]
      %v2489 = vld [vmem:[%s3 + $0x164] sm:$0xf]
      %v2490 = vld [vmem:[%s3 + $0x168] sm:$0xf]
      %v2491 = vld [vmem:[%s3 + $0x16c] sm:$0xf]
      %v2492 = vld [vmem:[%s3 + $0x170] sm:$0xf]
      %v2493 = vld [vmem:[%s3 + $0x174] sm:$0xf]
      %v2494 = vld [vmem:[%s3 + $0x178] sm:$0xf]
      %v2495 = vld [vmem:[%s3 + $0x17c] sm:$0xf]
      %v2496 = vunpack.c.l.b16 %v2427
      %v2497 = vunpack.c.l.b16 %v2430
      %v2498 = vunpack.c.l.b16 %v2434
      %v2499 = vunpack.c.l.b16 %v2437
      %v2500 = vunpack.c.l.b16 %v2441
      %v2501 = vunpack.c.l.b16 %v2444
      %v2502 = vunpack.c.l.b16 %v2448
      %v2503 = vunpack.c.l.b16 %v2451
      %v2504 = vunpack.c.l.b16 %v2455
      %v2505 = vunpack.c.l.b16 %v2458
      %v2506 = vunpack.c.l.b16 %v2462
      %v2507 = vunpack.c.l.b16 %v2465
      %v2508 = vunpack.c.l.b16 %v2469
      %v2509 = vunpack.c.l.b16 %v2472
      %v2510 = vunpack.c.l.b16 %v2476
      %v2511 = vunpack.c.l.b16 %v2479
      %v2512 = vpack.c.b16 %v2497, %v2496
      %v2513 = vpack.c.b16 %v2499, %v2498
      %v2514 = vpack.c.b16 %v2501, %v2500
      %v2515 = vpack.c.b16 %v2503, %v2502
      %v2516 = vpack.c.b16 %v2505, %v2504
      %v2517 = vpack.c.b16 %v2507, %v2506
      %v2518 = vpack.c.b16 %v2509, %v2508
      %v2519 = vpack.c.b16 %v2511, %v2510
      %v2544 = vunpack.c.l.b16 %v2480
      %v2545 = vunpack.c.l.b16 %v2481
      %v2546 = vunpack.c.l.b16 %v2482
      %v2547 = vunpack.c.l.b16 %v2483
      %v2548 = vunpack.c.l.b16 %v2484
      %v2549 = vunpack.c.l.b16 %v2485
      %v2550 = vunpack.c.l.b16 %v2486
      %v2551 = vunpack.c.l.b16 %v2487
      %v2552 = vunpack.c.l.b16 %v2488
      %v2553 = vunpack.c.l.b16 %v2489
      %v2554 = vunpack.c.l.b16 %v2490
      %v2555 = vunpack.c.l.b16 %v2491
      %v2556 = vunpack.c.l.b16 %v2492
      %v2557 = vunpack.c.l.b16 %v2493
      %v2558 = vunpack.c.l.b16 %v2494
      %v2559 = vunpack.c.l.b16 %v2495
      %v2560 = vpack.c.b16 %v2545, %v2544
      %v2561 = vpack.c.b16 %v2547, %v2546
      %v2562 = vpack.c.b16 %v2549, %v2548
      %v2563 = vpack.c.b16 %v2551, %v2550
      %v2564 = vpack.c.b16 %v2553, %v2552
      %v2565 = vpack.c.b16 %v2555, %v2554
      %v2566 = vpack.c.b16 %v2557, %v2556
      %v2567 = vpack.c.b16 %v2559, %v2558
      %2576 = vmatprep.subr.bf16.mxu0 0
      %2577 = vmatpush1.bf16.msra.mxu0 %v2560
      %2578 = vmatprep.subr.bf16.mxu0 0
      %2579 = vmatpush1.bf16.msra.mxu0 %v2561
      %2580 = vmatprep.subr.bf16.mxu0 0
      %2581 = vmatpush1.bf16.msra.mxu0 %v2562
      %2582 = vmatprep.subr.bf16.mxu0 0
      %2583 = vmatpush1.bf16.msra.mxu0 %v2563
      %2584 = vmatprep.subr.bf16.mxu0 0
      %2585 = vmatpush1.bf16.msra.mxu0 %v2564
      %2586 = vmatprep.subr.bf16.mxu0 0
      %2587 = vmatpush1.bf16.msra.mxu0 %v2565
      %2588 = vmatprep.subr.bf16.mxu0 0
      %2589 = vmatpush1.bf16.msra.mxu0 %v2566
      %2590 = vmatprep.subr.bf16.mxu0 0
      %2591 = vmatpush1.bf16.msra.mxu0 %v2567
      %2592 = vmatprep.subr.bf16.mxu0 0
      %2593 = vmatpush1.bf16.msra.mxu0 0
      %2594 = vmatprep.subr.bf16.mxu0 0
      %2595 = vmatpush1.bf16.msra.mxu0 0
      %2596 = vmatprep.subr.bf16.mxu0 0
      %2597 = vmatpush1.bf16.msra.mxu0 0
      %2598 = vmatprep.subr.bf16.mxu0 0
      %2599 = vmatpush1.bf16.msra.mxu0 0
      %2600 = vmatprep.subr.bf16.mxu0 0
      %2601 = vmatpush1.bf16.msra.mxu0 0
      %2602 = vmatprep.subr.bf16.mxu0 0
      %2603 = vmatpush1.bf16.msra.mxu0 0
      %2604 = vmatprep.subr.bf16.mxu0 0
      %2605 = vmatpush1.bf16.msra.mxu0 0
      %2606 = vmatprep.subr.bf16.mxu0 0
      %2607 = vmatpush1.bf16.msra.mxu0 0
      %2608 = vmatprep.mubr.bf16.mxu0 0
      %2609 = vmatmul.mubr.bf16.gmra.mrb[0].mxu0 %v2512
      %v2610 = vpop.f32.mrb[0].mxu0
      %v2611 = vadd.f32 0.0, %v2610
      %v2612 = vpop.f32.mrb[0].mxu0
      %v2613 = vpop.f32.mrb[0].mxu0
      %v2614 = vadd.f32 0.0, %v2613
      %v2615 = vpop.f32.mrb[0].mxu0
      %2616 = vmatprep.mubr.bf16.mxu0 0
      %2617 = vmatmul.mubr.bf16.gmra.mrb[0].mxu0 %v2513
      %v2618 = vpop.f32.mrb[0].mxu0
      %v2619 = vadd.f32 0.0, %v2618
      %v2620 = vpop.f32.mrb[0].mxu0
      %v2621 = vpop.f32.mrb[0].mxu0
      %v2622 = vadd.f32 0.0, %v2621
      %v2623 = vpop.f32.mrb[0].mxu0
      %2624 = vmatprep.mubr.bf16.mxu0 0
      %2625 = vmatmul.mubr.bf16.gmra.mrb[0].mxu0 %v2514
      %v2626 = vpop.f32.mrb[0].mxu0
      %v2627 = vadd.f32 0.0, %v2626
      %v2628 = vpop.f32.mrb[0].mxu0
      %v2629 = vpop.f32.mrb[0].mxu0
      %v2630 = vadd.f32 0.0, %v2629
      %v2631 = vpop.f32.mrb[0].mxu0
      %2632 = vmatprep.mubr.bf16.mxu0 0
      %2633 = vmatmul.mubr.bf16.gmra.mrb[0].mxu0 %v2515
      %v2634 = vpop.f32.mrb[0].mxu0
      %v2635 = vadd.f32 0.0, %v2634
      %v2636 = vpop.f32.mrb[0].mxu0
      %v2637 = vpop.f32.mrb[0].mxu0
      %v2638 = vadd.f32 0.0, %v2637
      %v2639 = vpop.f32.mrb[0].mxu0
      %2640 = vmatprep.mubr.bf16.mxu0 0
      %2641 = vmatmul.mubr.bf16.gmra.mrb[0].mxu0 %v2516
      %v2642 = vpop.f32.mrb[0].mxu0
      %v2643 = vadd.f32 0.0, %v2642
      %v2644 = vpop.f32.mrb[0].mxu0
      %v2645 = vpop.f32.mrb[0].mxu0
      %v2646 = vadd.f32 0.0, %v2645
      %v2647 = vpop.f32.mrb[0].mxu0
      %2648 = vmatprep.mubr.bf16.mxu0 0
      %2649 = vmatmul.mubr.bf16.gmra.mrb[0].mxu0 %v2517
      %v2650 = vpop.f32.mrb[0].mxu0
      %v2651 = vadd.f32 0.0, %v2650
      %v2652 = vpop.f32.mrb[0].mxu0
      %v2653 = vpop.f32.mrb[0].mxu0
      %v2654 = vadd.f32 0.0, %v2653
      %v2655 = vpop.f32.mrb[0].mxu0
      %2656 = vmatprep.mubr.bf16.mxu0 0
      %2657 = vmatmul.mubr.bf16.gmra.mrb[0].mxu0 %v2518
      %v2658 = vpop.f32.mrb[0].mxu0
      %v2659 = vadd.f32 0.0, %v2658
      %v2660 = vpop.f32.mrb[0].mxu0
      %v2661 = vpop.f32.mrb[0].mxu0
      %v2662 = vadd.f32 0.0, %v2661
      %v2663 = vpop.f32.mrb[0].mxu0
      %2664 = vmatprep.mubr.bf16.mxu0 0
      %2665 = vmatmul.mubr.bf16.gmra.mrb[0].mxu0 %v2519
      %v2666 = vpop.f32.mrb[0].mxu0
      %v2667 = vadd.f32 0.0, %v2666
      %v2668 = vpop.f32.mrb[0].mxu0
      %v2669 = vpop.f32.mrb[0].mxu0
      %v2670 = vadd.f32 0.0, %v2669
      %v2671 = vpop.f32.mrb[0].mxu0
      %2672 = vdwg.mxu0
      %v2673 = vadd.f32 %v2376, %v2611
      %v2674 = vadd.f32 %v2377, %v2614
      %v2675 = vadd.f32 %v2378, %v2619
      %v2676 = vadd.f32 %v2379, %v2622
      %v2677 = vadd.f32 %v2380, %v2627
      %v2678 = vadd.f32 %v2381, %v2630
      %v2679 = vadd.f32 %v2382, %v2635
      %v2680 = vadd.f32 %v2383, %v2638
      %v2681 = vadd.f32 %v2384, %v2643
      %v2682 = vadd.f32 %v2385, %v2646
      %v2683 = vadd.f32 %v2386, %v2651
      %v2684 = vadd.f32 %v2387, %v2654
      %v2685 = vadd.f32 %v2388, %v2659
      %v2686 = vadd.f32 %v2389, %v2662
      %v2687 = vadd.f32 %v2390, %v2667
      %v2688 = vadd.f32 %v2391, %v2670
      %s2689 = scalar_lea.vmem [#allocation2], 24
      %v2690 = vld [vmem:[%s2689] sm:$0xf]
      %v2691 = vld [vmem:[%s2689 + $0x4] sm:$0xf]
      %v2692 = vld [vmem:[%s2689 + $0xc] sm:$0xf]
      %v2693 = vld [vmem:[%s2689 + $0x10] sm:$0xf]
      %v2694 = vld [vmem:[%s2689 + $0x18] sm:$0xf]
      %v2695 = vld [vmem:[%s2689 + $0x1c] sm:$0xf]
      %v2696 = vld [vmem:[%s2689 + $0x24] sm:$0xf]
      %v2697 = vld [vmem:[%s2689 + $0x28] sm:$0xf]
      %v2698 = vld [vmem:[%s2689 + $0x30] sm:$0xf]
      %v2699 = vld [vmem:[%s2689 + $0x34] sm:$0xf]
      %v2700 = vld [vmem:[%s2689 + $0x3c] sm:$0xf]
      %v2701 = vld [vmem:[%s2689 + $0x40] sm:$0xf]
      %v2702 = vld [vmem:[%s2689 + $0x48] sm:$0xf]
      %v2703 = vld [vmem:[%s2689 + $0x4c] sm:$0xf]
      %v2704 = vld [vmem:[%s2689 + $0x54] sm:$0xf]
      %v2705 = vld [vmem:[%s2689 + $0x58] sm:$0xf]
      %v2706 = vld [vmem:[%s3 + $0x180] sm:$0xf]
      %v2707 = vld [vmem:[%s3 + $0x184] sm:$0xf]
      %v2708 = vld [vmem:[%s3 + $0x188] sm:$0xf]
      %v2709 = vld [vmem:[%s3 + $0x18c] sm:$0xf]
      %v2710 = vld [vmem:[%s3 + $0x190] sm:$0xf]
      %v2711 = vld [vmem:[%s3 + $0x194] sm:$0xf]
      %v2712 = vld [vmem:[%s3 + $0x198] sm:$0xf]
      %v2713 = vld [vmem:[%s3 + $0x19c] sm:$0xf]
      %v2714 = vld [vmem:[%s3 + $0x1a0] sm:$0xf]
      %v2715 = vld [vmem:[%s3 + $0x1a4] sm:$0xf]
      %v2716 = vld [vmem:[%s3 + $0x1a8] sm:$0xf]
      %v2717 = vld [vmem:[%s3 + $0x1ac] sm:$0xf]
      %v2718 = vld [vmem:[%s3 + $0x1b0] sm:$0xf]
      %v2719 = vld [vmem:[%s3 + $0x1b4] sm:$0xf]
      %v2720 = vld [vmem:[%s3 + $0x1b8] sm:$0xf]
      %v2721 = vld [vmem:[%s3 + $0x1bc] sm:$0xf]
      %v2738 = vunpack.c.l.b16 %v2690
      %v2739 = vunpack.c.l.b16 %v2691
      %v2740 = vunpack.c.l.b16 %v2692
      %v2741 = vunpack.c.l.b16 %v2693
      %v2742 = vunpack.c.l.b16 %v2694
      %v2743 = vunpack.c.l.b16 %v2695
      %v2744 = vunpack.c.l.b16 %v2696
      %v2745 = vunpack.c.l.b16 %v2697
      %v2746 = vunpack.c.l.b16 %v2698
      %v2747 = vunpack.c.l.b16 %v2699
      %v2748 = vunpack.c.l.b16 %v2700
      %v2749 = vunpack.c.l.b16 %v2701
      %v2750 = vunpack.c.l.b16 %v2702
      %v2751 = vunpack.c.l.b16 %v2703
      %v2752 = vunpack.c.l.b16 %v2704
      %v2753 = vunpack.c.l.b16 %v2705
      %v2754 = vpack.c.b16 %v2739, %v2738
      %v2755 = vpack.c.b16 %v2741, %v2740
      %v2756 = vpack.c.b16 %v2743, %v2742
      %v2757 = vpack.c.b16 %v2745, %v2744
      %v2758 = vpack.c.b16 %v2747, %v2746
      %v2759 = vpack.c.b16 %v2749, %v2748
      %v2760 = vpack.c.b16 %v2751, %v2750
      %v2761 = vpack.c.b16 %v2753, %v2752
      %v2786 = vunpack.c.l.b16 %v2706
      %v2787 = vunpack.c.l.b16 %v2707
      %v2788 = vunpack.c.l.b16 %v2708
      %v2789 = vunpack.c.l.b16 %v2709
      %v2790 = vunpack.c.l.b16 %v2710
      %v2791 = vunpack.c.l.b16 %v2711
      %v2792 = vunpack.c.l.b16 %v2712
      %v2793 = vunpack.c.l.b16 %v2713
      %v2794 = vunpack.c.l.b16 %v2714
      %v2795 = vunpack.c.l.b16 %v2715
      %v2796 = vunpack.c.l.b16 %v2716
      %v2797 = vunpack.c.l.b16 %v2717
      %v2798 = vunpack.c.l.b16 %v2718
      %v2799 = vunpack.c.l.b16 %v2719
      %v2800 = vunpack.c.l.b16 %v2720
      %v2801 = vunpack.c.l.b16 %v2721
      %v2802 = vpack.c.b16 %v2787, %v2786
      %v2803 = vpack.c.b16 %v2789, %v2788
      %v2804 = vpack.c.b16 %v2791, %v2790
      %v2805 = vpack.c.b16 %v2793, %v2792
      %v2806 = vpack.c.b16 %v2795, %v2794
      %v2807 = vpack.c.b16 %v2797, %v2796
      %v2808 = vpack.c.b16 %v2799, %v2798
      %v2809 = vpack.c.b16 %v2801, %v2800
      %2818 = vmatprep.subr.bf16.mxu0 0
      %2819 = vmatpush1.bf16.msra.mxu0 %v2802
      %2820 = vmatprep.subr.bf16.mxu0 0
      %2821 = vmatpush1.bf16.msra.mxu0 %v2803
      %2822 = vmatprep.subr.bf16.mxu0 0
      %2823 = vmatpush1.bf16.msra.mxu0 %v2804
      %2824 = vmatprep.subr.bf16.mxu0 0
      %2825 = vmatpush1.bf16.msra.mxu0 %v2805
      %2826 = vmatprep.subr.bf16.mxu0 0
      %2827 = vmatpush1.bf16.msra.mxu0 %v2806
      %2828 = vmatprep.subr.bf16.mxu0 0
      %2829 = vmatpush1.bf16.msra.mxu0 %v2807
      %2830 = vmatprep.subr.bf16.mxu0 0
      %2831 = vmatpush1.bf16.msra.mxu0 %v2808
      %2832 = vmatprep.subr.bf16.mxu0 0
      %2833 = vmatpush1.bf16.msra.mxu0 %v2809
      %2834 = vmatprep.subr.bf16.mxu0 0
      %2835 = vmatpush1.bf16.msra.mxu0 0
      %2836 = vmatprep.subr.bf16.mxu0 0
      %2837 = vmatpush1.bf16.msra.mxu0 0
      %2838 = vmatprep.subr.bf16.mxu0 0
      %2839 = vmatpush1.bf16.msra.mxu0 0
      %2840 = vmatprep.subr.bf16.mxu0 0
      %2841 = vmatpush1.bf16.msra.mxu0 0
      %2842 = vmatprep.subr.bf16.mxu0 0
      %2843 = vmatpush1.bf16.msra.mxu0 0
      %2844 = vmatprep.subr.bf16.mxu0 0
      %2845 = vmatpush1.bf16.msra.mxu0 0
      %2846 = vmatprep.subr.bf16.mxu0 0
      %2847 = vmatpush1.bf16.msra.mxu0 0
      %2848 = vmatprep.subr.bf16.mxu0 0
      %2849 = vmatpush1.bf16.msra.mxu0 0
      %2850 = vmatprep.mubr.bf16.mxu0 0
      %2851 = vmatmul.mubr.bf16.gmra.mrb[0].mxu0 %v2754
      %v2852 = vpop.f32.mrb[0].mxu0
      %v2853 = vadd.f32 0.0, %v2852
      %v2854 = vpop.f32.mrb[0].mxu0
      %v2855 = vpop.f32.mrb[0].mxu0
      %v2856 = vadd.f32 0.0, %v2855
      %v2857 = vpop.f32.mrb[0].mxu0
      %2858 = vmatprep.mubr.bf16.mxu0 0
      %2859 = vmatmul.mubr.bf16.gmra.mrb[0].mxu0 %v2755
      %v2860 = vpop.f32.mrb[0].mxu0
      %v2861 = vadd.f32 0.0, %v2860
      %v2862 = vpop.f32.mrb[0].mxu0
      %v2863 = vpop.f32.mrb[0].mxu0
      %v2864 = vadd.f32 0.0, %v2863
      %v2865 = vpop.f32.mrb[0].mxu0
      %2866 = vmatprep.mubr.bf16.mxu0 0
      %2867 = vmatmul.mubr.bf16.gmra.mrb[0].mxu0 %v2756
      %v2868 = vpop.f32.mrb[0].mxu0
      %v2869 = vadd.f32 0.0, %v2868
      %v2870 = vpop.f32.mrb[0].mxu0
      %v2871 = vpop.f32.mrb[0].mxu0
      %v2872 = vadd.f32 0.0, %v2871
      %v2873 = vpop.f32.mrb[0].mxu0
      %2874 = vmatprep.mubr.bf16.mxu0 0
      %2875 = vmatmul.mubr.bf16.gmra.mrb[0].mxu0 %v2757
      %v2876 = vpop.f32.mrb[0].mxu0
      %v2877 = vadd.f32 0.0, %v2876
      %v2878 = vpop.f32.mrb[0].mxu0
      %v2879 = vpop.f32.mrb[0].mxu0
      %v2880 = vadd.f32 0.0, %v2879
      %v2881 = vpop.f32.mrb[0].mxu0
      %2882 = vmatprep.mubr.bf16.mxu0 0
      %2883 = vmatmul.mubr.bf16.gmra.mrb[0].mxu0 %v2758
      %v2884 = vpop.f32.mrb[0].mxu0
      %v2885 = vadd.f32 0.0, %v2884
      %v2886 = vpop.f32.mrb[0].mxu0
      %v2887 = vpop.f32.mrb[0].mxu0
      %v2888 = vadd.f32 0.0, %v2887
      %v2889 = vpop.f32.mrb[0].mxu0
      %2890 = vmatprep.mubr.bf16.mxu0 0
      %2891 = vmatmul.mubr.bf16.gmra.mrb[0].mxu0 %v2759
      %v2892 = vpop.f32.mrb[0].mxu0
      %v2893 = vadd.f32 0.0, %v2892
      %v2894 = vpop.f32.mrb[0].mxu0
      %v2895 = vpop.f32.mrb[0].mxu0
      %v2896 = vadd.f32 0.0, %v2895
      %v2897 = vpop.f32.mrb[0].mxu0
      %2898 = vmatprep.mubr.bf16.mxu0 0
      %2899 = vmatmul.mubr.bf16.gmra.mrb[0].mxu0 %v2760
      %v2900 = vpop.f32.mrb[0].mxu0
      %v2901 = vadd.f32 0.0, %v2900
      %v2902 = vpop.f32.mrb[0].mxu0
      %v2903 = vpop.f32.mrb[0].mxu0
      %v2904 = vadd.f32 0.0, %v2903
      %v2905 = vpop.f32.mrb[0].mxu0
      %2906 = vmatprep.mubr.bf16.mxu0 0
      %2907 = vmatmul.mubr.bf16.gmra.mrb[0].mxu0 %v2761
      %v2908 = vpop.f32.mrb[0].mxu0
      %v2909 = vadd.f32 0.0, %v2908
      %v2910 = vpop.f32.mrb[0].mxu0
      %v2911 = vpop.f32.mrb[0].mxu0
      %v2912 = vadd.f32 0.0, %v2911
      %v2913 = vpop.f32.mrb[0].mxu0
      %2914 = vdwg.mxu0
      %v2915 = vadd.f32 %v2673, %v2853
      %v2916 = vadd.f32 %v2674, %v2856
      %v2917 = vadd.f32 %v2675, %v2861
      %v2918 = vadd.f32 %v2676, %v2864
      %v2919 = vadd.f32 %v2677, %v2869
      %v2920 = vadd.f32 %v2678, %v2872
      %v2921 = vadd.f32 %v2679, %v2877
      %v2922 = vadd.f32 %v2680, %v2880
      %v2923 = vadd.f32 %v2681, %v2885
      %v2924 = vadd.f32 %v2682, %v2888
      %v2925 = vadd.f32 %v2683, %v2893
      %v2926 = vadd.f32 %v2684, %v2896
      %v2927 = vadd.f32 %v2685, %v2901
      %v2928 = vadd.f32 %v2686, %v2904
      %v2929 = vadd.f32 %v2687, %v2909
      %v2930 = vadd.f32 %v2688, %v2912
      %v2931 = vld [vmem:[%s2689] sm:$0xf]
      %v2932 = vld [vmem:[%s2689 + $0x4] sm:$0xf]
      %v2933 = vld [vmem:[%s2689 + $0x8] sm:$0x1]
      %v2934 = vld [vmem:[%s2689 + $0xc] sm:$0xf]
      %v2935 = vld [vmem:[%s2689 + $0x10] sm:$0xf]
      %v2936 = vld [vmem:[%s2689 + $0x14] sm:$0x1]
      %v2937 = vld [vmem:[%s2689 + $0x18] sm:$0xf]
      %v2938 = vld [vmem:[%s2689 + $0x1c] sm:$0xf]
      %v2939 = vld [vmem:[%s2689 + $0x20] sm:$0x1]
      %v2940 = vld [vmem:[%s2689 + $0x24] sm:$0xf]
      %v2941 = vld [vmem:[%s2689 + $0x28] sm:$0xf]
      %v2942 = vld [vmem:[%s2689 + $0x2c] sm:$0x1]
      %v2943 = vld [vmem:[%s2689 + $0x30] sm:$0xf]
      %v2944 = vld [vmem:[%s2689 + $0x34] sm:$0xf]
      %v2945 = vld [vmem:[%s2689 + $0x38] sm:$0x1]
      %v2946 = vld [vmem:[%s2689 + $0x3c] sm:$0xf]
      %v2947 = vld [vmem:[%s2689 + $0x40] sm:$0xf]
      %v2948 = vld [vmem:[%s2689 + $0x44] sm:$0x1]
      %v2949 = vld [vmem:[%s2689 + $0x48] sm:$0xf]
      %v2950 = vld [vmem:[%s2689 + $0x4c] sm:$0xf]
      %v2951 = vld [vmem:[%s2689 + $0x50] sm:$0x1]
      %v2952 = vld [vmem:[%s2689 + $0x54] sm:$0xf]
      %v2953 = vld [vmem:[%s2689 + $0x58] sm:$0xf]
      %v2954 = vld [vmem:[%s2689 + $0x5c] sm:$0x1]
      %v2956 = vshrl.u32 %v2931, 16
      %v2958 = vrot.slane %v2956, 4
      %v2959 = vshll.u32 %v2931, 16
      %v2961 = vrot.slane %v2959, 5
      %v2962 = vor.u32 %v2958, %v2961
      %v2963 = vrot.slane %v2962, 4
      %v2965 = vshll.u32 %v2932, 16
      %v2967 = vrot.slane %v2965, 5
      %v2968 = vsel %vm855, %v2963, %v2967
      %v2969 = vshrl.u32 %v2932, 16
      %v2971 = vrot.slane %v2969, 4
      %v2972 = vor.u32 %v2971, %v2967
      %v2973 = vrot.slane %v2972, 4
      %v2975 = vshll.u32 %v2933, 16
      %v2977 = vrot.slane %v2975, 5
      %v2978 = vsel %vm855, %v2973, %v2977
      %v2980 = vshrl.u32 %v2934, 16
      %v2982 = vrot.slane %v2980, 4
      %v2983 = vshll.u32 %v2934, 16
      %v2985 = vrot.slane %v2983, 5
      %v2986 = vor.u32 %v2982, %v2985
      %v2987 = vrot.slane %v2986, 4
      %v2989 = vshll.u32 %v2935, 16
      %v2991 = vrot.slane %v2989, 5
      %v2992 = vsel %vm855, %v2987, %v2991
      %v2993 = vshrl.u32 %v2935, 16
      %v2995 = vrot.slane %v2993, 4
      %v2996 = vor.u32 %v2995, %v2991
      %v2997 = vrot.slane %v2996, 4
      %v2999 = vshll.u32 %v2936, 16
      %v3001 = vrot.slane %v2999, 5
      %v3002 = vsel %vm855, %v2997, %v3001
      %v3004 = vshrl.u32 %v2937, 16
      %v3006 = vrot.slane %v3004, 4
      %v3007 = vshll.u32 %v2937, 16
      %v3009 = vrot.slane %v3007, 5
      %v3010 = vor.u32 %v3006, %v3009
      %v3011 = vrot.slane %v3010, 4
      %v3013 = vshll.u32 %v2938, 16
      %v3015 = vrot.slane %v3013, 5
      %v3016 = vsel %vm855, %v3011, %v3015
      %v3017 = vshrl.u32 %v2938, 16
      %v3019 = vrot.slane %v3017, 4
      %v3020 = vor.u32 %v3019, %v3015
      %v3021 = vrot.slane %v3020, 4
      %v3023 = vshll.u32 %v2939, 16
      %v3025 = vrot.slane %v3023, 5
      %v3026 = vsel %vm855, %v3021, %v3025
      %v3028 = vshrl.u32 %v2940, 16
      %v3030 = vrot.slane %v3028, 4
      %v3031 = vshll.u32 %v2940, 16
      %v3033 = vrot.slane %v3031, 5
      %v3034 = vor.u32 %v3030, %v3033
      %v3035 = vrot.slane %v3034, 4
      %v3037 = vshll.u32 %v2941, 16
      %v3039 = vrot.slane %v3037, 5
      %v3040 = vsel %vm855, %v3035, %v3039
      %v3041 = vshrl.u32 %v2941, 16
      %v3043 = vrot.slane %v3041, 4
      %v3044 = vor.u32 %v3043, %v3039
      %v3045 = vrot.slane %v3044, 4
      %v3047 = vshll.u32 %v2942, 16
      %v3049 = vrot.slane %v3047, 5
      %v3050 = vsel %vm855, %v3045, %v3049
      %v3052 = vshrl.u32 %v2943, 16
      %v3054 = vrot.slane %v3052, 4
      %v3055 = vshll.u32 %v2943, 16
      %v3057 = vrot.slane %v3055, 5
      %v3058 = vor.u32 %v3054, %v3057
      %v3059 = vrot.slane %v3058, 4
      %v3061 = vshll.u32 %v2944, 16
      %v3063 = vrot.slane %v3061, 5
      %v3064 = vsel %vm855, %v3059, %v3063
      %v3065 = vshrl.u32 %v2944, 16
      %v3067 = vrot.slane %v3065, 4
      %v3068 = vor.u32 %v3067, %v3063
      %v3069 = vrot.slane %v3068, 4
      %v3071 = vshll.u32 %v2945, 16
      %v3073 = vrot.slane %v3071, 5
      %v3074 = vsel %vm855, %v3069, %v3073
      %v3076 = vshrl.u32 %v2946, 16
      %v3078 = vrot.slane %v3076, 4
      %v3079 = vshll.u32 %v2946, 16
      %v3081 = vrot.slane %v3079, 5
      %v3082 = vor.u32 %v3078, %v3081
      %v3083 = vrot.slane %v3082, 4
      %v3085 = vshll.u32 %v2947, 16
      %v3087 = vrot.slane %v3085, 5
      %v3088 = vsel %vm855, %v3083, %v3087
      %v3089 = vshrl.u32 %v2947, 16
      %v3091 = vrot.slane %v3089, 4
      %v3092 = vor.u32 %v3091, %v3087
      %v3093 = vrot.slane %v3092, 4
      %v3095 = vshll.u32 %v2948, 16
      %v3097 = vrot.slane %v3095, 5
      %v3098 = vsel %vm855, %v3093, %v3097
      %v3100 = vshrl.u32 %v2949, 16
      %v3102 = vrot.slane %v3100, 4
      %v3103 = vshll.u32 %v2949, 16
      %v3105 = vrot.slane %v3103, 5
      %v3106 = vor.u32 %v3102, %v3105
      %v3107 = vrot.slane %v3106, 4
      %v3109 = vshll.u32 %v2950, 16
      %v3111 = vrot.slane %v3109, 5
      %v3112 = vsel %vm855, %v3107, %v3111
      %v3113 = vshrl.u32 %v2950, 16
      %v3115 = vrot.slane %v3113, 4
      %v3116 = vor.u32 %v3115, %v3111
      %v3117 = vrot.slane %v3116, 4
      %v3119 = vshll.u32 %v2951, 16
      %v3121 = vrot.slane %v3119, 5
      %v3122 = vsel %vm855, %v3117, %v3121
      %v3124 = vshrl.u32 %v2952, 16
      %v3126 = vrot.slane %v3124, 4
      %v3127 = vshll.u32 %v2952, 16
      %v3129 = vrot.slane %v3127, 5
      %v3130 = vor.u32 %v3126, %v3129
      %v3131 = vrot.slane %v3130, 4
      %v3133 = vshll.u32 %v2953, 16
      %v3135 = vrot.slane %v3133, 5
      %v3136 = vsel %vm855, %v3131, %v3135
      %v3137 = vshrl.u32 %v2953, 16
      %v3139 = vrot.slane %v3137, 4
      %v3140 = vor.u32 %v3139, %v3135
      %v3141 = vrot.slane %v3140, 4
      %v3143 = vshll.u32 %v2954, 16
      %v3145 = vrot.slane %v3143, 5
      %v3146 = vsel %vm855, %v3141, %v3145
      %v3147 = vld [vmem:[%s3 + $0x1c0] sm:$0xf]
      %v3148 = vld [vmem:[%s3 + $0x1c4] sm:$0xf]
      %v3149 = vld [vmem:[%s3 + $0x1c8] sm:$0xf]
      %v3150 = vld [vmem:[%s3 + $0x1cc] sm:$0xf]
      %v3151 = vld [vmem:[%s3 + $0x1d0] sm:$0xf]
      %v3152 = vld [vmem:[%s3 + $0x1d4] sm:$0xf]
      %v3153 = vld [vmem:[%s3 + $0x1d8] sm:$0xf]
      %v3154 = vld [vmem:[%s3 + $0x1dc] sm:$0xf]
      %v3155 = vld [vmem:[%s3 + $0x1e0] sm:$0xf]
      %v3156 = vld [vmem:[%s3 + $0x1e4] sm:$0xf]
      %v3157 = vld [vmem:[%s3 + $0x1e8] sm:$0xf]
      %v3158 = vld [vmem:[%s3 + $0x1ec] sm:$0xf]
      %v3159 = vld [vmem:[%s3 + $0x1f0] sm:$0xf]
      %v3160 = vld [vmem:[%s3 + $0x1f4] sm:$0xf]
      %v3161 = vld [vmem:[%s3 + $0x1f8] sm:$0xf]
      %v3162 = vld [vmem:[%s3 + $0x1fc] sm:$0xf]
      %v3163 = vunpack.c.l.b16 %v2968
      %v3164 = vunpack.c.l.b16 %v2978
      %v3165 = vunpack.c.l.b16 %v2992
      %v3166 = vunpack.c.l.b16 %v3002
      %v3167 = vunpack.c.l.b16 %v3016
      %v3168 = vunpack.c.l.b16 %v3026
      %v3169 = vunpack.c.l.b16 %v3040
      %v3170 = vunpack.c.l.b16 %v3050
      %v3171 = vunpack.c.l.b16 %v3064
      %v3172 = vunpack.c.l.b16 %v3074
      %v3173 = vunpack.c.l.b16 %v3088
      %v3174 = vunpack.c.l.b16 %v3098
      %v3175 = vunpack.c.l.b16 %v3112
      %v3176 = vunpack.c.l.b16 %v3122
      %v3177 = vunpack.c.l.b16 %v3136
      %v3178 = vunpack.c.l.b16 %v3146
      %v3179 = vpack.c.b16 %v3164, %v3163
      %v3180 = vpack.c.b16 %v3166, %v3165
      %v3181 = vpack.c.b16 %v3168, %v3167
      %v3182 = vpack.c.b16 %v3170, %v3169
      %v3183 = vpack.c.b16 %v3172, %v3171
      %v3184 = vpack.c.b16 %v3174, %v3173
      %v3185 = vpack.c.b16 %v3176, %v3175
      %v3186 = vpack.c.b16 %v3178, %v3177
      %v3211 = vunpack.c.l.b16 %v3147
      %v3212 = vunpack.c.l.b16 %v3148
      %v3213 = vunpack.c.l.b16 %v3149
      %v3214 = vunpack.c.l.b16 %v3150
      %v3215 = vunpack.c.l.b16 %v3151
      %v3216 = vunpack.c.l.b16 %v3152
      %v3217 = vunpack.c.l.b16 %v3153
      %v3218 = vunpack.c.l.b16 %v3154
      %v3219 = vunpack.c.l.b16 %v3155
      %v3220 = vunpack.c.l.b16 %v3156
      %v3221 = vunpack.c.l.b16 %v3157
      %v3222 = vunpack.c.l.b16 %v3158
      %v3223 = vunpack.c.l.b16 %v3159
      %v3224 = vunpack.c.l.b16 %v3160
      %v3225 = vunpack.c.l.b16 %v3161
      %v3226 = vunpack.c.l.b16 %v3162
      %v3227 = vpack.c.b16 %v3212, %v3211
      %v3228 = vpack.c.b16 %v3214, %v3213
      %v3229 = vpack.c.b16 %v3216, %v3215
      %v3230 = vpack.c.b16 %v3218, %v3217
      %v3231 = vpack.c.b16 %v3220, %v3219
      %v3232 = vpack.c.b16 %v3222, %v3221
      %v3233 = vpack.c.b16 %v3224, %v3223
      %v3234 = vpack.c.b16 %v3226, %v3225
      %3243 = vmatprep.subr.bf16.mxu0 0
      %3244 = vmatpush1.bf16.msra.mxu0 %v3227
      %3245 = vmatprep.subr.bf16.mxu0 0
      %3246 = vmatpush1.bf16.msra.mxu0 %v3228
      %3247 = vmatprep.subr.bf16.mxu0 0
      %3248 = vmatpush1.bf16.msra.mxu0 %v3229
      %3249 = vmatprep.subr.bf16.mxu0 0
      %3250 = vmatpush1.bf16.msra.mxu0 %v3230
      %3251 = vmatprep.subr.bf16.mxu0 0
      %3252 = vmatpush1.bf16.msra.mxu0 %v3231
      %3253 = vmatprep.subr.bf16.mxu0 0
      %3254 = vmatpush1.bf16.msra.mxu0 %v3232
      %3255 = vmatprep.subr.bf16.mxu0 0
      %3256 = vmatpush1.bf16.msra.mxu0 %v3233
      %3257 = vmatprep.subr.bf16.mxu0 0
      %3258 = vmatpush1.bf16.msra.mxu0 %v3234
      %3259 = vmatprep.subr.bf16.mxu0 0
      %3260 = vmatpush1.bf16.msra.mxu0 0
      %3261 = vmatprep.subr.bf16.mxu0 0
      %3262 = vmatpush1.bf16.msra.mxu0 0
      %3263 = vmatprep.subr.bf16.mxu0 0
      %3264 = vmatpush1.bf16.msra.mxu0 0
      %3265 = vmatprep.subr.bf16.mxu0 0
      %3266 = vmatpush1.bf16.msra.mxu0 0
      %3267 = vmatprep.subr.bf16.mxu0 0
      %3268 = vmatpush1.bf16.msra.mxu0 0
      %3269 = vmatprep.subr.bf16.mxu0 0
      %3270 = vmatpush1.bf16.msra.mxu0 0
      %3271 = vmatprep.subr.bf16.mxu0 0
      %3272 = vmatpush1.bf16.msra.mxu0 0
      %3273 = vmatprep.subr.bf16.mxu0 0
      %3274 = vmatpush1.bf16.msra.mxu0 0
      %3275 = vmatprep.mubr.bf16.mxu0 0
      %3276 = vmatmul.mubr.bf16.gmra.mrb[0].mxu0 %v3179
      %v3277 = vpop.f32.mrb[0].mxu0
      %v3278 = vadd.f32 0.0, %v3277
      %v3279 = vpop.f32.mrb[0].mxu0
      %v3280 = vpop.f32.mrb[0].mxu0
      %v3281 = vadd.f32 0.0, %v3280
      %v3282 = vpop.f32.mrb[0].mxu0
      %3283 = vmatprep.mubr.bf16.mxu0 0
      %3284 = vmatmul.mubr.bf16.gmra.mrb[0].mxu0 %v3180
      %v3285 = vpop.f32.mrb[0].mxu0
      %v3286 = vadd.f32 0.0, %v3285
      %v3287 = vpop.f32.mrb[0].mxu0
      %v3288 = vpop.f32.mrb[0].mxu0
      %v3289 = vadd.f32 0.0, %v3288
      %v3290 = vpop.f32.mrb[0].mxu0
      %3291 = vmatprep.mubr.bf16.mxu0 0
      %3292 = vmatmul.mubr.bf16.gmra.mrb[0].mxu0 %v3181
      %v3293 = vpop.f32.mrb[0].mxu0
      %v3294 = vadd.f32 0.0, %v3293
      %v3295 = vpop.f32.mrb[0].mxu0
      %v3296 = vpop.f32.mrb[0].mxu0
      %v3297 = vadd.f32 0.0, %v3296
      %v3298 = vpop.f32.mrb[0].mxu0
      %3299 = vmatprep.mubr.bf16.mxu0 0
      %3300 = vmatmul.mubr.bf16.gmra.mrb[0].mxu0 %v3182
      %v3301 = vpop.f32.mrb[0].mxu0
      %v3302 = vadd.f32 0.0, %v3301
      %v3303 = vpop.f32.mrb[0].mxu0
      %v3304 = vpop.f32.mrb[0].mxu0
      %v3305 = vadd.f32 0.0, %v3304
      %v3306 = vpop.f32.mrb[0].mxu0
      %3307 = vmatprep.mubr.bf16.mxu0 0
      %3308 = vmatmul.mubr.bf16.gmra.mrb[0].mxu0 %v3183
      %v3309 = vpop.f32.mrb[0].mxu0
      %v3310 = vadd.f32 0.0, %v3309
      %v3311 = vpop.f32.mrb[0].mxu0
      %v3312 = vpop.f32.mrb[0].mxu0
      %v3313 = vadd.f32 0.0, %v3312
      %v3314 = vpop.f32.mrb[0].mxu0
      %3315 = vmatprep.mubr.bf16.mxu0 0
      %3316 = vmatmul.mubr.bf16.gmra.mrb[0].mxu0 %v3184
      %v3317 = vpop.f32.mrb[0].mxu0
      %v3318 = vadd.f32 0.0, %v3317
      %v3319 = vpop.f32.mrb[0].mxu0
      %v3320 = vpop.f32.mrb[0].mxu0
      %v3321 = vadd.f32 0.0, %v3320
      %v3322 = vpop.f32.mrb[0].mxu0
      %3323 = vmatprep.mubr.bf16.mxu0 0
      %3324 = vmatmul.mubr.bf16.gmra.mrb[0].mxu0 %v3185
      %v3325 = vpop.f32.mrb[0].mxu0
      %v3326 = vadd.f32 0.0, %v3325
      %v3327 = vpop.f32.mrb[0].mxu0
      %v3328 = vpop.f32.mrb[0].mxu0
      %v3329 = vadd.f32 0.0, %v3328
      %v3330 = vpop.f32.mrb[0].mxu0
      %3331 = vmatprep.mubr.bf16.mxu0 0
      %3332 = vmatmul.mubr.bf16.gmra.mrb[0].mxu0 %v3186
      %v3333 = vpop.f32.mrb[0].mxu0
      %v3334 = vadd.f32 0.0, %v3333
      %v3335 = vpop.f32.mrb[0].mxu0
      %v3336 = vpop.f32.mrb[0].mxu0
      %v3337 = vadd.f32 0.0, %v3336
      %v3338 = vpop.f32.mrb[0].mxu0
      %3339 = vdwg.mxu0
      %v3340 = vadd.f32 %v2915, %v3278
      %v3341 = vadd.f32 %v2916, %v3281
      %v3342 = vadd.f32 %v2917, %v3286
      %v3343 = vadd.f32 %v2918, %v3289
      %v3344 = vadd.f32 %v2919, %v3294
      %v3345 = vadd.f32 %v2920, %v3297
      %v3346 = vadd.f32 %v2921, %v3302
      %v3347 = vadd.f32 %v2922, %v3305
      %v3348 = vadd.f32 %v2923, %v3310
      %v3349 = vadd.f32 %v2924, %v3313
      %v3350 = vadd.f32 %v2925, %v3318
      %v3351 = vadd.f32 %v2926, %v3321
      %v3352 = vadd.f32 %v2927, %v3326
      %v3353 = vadd.f32 %v2928, %v3329
      %v3354 = vadd.f32 %v2929, %v3334
      %v3355 = vadd.f32 %v2930, %v3337
      %v3356 = vld [vmem:[%s2689] sm:$0xe]
      %v3357 = vld [vmem:[%s2689 + $0xc] sm:$0xe]
      %v3358 = vld [vmem:[%s2689 + $0x18] sm:$0xe]
      %v3359 = vld [vmem:[%s2689 + $0x24] sm:$0xe]
      %v3360 = vld [vmem:[%s2689 + $0x30] sm:$0xe]
      %v3361 = vld [vmem:[%s2689 + $0x3c] sm:$0xe]
      %v3362 = vld [vmem:[%s2689 + $0x48] sm:$0xe]
      %v3363 = vld [vmem:[%s2689 + $0x54] sm:$0xe]
      %v3388 = vrot.slane %v3356, 5
      %v3389 = vrot.slane %v3388, 4
      %v3390 = vrot.slane %v2932, 5
      %v3391 = vsel %vm1460, %v3389, %v3390
      %v3392 = vrot.slane %v3390, 4
      %v3393 = vrot.slane %v2933, 5
      %v3394 = vsel %vm1460, %v3392, %v3393
      %v3395 = vrot.slane %v3357, 5
      %v3396 = vrot.slane %v3395, 4
      %v3397 = vrot.slane %v2935, 5
      %v3398 = vsel %vm1460, %v3396, %v3397
      %v3399 = vrot.slane %v3397, 4
      %v3400 = vrot.slane %v2936, 5
      %v3401 = vsel %vm1460, %v3399, %v3400
      %v3402 = vrot.slane %v3358, 5
      %v3403 = vrot.slane %v3402, 4
      %v3404 = vrot.slane %v2938, 5
      %v3405 = vsel %vm1460, %v3403, %v3404
      %v3406 = vrot.slane %v3404, 4
      %v3407 = vrot.slane %v2939, 5
      %v3408 = vsel %vm1460, %v3406, %v3407
      %v3409 = vrot.slane %v3359, 5
      %v3410 = vrot.slane %v3409, 4
      %v3411 = vrot.slane %v2941, 5
      %v3412 = vsel %vm1460, %v3410, %v3411
      %v3413 = vrot.slane %v3411, 4
      %v3414 = vrot.slane %v2942, 5
      %v3415 = vsel %vm1460, %v3413, %v3414
      %v3416 = vrot.slane %v3360, 5
      %v3417 = vrot.slane %v3416, 4
      %v3418 = vrot.slane %v2944, 5
      %v3419 = vsel %vm1460, %v3417, %v3418
      %v3420 = vrot.slane %v3418, 4
      %v3421 = vrot.slane %v2945, 5
      %v3422 = vsel %vm1460, %v3420, %v3421
      %v3423 = vrot.slane %v3361, 5
      %v3424 = vrot.slane %v3423, 4
      %v3425 = vrot.slane %v2947, 5
      %v3426 = vsel %vm1460, %v3424, %v3425
      %v3427 = vrot.slane %v3425, 4
      %v3428 = vrot.slane %v2948, 5
      %v3429 = vsel %vm1460, %v3427, %v3428
      %v3430 = vrot.slane %v3362, 5
      %v3431 = vrot.slane %v3430, 4
      %v3432 = vrot.slane %v2950, 5
      %v3433 = vsel %vm1460, %v3431, %v3432
      %v3434 = vrot.slane %v3432, 4
      %v3435 = vrot.slane %v2951, 5
      %v3436 = vsel %vm1460, %v3434, %v3435
      %v3437 = vrot.slane %v3363, 5
      %v3438 = vrot.slane %v3437, 4
      %v3439 = vrot.slane %v2953, 5
      %v3440 = vsel %vm1460, %v3438, %v3439
      %v3441 = vrot.slane %v3439, 4
      %v3442 = vrot.slane %v2954, 5
      %v3443 = vsel %vm1460, %v3441, %v3442
      %v3444 = vld [vmem:[%s3 + $0x200] sm:$0xf]
      %v3445 = vld [vmem:[%s3 + $0x204] sm:$0xf]
      %v3446 = vld [vmem:[%s3 + $0x208] sm:$0xf]
      %v3447 = vld [vmem:[%s3 + $0x20c] sm:$0xf]
      %v3448 = vld [vmem:[%s3 + $0x210] sm:$0xf]
      %v3449 = vld [vmem:[%s3 + $0x214] sm:$0xf]
      %v3450 = vld [vmem:[%s3 + $0x218] sm:$0xf]
      %v3451 = vld [vmem:[%s3 + $0x21c] sm:$0xf]
      %v3452 = vld [vmem:[%s3 + $0x220] sm:$0xf]
      %v3453 = vld [vmem:[%s3 + $0x224] sm:$0xf]
      %v3454 = vld [vmem:[%s3 + $0x228] sm:$0xf]
      %v3455 = vld [vmem:[%s3 + $0x22c] sm:$0xf]
      %v3456 = vld [vmem:[%s3 + $0x230] sm:$0xf]
      %v3457 = vld [vmem:[%s3 + $0x234] sm:$0xf]
      %v3458 = vld [vmem:[%s3 + $0x238] sm:$0xf]
      %v3459 = vld [vmem:[%s3 + $0x23c] sm:$0xf]
      %v3460 = vunpack.c.l.b16 %v3391
      %v3461 = vunpack.c.l.b16 %v3394
      %v3462 = vunpack.c.l.b16 %v3398
      %v3463 = vunpack.c.l.b16 %v3401
      %v3464 = vunpack.c.l.b16 %v3405
      %v3465 = vunpack.c.l.b16 %v3408
      %v3466 = vunpack.c.l.b16 %v3412
      %v3467 = vunpack.c.l.b16 %v3415
      %v3468 = vunpack.c.l.b16 %v3419
      %v3469 = vunpack.c.l.b16 %v3422
      %v3470 = vunpack.c.l.b16 %v3426
      %v3471 = vunpack.c.l.b16 %v3429
      %v3472 = vunpack.c.l.b16 %v3433
      %v3473 = vunpack.c.l.b16 %v3436
      %v3474 = vunpack.c.l.b16 %v3440
      %v3475 = vunpack.c.l.b16 %v3443
      %v3476 = vpack.c.b16 %v3461, %v3460
      %v3477 = vpack.c.b16 %v3463, %v3462
      %v3478 = vpack.c.b16 %v3465, %v3464
      %v3479 = vpack.c.b16 %v3467, %v3466
      %v3480 = vpack.c.b16 %v3469, %v3468
      %v3481 = vpack.c.b16 %v3471, %v3470
      %v3482 = vpack.c.b16 %v3473, %v3472
      %v3483 = vpack.c.b16 %v3475, %v3474
      %v3508 = vunpack.c.l.b16 %v3444
      %v3509 = vunpack.c.l.b16 %v3445
      %v3510 = vunpack.c.l.b16 %v3446
      %v3511 = vunpack.c.l.b16 %v3447
      %v3512 = vunpack.c.l.b16 %v3448
      %v3513 = vunpack.c.l.b16 %v3449
      %v3514 = vunpack.c.l.b16 %v3450
      %v3515 = vunpack.c.l.b16 %v3451
      %v3516 = vunpack.c.l.b16 %v3452
      %v3517 = vunpack.c.l.b16 %v3453
      %v3518 = vunpack.c.l.b16 %v3454
      %v3519 = vunpack.c.l.b16 %v3455
      %v3520 = vunpack.c.l.b16 %v3456
      %v3521 = vunpack.c.l.b16 %v3457
      %v3522 = vunpack.c.l.b16 %v3458
      %v3523 = vunpack.c.l.b16 %v3459
      %v3524 = vpack.c.b16 %v3509, %v3508
      %v3525 = vpack.c.b16 %v3511, %v3510
      %v3526 = vpack.c.b16 %v3513, %v3512
      %v3527 = vpack.c.b16 %v3515, %v3514
      %v3528 = vpack.c.b16 %v3517, %v3516
      %v3529 = vpack.c.b16 %v3519, %v3518
      %v3530 = vpack.c.b16 %v3521, %v3520
      %v3531 = vpack.c.b16 %v3523, %v3522
      %3540 = vmatprep.subr.bf16.mxu0 0
      %3541 = vmatpush1.bf16.msra.mxu0 %v3524
      %3542 = vmatprep.subr.bf16.mxu0 0
      %3543 = vmatpush1.bf16.msra.mxu0 %v3525
      %3544 = vmatprep.subr.bf16.mxu0 0
      %3545 = vmatpush1.bf16.msra.mxu0 %v3526
      %3546 = vmatprep.subr.bf16.mxu0 0
      %3547 = vmatpush1.bf16.msra.mxu0 %v3527
      %3548 = vmatprep.subr.bf16.mxu0 0
      %3549 = vmatpush1.bf16.msra.mxu0 %v3528
      %3550 = vmatprep.subr.bf16.mxu0 0
      %3551 = vmatpush1.bf16.msra.mxu0 %v3529
      %3552 = vmatprep.subr.bf16.mxu0 0
      %3553 = vmatpush1.bf16.msra.mxu0 %v3530
      %3554 = vmatprep.subr.bf16.mxu0 0
      %3555 = vmatpush1.bf16.msra.mxu0 %v3531
      %3556 = vmatprep.subr.bf16.mxu0 0
      %3557 = vmatpush1.bf16.msra.mxu0 0
      %3558 = vmatprep.subr.bf16.mxu0 0
      %3559 = vmatpush1.bf16.msra.mxu0 0
      %3560 = vmatprep.subr.bf16.mxu0 0
      %3561 = vmatpush1.bf16.msra.mxu0 0
      %3562 = vmatprep.subr.bf16.mxu0 0
      %3563 = vmatpush1.bf16.msra.mxu0 0
      %3564 = vmatprep.subr.bf16.mxu0 0
      %3565 = vmatpush1.bf16.msra.mxu0 0
      %3566 = vmatprep.subr.bf16.mxu0 0
      %3567 = vmatpush1.bf16.msra.mxu0 0
      %3568 = vmatprep.subr.bf16.mxu0 0
      %3569 = vmatpush1.bf16.msra.mxu0 0
      %3570 = vmatprep.subr.bf16.mxu0 0
      %3571 = vmatpush1.bf16.msra.mxu0 0
      %3572 = vmatprep.mubr.bf16.mxu0 0
      %3573 = vmatmul.mubr.bf16.gmra.mrb[0].mxu0 %v3476
      %v3574 = vpop.f32.mrb[0].mxu0
      %v3575 = vadd.f32 0.0, %v3574
      %v3576 = vpop.f32.mrb[0].mxu0
      %v3577 = vpop.f32.mrb[0].mxu0
      %v3578 = vadd.f32 0.0, %v3577
      %v3579 = vpop.f32.mrb[0].mxu0
      %3580 = vmatprep.mubr.bf16.mxu0 0
      %3581 = vmatmul.mubr.bf16.gmra.mrb[0].mxu0 %v3477
      %v3582 = vpop.f32.mrb[0].mxu0
      %v3583 = vadd.f32 0.0, %v3582
      %v3584 = vpop.f32.mrb[0].mxu0
      %v3585 = vpop.f32.mrb[0].mxu0
      %v3586 = vadd.f32 0.0, %v3585
      %v3587 = vpop.f32.mrb[0].mxu0
      %3588 = vmatprep.mubr.bf16.mxu0 0
      %3589 = vmatmul.mubr.bf16.gmra.mrb[0].mxu0 %v3478
      %v3590 = vpop.f32.mrb[0].mxu0
      %v3591 = vadd.f32 0.0, %v3590
      %v3592 = vpop.f32.mrb[0].mxu0
      %v3593 = vpop.f32.mrb[0].mxu0
      %v3594 = vadd.f32 0.0, %v3593
      %v3595 = vpop.f32.mrb[0].mxu0
      %3596 = vmatprep.mubr.bf16.mxu0 0
      %3597 = vmatmul.mubr.bf16.gmra.mrb[0].mxu0 %v3479
      %v3598 = vpop.f32.mrb[0].mxu0
      %v3599 = vadd.f32 0.0, %v3598
      %v3600 = vpop.f32.mrb[0].mxu0
      %v3601 = vpop.f32.mrb[0].mxu0
      %v3602 = vadd.f32 0.0, %v3601
      %v3603 = vpop.f32.mrb[0].mxu0
      %3604 = vmatprep.mubr.bf16.mxu0 0
      %3605 = vmatmul.mubr.bf16.gmra.mrb[0].mxu0 %v3480
      %v3606 = vpop.f32.mrb[0].mxu0
      %v3607 = vadd.f32 0.0, %v3606
      %v3608 = vpop.f32.mrb[0].mxu0
      %v3609 = vpop.f32.mrb[0].mxu0
      %v3610 = vadd.f32 0.0, %v3609
      %v3611 = vpop.f32.mrb[0].mxu0
      %3612 = vmatprep.mubr.bf16.mxu0 0
      %3613 = vmatmul.mubr.bf16.gmra.mrb[0].mxu0 %v3481
      %v3614 = vpop.f32.mrb[0].mxu0
      %v3615 = vadd.f32 0.0, %v3614
      %v3616 = vpop.f32.mrb[0].mxu0
      %v3617 = vpop.f32.mrb[0].mxu0
      %v3618 = vadd.f32 0.0, %v3617
      %v3619 = vpop.f32.mrb[0].mxu0
      %3620 = vmatprep.mubr.bf16.mxu0 0
      %3621 = vmatmul.mubr.bf16.gmra.mrb[0].mxu0 %v3482
      %v3622 = vpop.f32.mrb[0].mxu0
      %v3623 = vadd.f32 0.0, %v3622
      %v3624 = vpop.f32.mrb[0].mxu0
      %v3625 = vpop.f32.mrb[0].mxu0
      %v3626 = vadd.f32 0.0, %v3625
      %v3627 = vpop.f32.mrb[0].mxu0
      %3628 = vmatprep.mubr.bf16.mxu0 0
      %3629 = vmatmul.mubr.bf16.gmra.mrb[0].mxu0 %v3483
      %v3630 = vpop.f32.mrb[0].mxu0
      %v3631 = vadd.f32 0.0, %v3630
      %v3632 = vpop.f32.mrb[0].mxu0
      %v3633 = vpop.f32.mrb[0].mxu0
      %v3634 = vadd.f32 0.0, %v3633
      %v3635 = vpop.f32.mrb[0].mxu0
      %3636 = vdwg.mxu0
      %v3637 = vadd.f32 %v3340, %v3575
      %v3638 = vadd.f32 %v3341, %v3578
      %v3639 = vadd.f32 %v3342, %v3583
      %v3640 = vadd.f32 %v3343, %v3586
      %v3641 = vadd.f32 %v3344, %v3591
      %v3642 = vadd.f32 %v3345, %v3594
      %v3643 = vadd.f32 %v3346, %v3599
      %v3644 = vadd.f32 %v3347, %v3602
      %v3645 = vadd.f32 %v3348, %v3607
      %v3646 = vadd.f32 %v3349, %v3610
      %v3647 = vadd.f32 %v3350, %v3615
      %v3648 = vadd.f32 %v3351, %v3618
      %v3649 = vadd.f32 %v3352, %v3623
      %v3650 = vadd.f32 %v3353, %v3626
      %v3651 = vadd.f32 %v3354, %v3631
      %v3652 = vadd.f32 %v3355, %v3634
      %v3653 = vpack.c.bf16 %v3638, %v3637
      %v3654 = vpack.c.bf16 %v3640, %v3639
      %v3655 = vpack.c.bf16 %v3642, %v3641
      %v3656 = vpack.c.bf16 %v3644, %v3643
      %v3657 = vpack.c.bf16 %v3646, %v3645
      %v3658 = vpack.c.bf16 %v3648, %v3647
      %v3659 = vpack.c.bf16 %v3650, %v3649
      %v3660 = vpack.c.bf16 %v3652, %v3651
      %v3669 = vunpack.c.l.b16 %v3653
      %v3670 = vunpack.c.h.b16 %v3653
      %v3671 = vunpack.c.l.b16 %v3654
      %v3672 = vunpack.c.h.b16 %v3654
      %v3673 = vunpack.c.l.b16 %v3655
      %v3674 = vunpack.c.h.b16 %v3655
      %v3675 = vunpack.c.l.b16 %v3656
      %v3676 = vunpack.c.h.b16 %v3656
      %v3677 = vunpack.c.l.b16 %v3657
      %v3678 = vunpack.c.h.b16 %v3657
      %v3679 = vunpack.c.l.b16 %v3658
      %v3680 = vunpack.c.h.b16 %v3658
      %v3681 = vunpack.c.l.b16 %v3659
      %v3682 = vunpack.c.h.b16 %v3659
      %v3683 = vunpack.c.l.b16 %v3660
      %v3684 = vunpack.c.h.b16 %v3660
      %v3685 = vpack.c.b16 %v3669, %v3669
      %v3686 = vpack.c.b16 %v3670, %v3670
      %v3687 = vpack.c.b16 %v3671, %v3671
      %v3688 = vpack.c.b16 %v3672, %v3672
      %v3689 = vpack.c.b16 %v3673, %v3673
      %v3690 = vpack.c.b16 %v3674, %v3674
      %v3691 = vpack.c.b16 %v3675, %v3675
      %v3692 = vpack.c.b16 %v3676, %v3676
      %v3693 = vpack.c.b16 %v3677, %v3677
      %v3694 = vpack.c.b16 %v3678, %v3678
      %v3695 = vpack.c.b16 %v3679, %v3679
      %v3696 = vpack.c.b16 %v3680, %v3680
      %v3697 = vpack.c.b16 %v3681, %v3681
      %v3698 = vpack.c.b16 %v3682, %v3682
      %v3699 = vpack.c.b16 %v3683, %v3683
      %v3700 = vpack.c.b16 %v3684, %v3684
      %3717 = vst [vmem:[%s261] sm:$0xf] %v3685
      %3718 = vst [vmem:[%s261 + $0x4] sm:$0xf] %v3686
      %3719 = vst [vmem:[%s261 + $0x8] sm:$0xf] %v3687
      %3720 = vst [vmem:[%s261 + $0xc] sm:$0xf] %v3688
      %3721 = vst [vmem:[%s261 + $0x10] sm:$0xf] %v3689
      %3722 = vst [vmem:[%s261 + $0x14] sm:$0xf] %v3690
      %3723 = vst [vmem:[%s261 + $0x18] sm:$0xf] %v3691
      %3724 = vst [vmem:[%s261 + $0x1c] sm:$0xf] %v3692
      %3725 = vst [vmem:[%s261 + $0x20] sm:$0xf] %v3693
      %3726 = vst [vmem:[%s261 + $0x24] sm:$0xf] %v3694
      %3727 = vst [vmem:[%s261 + $0x28] sm:$0xf] %v3695
      %3728 = vst [vmem:[%s261 + $0x2c] sm:$0xf] %v3696
      %3729 = vst [vmem:[%s261 + $0x30] sm:$0xf] %v3697
      %3730 = vst [vmem:[%s261 + $0x34] sm:$0xf] %v3698
      %3731 = vst [vmem:[%s261 + $0x38] sm:$0xf] %v3699
      %3732 = vst [vmem:[%s261 + $0x3c] sm:$0xf] %v3700
      %v3733 = vunpack.c.l.bf16 %v3653
      %v3734 = vunpack.c.h.bf16 %v3653
      %v3735 = vunpack.c.l.bf16 %v3654
      %v3736 = vunpack.c.h.bf16 %v3654
      %v3737 = vunpack.c.l.bf16 %v3655
      %v3738 = vunpack.c.h.bf16 %v3655
      %v3739 = vunpack.c.l.bf16 %v3656
      %v3740 = vunpack.c.h.bf16 %v3656
      %v3741 = vunpack.c.l.bf16 %v3657
      %v3742 = vunpack.c.h.bf16 %v3657
      %v3743 = vunpack.c.l.bf16 %v3658
      %v3744 = vunpack.c.h.bf16 %v3658
      %v3745 = vunpack.c.l.bf16 %v3659
      %v3746 = vunpack.c.h.bf16 %v3659
      %v3747 = vunpack.c.l.bf16 %v3660
      %v3748 = vunpack.c.h.bf16 %v3660
      %v3749 = vadd.f32 %v3733, %v3734
      %v3750 = vadd.f32 %v3749, %v3735
      %v3751 = vadd.f32 %v3750, %v3736
      %v3752 = vadd.f32 %v3751, %v3737
      %v3753 = vadd.f32 %v3752, %v3738
      %v3754 = vadd.f32 %v3753, %v3739
      %v3755 = vadd.f32 %v3754, %v3740
      %v3756 = vadd.f32 %v3755, %v3741
      %v3757 = vadd.f32 %v3756, %v3742
      %v3758 = vadd.f32 %v3757, %v3743
      %v3759 = vadd.f32 %v3758, %v3744
      %v3760 = vadd.f32 %v3759, %v3745
      %v3761 = vadd.f32 %v3760, %v3746
      %v3762 = vadd.f32 %v3761, %v3747
      %v3763 = vadd.f32 %v3762, %v3748
      %v3764 = vrot.slane %v3763, 4
      %v3765 = vadd.f32 %v3763, %v3764
      %v3766 = vrot.slane %v3765, 2
      %v3767 = vadd.f32 %v3765, %v3766
      %v3768 = vrot.slane %v3767, 1
      %v3769 = vadd.f32 %v3767, %v3768
      %3770 = vst [vmem:[%s270] sm:$0x1] %v3769
      %v3771 = vmul.f32 %v3733, %v3733
      %v3772 = vmul.f32 %v3734, %v3734
      %v3773 = vmul.f32 %v3735, %v3735
      %v3774 = vmul.f32 %v3736, %v3736
      %v3775 = vmul.f32 %v3737, %v3737
      %v3776 = vmul.f32 %v3738, %v3738
      %v3777 = vmul.f32 %v3739, %v3739
      %v3778 = vmul.f32 %v3740, %v3740
      %v3779 = vmul.f32 %v3741, %v3741
      %v3780 = vmul.f32 %v3742, %v3742
      %v3781 = vmul.f32 %v3743, %v3743
      %v3782 = vmul.f32 %v3744, %v3744
      %v3783 = vmul.f32 %v3745, %v3745
      %v3784 = vmul.f32 %v3746, %v3746
      %v3785 = vmul.f32 %v3747, %v3747
      %v3786 = vmul.f32 %v3748, %v3748
      %v3787 = vadd.f32 %v3771, %v3772
      %v3788 = vadd.f32 %v3787, %v3773
      %v3789 = vadd.f32 %v3788, %v3774
      %v3790 = vadd.f32 %v3789, %v3775
      %v3791 = vadd.f32 %v3790, %v3776
      %v3792 = vadd.f32 %v3791, %v3777
      %v3793 = vadd.f32 %v3792, %v3778
      %v3794 = vadd.f32 %v3793, %v3779
      %v3795 = vadd.f32 %v3794, %v3780
      %v3796 = vadd.f32 %v3795, %v3781
      %v3797 = vadd.f32 %v3796, %v3782
      %v3798 = vadd.f32 %v3797, %v3783
      %v3799 = vadd.f32 %v3798, %v3784
      %v3800 = vadd.f32 %v3799, %v3785
      %v3801 = vadd.f32 %v3800, %v3786
      %v3802 = vrot.slane %v3801, 4
      %v3803 = vadd.f32 %v3801, %v3802
      %v3804 = vrot.slane %v3803, 2
      %v3805 = vadd.f32 %v3803, %v3804
      %v3806 = vrot.slane %v3805, 1
      %v3807 = vadd.f32 %v3805, %v3806
      %3808 = vst [vmem:[%s270 + $0x1] sm:$0x1] %v3807
      %s3809 = smul.u32 8, %s22
      %p3810 = scmp.lt.s32.totalorder %s21, 1
      %s3811 = scalar_select %p3810, %s21, 1
      %p3812 = scmp.lt.s32.totalorder %s3809, 15
      %s3813 = scalar_select %p3812, %s3809, 15
      %s3814 = smul.addr %s3813, 2
      %s3815 = smul.addr %s3811, 32
      %s3816 = sadd.s32 %s3814, %s3815
      %s3817 = smul.addr %s3816, 4
      %s3818 = scalar_lea.vmem %s4, %s3817
      %p3819 = scmp.lt.s32.totalorder %s21, 1
      %s3820 = scalar_select %p3819, %s21, 1
      %p3821 = scmp.lt.s32.totalorder %s22, 1
      %s3822 = scalar_select %p3821, %s22, 1
      %s3823 = smul.addr %s3820, 2
      %s3824 = sadd.s32 %s3822, %s3823
      %s3825 = smul.addr %s3824, 2
      %s3826 = scalar_lea.vmem %s5, %s3825
      // Predicated region
      $region37: #{bottleneck_forward.5} parent=35 // pred_check
        %p3827 = pneg %p138
      $region38: #{bottleneck_forward.5} parent=35 // pred_check_branch
        %3829 = sbr.rel (%p3827) target = $region40
      $region39: #{bottleneck_forward.5} parent=35 // pred_region
        %s3830 = smul.u32 8, %s22
      $region40: #{bottleneck_forward.5} parent=35 // pred_fallthru
        _
      // Predicated region
      $region41: #{bottleneck_forward.5} parent=35 // pred_check
        %p3831 = pneg %p166
      $region42: #{bottleneck_forward.5} parent=35 // pred_check_branch
        %3833 = sbr.rel (%p3831) target = $region44
      $region43: #{bottleneck_forward.5} parent=35 // pred_region
        _
      $region44: #{bottleneck_forward.5} parent=35 // pred_fallthru
        _
    $region36: #{bottleneck_forward.5} parent=5 // pred_fallthru
      _
    %p3834 = scmp.le.s32.totalorder 2, %s12
    // Predicated region
    $region45: #{bottleneck_forward.5} parent=5 // pred_check
      %p3835 = pneg %p3834
    $region46: #{bottleneck_forward.5} parent=5 // pred_check_branch
      %3837 = sbr.rel (%p3835) target = $region48
    $region47: #{bottleneck_forward.5} parent=5 // pred_region
      %s3838 = ssub.s32 %s12, 2
      // Predicated region
      $region49: #{bottleneck_forward.5} parent=47 // pred_check
        %p3839 = pneg %p144
      $region50: #{bottleneck_forward.5} parent=47 // pred_check_branch
        %3841 = sbr.rel (%p3839) target = $region52
      $region51: #{bottleneck_forward.5} parent=47 // pred_region
        %s3842 = smul.u32 8, %s24
        %p3843 = scmp.lt.s32.totalorder %s23, 1
        %s3844 = scalar_select %p3843, %s23, 1
        %p3845 = scmp.lt.s32.totalorder %s3842, 15
        %s3846 = scalar_select %p3845, %s3842, 15
        %s3847 = smul.addr %s3846, 2
        %s3848 = smul.addr %s3844, 32
        %s3849 = sadd.s32 %s3847, %s3848
        %s3850 = smul.addr %s3849, 4
        %s3851 = scalar_lea.vmem %s4, %s3850
      $region52: #{bottleneck_forward.5} parent=47 // pred_fallthru
        _
      // Predicated region
      $region53: #{bottleneck_forward.5} parent=47 // pred_check
        %p3852 = pneg %p172
      $region54: #{bottleneck_forward.5} parent=47 // pred_check_branch
        %3854 = sbr.rel (%p3852) target = $region56
      $region55: #{bottleneck_forward.5} parent=47 // pred_region
        %p3855 = scmp.lt.s32.totalorder %s23, 1
        %s3856 = scalar_select %p3855, %s23, 1
        %p3857 = scmp.lt.s32.totalorder %s24, 1
        %s3858 = scalar_select %p3857, %s24, 1
        %s3859 = smul.addr %s3856, 2
        %s3860 = sadd.s32 %s3858, %s3859
        %s3861 = smul.addr %s3860, 2
        %s3862 = scalar_lea.vmem %s5, %s3861
      $region56: #{bottleneck_forward.5} parent=47 // pred_fallthru
        _
    $region48: #{bottleneck_forward.5} parent=5 // pred_fallthru
      _
  $region6: #{bottleneck_forward.5} parent=0 // loop_footer
    %s16 = sadd.s32 1, %s12
  $region7: #{bottleneck_forward.5} parent=0 // loop_footer_branch
    %11 = sbr.rel target = $region3
  $region8: #{bottleneck_forward.5} parent=0 // loop_exit
    _

</llo_original>
